<compile_context>
chip_gen: v5e
topology: v5e:2x2
jax: 0.10.0
libtpu: 0.0.40
codegen_flags: <defaults>
</compile_context>

<pallas_src>
import functools
import math

import jax
import jax.numpy as jnp
from jax.experimental import pallas as pl
from jax.experimental.pallas import tpu as pltpu


# ------------------------------ model config --------------------------------

EMBED_DIM = 32      # logical embedding width of the shared encoder
DEPTH = 2           # number of fusion blocks
IMG_PATCH = 4       # image patch size
PC_HIDDEN = 64      # hidden width of the point-cloud embed MLP
MLP_HIDDEN = 64     # hidden width of the fusion-block MLP
LANE = 128          # TPU lane width: matmul feature axes padded to this
XYZ_PAD = 8         # xyz coordinates padded to one sublane tile (3 active)


def _gelu(x):
    # tanh-approx GELU (EUP friendly).
    # TODO(synk): swap for erf-GELU if the reference cfg uses exact GELU.
    return 0.5 * x * (1.0 + jnp.tanh(0.7978845608028654 * (x + 0.044715 * x * x * x)))


# --------------------------- fused Pallas kernel ----------------------------


def _egiinet_kernel(
    patches_ref, pc_ref,
    img_w_ref, img_b_ref,
    pc_w1_ref, pc_b1_ref, pc_w2_ref, pc_b2_ref,
    ln_g_ref, ln_b_ref, blk_w1_ref, blk_b1_ref, blk_w2_ref, blk_b2_ref,
    dec_w1_ref, dec_b1_ref, dec_w2_ref, dec_b2_ref,
    out_ref, loss_ref,
    *, n_img_tok, n_pts, d_act, depth,
):
    """One grid step == one batch element. All weights are VMEM-resident."""
    f32 = jnp.float32
    bf16 = jnp.bfloat16

    lane_ids = jax.lax.broadcasted_iota(jnp.int32, (1, LANE), 1)
    act_mask = lane_ids < d_act                        # un-padded feature lanes
    lane8 = jax.lax.broadcasted_iota(jnp.int32, (1, XYZ_PAD), 1)

    def mxu(a, w):                                     # bf16 operands, f32 accum
        return jnp.dot(a.astype(bf16), w, preferred_element_type=f32)

    # ---- image patch embedding (patches already bf16, 128 lanes) ------------
    img_tok = mxu(patches_ref[...], img_w_ref[...]) + img_b_ref[...]   # (Ti,128) f32

    # ---- point-cloud embedding: 3 -> hidden (VPU, f32) -> embed (MXU) -------
    pc_xyz = pc_ref[...]                               # (Npts, 8) f32, lanes 0..2 real
    h = jnp.zeros((n_pts, LANE), f32)
    for j in range(3):
        # extract coordinate j as a column via a lane-masked reduce (no
        # unaligned lane slicing), broadcast-MAC against row j of W1.
        col = jnp.sum(jnp.where(lane8 == j, pc_xyz, 0.0), axis=-1, keepdims=True)
        h = h + col * pc_w1_ref[j:j + 1, :]
    h = _gelu(h + pc_b1_ref[...])
    pc_tok = mxu(h, pc_w2_ref[...]) + pc_b2_ref[...]   # (Npts,128) f32

    # ---- fusion blocks: ONE pass over concatenated [img ; pc] tokens --------
    x = jnp.concatenate([img_tok, pc_tok], axis=0)     # (Ti+Npts, 128)
    for d in range(depth):
        # LayerNorm over the d_act active lanes; pad lanes are exactly 0 so the
        # lane-sum equals the sum over the real channels (see invariant above).
        mu = jnp.sum(x, axis=-1, keepdims=True) * (1.0 / d_act)
        diff = jnp.where(act_mask, x - mu, 0.0)
        var = jnp.sum(diff * diff, axis=-1, keepdims=True) * (1.0 / d_act)
        inv = jax.lax.rsqrt(var + 1e-5)
        hn = diff * inv * ln_g_ref[d] + ln_b_ref[d]
        hh = mxu(hn, blk_w1_ref[d]) + blk_b1_ref[d]
        hh = _gelu(hh)
        hh = mxu(hh, blk_w2_ref[d]) + blk_b2_ref[d]
        x = x + hh                                     # residual

    img_feat = x[:n_img_tok]                           # (Ti, 128)
    pc_feat = x[n_img_tok:]                            # (Npts, 128)

    # ---- style loss: per-batch per-channel mean/std matching (partial) ------
    mu_i = jnp.mean(img_feat, axis=0, keepdims=True)
    mu_p = jnp.mean(pc_feat, axis=0, keepdims=True)
    var_i = jnp.mean((img_feat - mu_i) ** 2, axis=0, keepdims=True)
    var_p = jnp.mean((pc_feat - mu_p) ** 2, axis=0, keepdims=True)
    sd_i = jnp.sqrt(var_i + 1e-6)
    sd_p = jnp.sqrt(var_p + 1e-6)
    # pad lanes contribute exactly 0; wrapper sums over batch+lanes and scales.
    loss_ref[...] = (mu_i - mu_p) ** 2 + (sd_i - sd_p) ** 2          # (1, 128)

    # ---- point decoder: per-point MLP conditioned on global max feature -----
    gb = jnp.max(pc_feat, axis=0, keepdims=True)                     # (1, 128)
    cat = jnp.concatenate(
        [pc_feat, jnp.broadcast_to(gb, pc_feat.shape)], axis=1)      # (Npts, 256)
    hb = _gelu(mxu(cat, dec_w1_ref[...]) + dec_b1_ref[...])          # (Npts, 128)
    off = mxu(hb, dec_w2_ref[...]) + dec_b2_ref[...]                 # (Npts, 8)
    out_ref[...] = (pc_xyz + off).astype(out_ref.dtype)


# ---------------------------- pallas_call wrapper ----------------------------


def _batch_spec(shape):
    """Per-grid-step tile: one batch slice, full remaining dims."""
    nd = len(shape)
    return pl.BlockSpec((None,) + tuple(shape[1:]),
                        lambda b: (b,) + (0,) * (nd - 1))


def _resident_spec(shape):
    """Full-array block with a constant index map: DMA'd once, stays in VMEM."""
    nd = len(shape)
    return pl.BlockSpec(tuple(shape), lambda b: (0,) * nd)


def _fused_forward(patches_p, pc_p, packed, *, batch, n_img_tok, n_pts):
    weight_order = ["img_w", "img_b", "pc_w1", "pc_b1", "pc_w2", "pc_b2",
                    "ln_g", "ln_b", "blk_w1", "blk_b1", "blk_w2", "blk_b2",
                    "dec_w1", "dec_b1", "dec_w2", "dec_b2"]
    weights = [packed[k] for k in weight_order]
    args = (patches_p, pc_p, *weights)

    in_specs = [_batch_spec(patches_p.shape), _batch_spec(pc_p.shape)]
    in_specs += [_resident_spec(w.shape) for w in weights]

    out_shape = (
        jax.ShapeDtypeStruct((batch, n_pts, XYZ_PAD), jnp.float32),   # xyz out
        jax.ShapeDtypeStruct((batch, 1, LANE), jnp.float32),          # loss partials
    )
    out_specs = (
        _batch_spec((batch, n_pts, XYZ_PAD)),
        _batch_spec((batch, 1, LANE)),
    )

    # Advisory cost estimate for the XLA scheduler.
    tok = n_img_tok + n_pts
    flops = batch * (
        2 * n_img_tok * LANE * LANE            # img patch embed
        + 2 * n_pts * XYZ_PAD * LANE           # pc embed layer-1 (VPU)
        + 2 * n_pts * LANE * LANE              # pc embed layer-2
        + depth_flops(tok)                     # fusion blocks
        + 2 * n_pts * (2 * LANE) * LANE        # decoder layer-1 (K=256)
        + 2 * n_pts * LANE * XYZ_PAD           # decoder layer-2
    )
    transcendentals = batch * (DEPTH * tok * LANE + 2 * n_pts * LANE)
    bytes_accessed = (sum(int(a.size) * a.dtype.itemsize for a in args)
                      + sum(math.prod(s.shape) * jnp.dtype(s.dtype).itemsize
                            for s in out_shape))

    out_p, loss_part = pl.pallas_call(
        functools.partial(
            _egiinet_kernel,
            n_img_tok=n_img_tok, n_pts=n_pts, d_act=EMBED_DIM, depth=DEPTH,
        ),
        grid=(batch,),
        in_specs=in_specs,
        out_specs=out_specs,
        out_shape=out_shape,
        compiler_params=pltpu.CompilerParams(
            dimension_semantics=("parallel",),      # shards batch across TCs on v7x
            vmem_limit_bytes=64 * 1024 * 1024,
        ),
        cost_estimate=pl.CostEstimate(
            flops=int(flops), transcendentals=int(transcendentals),
            bytes_accessed=int(bytes_accessed)),
    )(*args)
    return out_p, loss_part


def depth_flops(tok):
    return DEPTH * 2 * (2 * tok * LANE * LANE)


# ------------------------- params (logical + packed) -------------------------


def init_params(key):
    ks = iter(jax.random.split(key, 32))

    def w(shape, scale=0.02):
        return scale * jax.random.normal(next(ks), shape, dtype=jnp.float32)

    patch_dim = 3 * IMG_PATCH * IMG_PATCH
    params = {
        "img_w": w((patch_dim, EMBED_DIM)),
        "img_b": jnp.zeros((EMBED_DIM,), jnp.float32),
        "pc_w1": w((3, PC_HIDDEN)),
        "pc_b1": jnp.zeros((PC_HIDDEN,), jnp.float32),
        "pc_w2": w((PC_HIDDEN, EMBED_DIM)),
        "pc_b2": jnp.zeros((EMBED_DIM,), jnp.float32),
        "blocks": [],
        "dec_w1a": w((EMBED_DIM, EMBED_DIM)),
        "dec_w1b": w((EMBED_DIM, EMBED_DIM)),
        "dec_b1": jnp.zeros((EMBED_DIM,), jnp.float32),
        "dec_w2": w((EMBED_DIM, 3)),
        "dec_b2": jnp.zeros((3,), jnp.float32),
    }
    for _ in range(DEPTH):
        params["blocks"].append({
            "ln_g": jnp.ones((EMBED_DIM,), jnp.float32),
            "ln_b": jnp.zeros((EMBED_DIM,), jnp.float32),
            "w1": w((EMBED_DIM, MLP_HIDDEN)),
            "b1": jnp.zeros((MLP_HIDDEN,), jnp.float32),
            "w2": w((MLP_HIDDEN, EMBED_DIM)),
            "b2": jnp.zeros((EMBED_DIM,), jnp.float32),
        })
    return params


def _pad_mat(wm, rows=LANE, cols=LANE, dtype=jnp.bfloat16):
    """Zero-pad a weight matrix to (rows, cols); zero pad keeps pad lanes dead."""
    out = jnp.zeros((rows, cols), dtype)
    return out.at[: wm.shape[0], : wm.shape[1]].set(wm.astype(dtype))


def _pad_vec(b, cols=LANE):
    out = jnp.zeros((1, cols), jnp.float32)
    return out.at[0, : b.shape[-1]].set(b.astype(jnp.float32))


def pack_params(p):
    # decoder layer-1: fuse local (W1a) + global (W1b) weights into one K=256
    # operand to match the in-kernel [pc_feat ; broadcast(global)] concat.
    dec_w1 = jnp.concatenate([_pad_mat(p["dec_w1a"]), _pad_mat(p["dec_w1b"])], axis=0)
    return {
        "img_w": _pad_mat(p["img_w"]), "img_b": _pad_vec(p["img_b"]),
        "pc_w1": _pad_mat(p["pc_w1"], rows=XYZ_PAD, cols=LANE, dtype=jnp.float32),
        "pc_b1": _pad_vec(p["pc_b1"]),
        "pc_w2": _pad_mat(p["pc_w2"]), "pc_b2": _pad_vec(p["pc_b2"]),
        "ln_g": jnp.stack([_pad_vec(b["ln_g"]) for b in p["blocks"]]),
        "ln_b": jnp.stack([_pad_vec(b["ln_b"]) for b in p["blocks"]]),
        "blk_w1": jnp.stack([_pad_mat(b["w1"]) for b in p["blocks"]]),
        "blk_b1": jnp.stack([_pad_vec(b["b1"]) for b in p["blocks"]]),
        "blk_w2": jnp.stack([_pad_mat(b["w2"]) for b in p["blocks"]]),
        "blk_b2": jnp.stack([_pad_vec(b["b2"]) for b in p["blocks"]]),
        "dec_w1": dec_w1, "dec_b1": _pad_vec(p["dec_b1"]),
        "dec_w2": _pad_mat(p["dec_w2"], rows=LANE, cols=XYZ_PAD),
        "dec_b2": _pad_vec(p["dec_b2"], cols=XYZ_PAD),
    }


# ------------------------------- forward glue --------------------------------


def patchify(img):
    # img: (B, C, H, W) NCHW -> (B, num_patches, C*p*p)
    B, C, H, W = img.shape
    p = IMG_PATCH
    x = img.reshape(B, C, H // p, p, W // p, p)
    x = x.transpose(0, 2, 4, 1, 3, 5)
    return x.reshape(B, (H // p) * (W // p), C * p * p)


def egiinet_forward(packed, pc, img):
    B, n_pts, _ = pc.shape
    patches = patchify(img)                                  # (B, Ti, C*p*p)
    n_img_tok, patch_dim = patches.shape[1], patches.shape[2]
    assert patch_dim <= LANE
    assert n_img_tok % 8 == 0 and n_pts % 8 == 0

    # wrapper-side layout plumbing:
    #  * patches: pad feature axis to 128 lanes, pre-cast bf16 (MXU operand only)
    #  * xyz: pad to 8 lanes, keep f32 (used for embed + residual)
    patches_p = jnp.pad(patches, ((0, 0), (0, 0), (0, LANE - patch_dim))
                        ).astype(jnp.bfloat16)
    pc_p = jnp.pad(pc, ((0, 0), (0, 0), (0, XYZ_PAD - 3)))

    out_p, loss_part = _fused_forward(patches_p, pc_p, packed,
                                      batch=B, n_img_tok=n_img_tok, n_pts=n_pts)
    final = out_p[:, :, :3]
    loss = jnp.sum(loss_part) / (B * EMBED_DIM)
    return final, loss


# ------------------------------------ main -----------------------------------


if __name__ == "__main__":
    key = jax.random.PRNGKey(0)
    kp, ki, kw = jax.random.split(key, 3)

    B = 2
    Npts = 64
    H = W = 16

    pc = jax.random.normal(kp, (B, Npts, 3), dtype=jnp.float32)
    img = jax.random.normal(ki, (B, 3, H, W), dtype=jnp.float32)

    params = init_params(kw)
    packed = pack_params(params)

    fwd = jax.jit(egiinet_forward)
    final, s_loss = fwd(packed, pc, img)
    jax.block_until_ready((final, s_loss))

    assert final.shape == (B, Npts, 3), final.shape
    assert s_loss.shape == (), s_loss.shape
    assert bool(jnp.isfinite(s_loss)) and bool(jnp.all(jnp.isfinite(final)))
    print("KERNEL_OK")
</pallas_src>

<mosaic_0001>
module attributes {stable_mosaic.version = 11 : i64} {
  func.func @_egiinet_kernel(%arg0: i32, %arg1: memref<1x16x128xbf16, #tpu.memory_space<vmem>>, %arg2: memref<1x64x8xf32, #tpu.memory_space<vmem>>, %arg3: memref<128x128xbf16, #tpu.memory_space<vmem>>, %arg4: memref<1x128xf32, #tpu.memory_space<vmem>>, %arg5: memref<8x128xf32, #tpu.memory_space<vmem>>, %arg6: memref<1x128xf32, #tpu.memory_space<vmem>>, %arg7: memref<128x128xbf16, #tpu.memory_space<vmem>>, %arg8: memref<1x128xf32, #tpu.memory_space<vmem>>, %arg9: memref<2x1x128xf32, #tpu.memory_space<vmem>>, %arg10: memref<2x1x128xf32, #tpu.memory_space<vmem>>, %arg11: memref<2x128x128xbf16, #tpu.memory_space<vmem>>, %arg12: memref<2x1x128xf32, #tpu.memory_space<vmem>>, %arg13: memref<2x128x128xbf16, #tpu.memory_space<vmem>>, %arg14: memref<2x1x128xf32, #tpu.memory_space<vmem>>, %arg15: memref<256x128xbf16, #tpu.memory_space<vmem>>, %arg16: memref<1x128xf32, #tpu.memory_space<vmem>>, %arg17: memref<128x8xbf16, #tpu.memory_space<vmem>>, %arg18: memref<1x8xf32, #tpu.memory_space<vmem>>, %arg19: memref<1x64x8xf32, #tpu.memory_space<vmem>>, %arg20: memref<1x1x128xf32, #tpu.memory_space<vmem>>) attributes {dimension_semantics = [#tpu.dimension_semantics<parallel>], iteration_bounds = array<i64: 2>, scalar_prefetch = 0 : i64, scratch_operands = 0 : i64, tpu.core_type = #tpu.core_type<tc>, window_params = [{transform_indices = @transform_0, window_bounds = array<i64: 1, 16, 128>}, {transform_indices = @transform_1, window_bounds = array<i64: 1, 64, 8>}, {pipeline_mode = #tpu.pipeline_mode<synchronous>, transform_indices = @transform_2, window_bounds = array<i64: 128, 128>}, {pipeline_mode = #tpu.pipeline_mode<synchronous>, transform_indices = @transform_3, window_bounds = array<i64: 1, 128>}, {pipeline_mode = #tpu.pipeline_mode<synchronous>, transform_indices = @transform_4, window_bounds = array<i64: 8, 128>}, {pipeline_mode = #tpu.pipeline_mode<synchronous>, transform_indices = @transform_5, window_bounds = array<i64: 1, 128>}, {pipeline_mode = #tpu.pipeline_mode<synchronous>, transform_indices = @transform_6, window_bounds = array<i64: 128, 128>}, {pipeline_mode = #tpu.pipeline_mode<synchronous>, transform_indices = @transform_7, window_bounds = array<i64: 1, 128>}, {pipeline_mode = #tpu.pipeline_mode<synchronous>, transform_indices = @transform_8, window_bounds = array<i64: 2, 1, 128>}, {pipeline_mode = #tpu.pipeline_mode<synchronous>, transform_indices = @transform_9, window_bounds = array<i64: 2, 1, 128>}, {pipeline_mode = #tpu.pipeline_mode<synchronous>, transform_indices = @transform_10, window_bounds = array<i64: 2, 128, 128>}, {pipeline_mode = #tpu.pipeline_mode<synchronous>, transform_indices = @transform_11, window_bounds = array<i64: 2, 1, 128>}, {pipeline_mode = #tpu.pipeline_mode<synchronous>, transform_indices = @transform_12, window_bounds = array<i64: 2, 128, 128>}, {pipeline_mode = #tpu.pipeline_mode<synchronous>, transform_indices = @transform_13, window_bounds = array<i64: 2, 1, 128>}, {pipeline_mode = #tpu.pipeline_mode<synchronous>, transform_indices = @transform_14, window_bounds = array<i64: 256, 128>}, {pipeline_mode = #tpu.pipeline_mode<synchronous>, transform_indices = @transform_15, window_bounds = array<i64: 1, 128>}, {pipeline_mode = #tpu.pipeline_mode<synchronous>, transform_indices = @transform_16, window_bounds = array<i64: 128, 8>}, {pipeline_mode = #tpu.pipeline_mode<synchronous>, transform_indices = @transform_17, window_bounds = array<i64: 1, 8>}, {transform_indices = @transform_18, window_bounds = array<i64: 1, 64, 8>}, {transform_indices = @transform_19, window_bounds = array<i64: 1, 1, 128>}]} {
    %0 = tpu.iota {dimensions = array<i32: 1>} : vector<1x128xi32>
    %c32_i32 = arith.constant 32 : i32
    %1 = vector.broadcast %c32_i32 : i32 to vector<1x128xi32>
    %2 = arith.cmpi slt, %0, %1 : vector<1x128xi32>
    %3 = tpu.iota {dimensions = array<i32: 1>} : vector<1x8xi32>
    %c0 = arith.constant 0 : index
    %c0_0 = arith.constant 0 : index
    %c0_1 = arith.constant 0 : index
    %4 = vector.load %arg1[%c0, %c0_0, %c0_1] : memref<1x16x128xbf16, #tpu.memory_space<vmem>>, vector<1x16x128xbf16>
    %5 = vector.shape_cast %4 : vector<1x16x128xbf16> to vector<16x128xbf16>
    %c0_2 = arith.constant 0 : index
    %c0_3 = arith.constant 0 : index
    %6 = vector.load %arg3[%c0_2, %c0_3] : memref<128x128xbf16, #tpu.memory_space<vmem>>, vector<128x128xbf16>
    %cst = arith.constant dense<0.000000e+00> : vector<16x128xf32>
    %7 = tpu.matmul %5, %6, %cst {dimension_numbers = #tpu.dot_dimension_numbers<[1], [0], [0], [1], [0, 0, 1, 1], [], []>} : vector<16x128xbf16>, vector<128x128xbf16>, vector<16x128xf32> -> vector<16x128xf32>
    %c0_4 = arith.constant 0 : index
    %c0_5 = arith.constant 0 : index
    %8 = vector.load %arg4[%c0_4, %c0_5] : memref<1x128xf32, #tpu.memory_space<vmem>>, vector<1x128xf32>
    %9 = vector.broadcast %8 : vector<1x128xf32> to vector<16x128xf32>
    %10 = arith.addf %7, %9 : vector<16x128xf32>
    %c0_6 = arith.constant 0 : index
    %c0_7 = arith.constant 0 : index
    %c0_8 = arith.constant 0 : index
    %11 = vector.load %arg2[%c0_6, %c0_7, %c0_8] : memref<1x64x8xf32, #tpu.memory_space<vmem>>, vector<1x64x8xf32>
    %12 = vector.shape_cast %11 : vector<1x64x8xf32> to vector<64x8xf32>
    %cst_9 = arith.constant 0.000000e+00 : f32
    %13 = vector.broadcast %cst_9 : f32 to vector<64x128xf32>
    %c0_i32 = arith.constant 0 : i32
    %14 = vector.broadcast %c0_i32 : i32 to vector<1x8xi32>
    %15 = arith.cmpi eq, %3, %14 : vector<1x8xi32>
    %cst_10 = arith.constant 0.000000e+00 : f32
    %16 = vector.shape_cast %15 : vector<1x8xi1> to vector<1x8xi1>
    %17 = vector.broadcast %16 : vector<1x8xi1> to vector<64x8xi1>
    %18 = vector.broadcast %cst_10 : f32 to vector<64x8xf32>
    %19 = arith.select %17, %12, %18 : vector<64x8xi1>, vector<64x8xf32>
    %cst_11 = arith.constant dense<0.000000e+00> : vector<64xf32>
    %20 = vector.multi_reduction <add>, %19, %cst_11 [1] : vector<64x8xf32> to vector<64xf32>
    %21 = vector.shape_cast %20 : vector<64xf32> to vector<64x1xf32>
    %c0_12 = arith.constant 0 : index
    %c0_13 = arith.constant 0 : index
    %22 = vector.load %arg5[%c0_12, %c0_13] : memref<8x128xf32, #tpu.memory_space<vmem>>, vector<1x128xf32>
    %23 = vector.broadcast %21 : vector<64x1xf32> to vector<64x128xf32>
    %24 = vector.broadcast %22 : vector<1x128xf32> to vector<64x128xf32>
    %25 = arith.mulf %23, %24 : vector<64x128xf32>
    %26 = arith.addf %13, %25 : vector<64x128xf32>
    %c1_i32 = arith.constant 1 : i32
    %27 = vector.broadcast %c1_i32 : i32 to vector<1x8xi32>
    %28 = arith.cmpi eq, %3, %27 : vector<1x8xi32>
    %cst_14 = arith.constant 0.000000e+00 : f32
    %29 = vector.shape_cast %28 : vector<1x8xi1> to vector<1x8xi1>
    %30 = vector.broadcast %29 : vector<1x8xi1> to vector<64x8xi1>
    %31 = vector.broadcast %cst_14 : f32 to vector<64x8xf32>
    %32 = arith.select %30, %12, %31 : vector<64x8xi1>, vector<64x8xf32>
    %cst_15 = arith.constant dense<0.000000e+00> : vector<64xf32>
    %33 = vector.multi_reduction <add>, %32, %cst_15 [1] : vector<64x8xf32> to vector<64xf32>
    %34 = vector.shape_cast %33 : vector<64xf32> to vector<64x1xf32>
    %c1 = arith.constant 1 : index
    %c0_16 = arith.constant 0 : index
    %35 = vector.load %arg5[%c1, %c0_16] : memref<8x128xf32, #tpu.memory_space<vmem>>, vector<1x128xf32>
    %36 = vector.broadcast %34 : vector<64x1xf32> to vector<64x128xf32>
    %37 = vector.broadcast %35 : vector<1x128xf32> to vector<64x128xf32>
    %38 = arith.mulf %36, %37 : vector<64x128xf32>
    %39 = arith.addf %26, %38 : vector<64x128xf32>
    %c2_i32 = arith.constant 2 : i32
    %40 = vector.broadcast %c2_i32 : i32 to vector<1x8xi32>
    %41 = arith.cmpi eq, %3, %40 : vector<1x8xi32>
    %cst_17 = arith.constant 0.000000e+00 : f32
    %42 = vector.shape_cast %41 : vector<1x8xi1> to vector<1x8xi1>
    %43 = vector.broadcast %42 : vector<1x8xi1> to vector<64x8xi1>
    %44 = vector.broadcast %cst_17 : f32 to vector<64x8xf32>
    %45 = arith.select %43, %12, %44 : vector<64x8xi1>, vector<64x8xf32>
    %cst_18 = arith.constant dense<0.000000e+00> : vector<64xf32>
    %46 = vector.multi_reduction <add>, %45, %cst_18 [1] : vector<64x8xf32> to vector<64xf32>
    %47 = vector.shape_cast %46 : vector<64xf32> to vector<64x1xf32>
    %c2 = arith.constant 2 : index
    %c0_19 = arith.constant 0 : index
    %48 = vector.load %arg5[%c2, %c0_19] : memref<8x128xf32, #tpu.memory_space<vmem>>, vector<1x128xf32>
    %49 = vector.broadcast %47 : vector<64x1xf32> to vector<64x128xf32>
    %50 = vector.broadcast %48 : vector<1x128xf32> to vector<64x128xf32>
    %51 = arith.mulf %49, %50 : vector<64x128xf32>
    %52 = arith.addf %39, %51 : vector<64x128xf32>
    %c0_20 = arith.constant 0 : index
    %c0_21 = arith.constant 0 : index
    %53 = vector.load %arg6[%c0_20, %c0_21] : memref<1x128xf32, #tpu.memory_space<vmem>>, vector<1x128xf32>
    %54 = vector.broadcast %53 : vector<1x128xf32> to vector<64x128xf32>
    %55 = arith.addf %52, %54 : vector<64x128xf32>
    %cst_22 = arith.constant 5.000000e-01 : f32
    %56 = vector.broadcast %cst_22 : f32 to vector<64x128xf32>
    %57 = arith.mulf %56, %55 : vector<64x128xf32>
    %cst_23 = arith.constant 4.471500e-02 : f32
    %58 = vector.broadcast %cst_23 : f32 to vector<64x128xf32>
    %59 = arith.mulf %58, %55 : vector<64x128xf32>
    %60 = arith.mulf %59, %55 : vector<64x128xf32>
    %61 = arith.mulf %60, %55 : vector<64x128xf32>
    %62 = arith.addf %55, %61 : vector<64x128xf32>
    %cst_24 = arith.constant 0.797884583 : f32
    %63 = vector.broadcast %cst_24 : f32 to vector<64x128xf32>
    %64 = arith.mulf %63, %62 : vector<64x128xf32>
    %65 = math.tanh %64 : vector<64x128xf32>
    %cst_25 = arith.constant 1.000000e+00 : f32
    %66 = vector.broadcast %cst_25 : f32 to vector<64x128xf32>
    %67 = arith.addf %66, %65 : vector<64x128xf32>
    %68 = arith.mulf %57, %67 : vector<64x128xf32>
    %c0_26 = arith.constant 0 : index
    %c0_27 = arith.constant 0 : index
    %69 = vector.load %arg7[%c0_26, %c0_27] : memref<128x128xbf16, #tpu.memory_space<vmem>>, vector<128x128xbf16>
    %70 = arith.truncf %68 : vector<64x128xf32> to vector<64x128xbf16>
    %cst_28 = arith.constant dense<0.000000e+00> : vector<64x128xf32>
    %71 = tpu.matmul %70, %69, %cst_28 {dimension_numbers = #tpu.dot_dimension_numbers<[1], [0], [0], [1], [0, 0, 1, 1], [], []>} : vector<64x128xbf16>, vector<128x128xbf16>, vector<64x128xf32> -> vector<64x128xf32>
    %c0_29 = arith.constant 0 : index
    %c0_30 = arith.constant 0 : index
    %72 = vector.load %arg8[%c0_29, %c0_30] : memref<1x128xf32, #tpu.memory_space<vmem>>, vector<1x128xf32>
    %73 = vector.broadcast %72 : vector<1x128xf32> to vector<64x128xf32>
    %74 = arith.addf %71, %73 : vector<64x128xf32>
    %75 = tpu.concatenate %10, %74 in 0 : vector<16x128xf32>, vector<64x128xf32> -> vector<80x128xf32>
    %cst_31 = arith.constant dense<0.000000e+00> : vector<80xf32>
    %76 = vector.multi_reduction <add>, %75, %cst_31 [1] : vector<80x128xf32> to vector<80xf32>
    %77 = vector.shape_cast %76 : vector<80xf32> to vector<80x1xf32>
    %cst_32 = arith.constant 3.125000e-02 : f32
    %78 = vector.broadcast %cst_32 : f32 to vector<80x1xf32>
    %79 = arith.mulf %77, %78 : vector<80x1xf32>
    %80 = vector.broadcast %79 : vector<80x1xf32> to vector<80x128xf32>
    %81 = arith.subf %75, %80 : vector<80x128xf32>
    %cst_33 = arith.constant 0.000000e+00 : f32
    %82 = vector.shape_cast %2 : vector<1x128xi1> to vector<1x128xi1>
    %83 = vector.broadcast %82 : vector<1x128xi1> to vector<80x128xi1>
    %84 = vector.broadcast %cst_33 : f32 to vector<80x128xf32>
    %85 = arith.select %83, %81, %84 : vector<80x128xi1>, vector<80x128xf32>
    %86 = arith.mulf %85, %85 : vector<80x128xf32>
    %cst_34 = arith.constant dense<0.000000e+00> : vector<80xf32>
    %87 = vector.multi_reduction <add>, %86, %cst_34 [1] : vector<80x128xf32> to vector<80xf32>
    %88 = vector.shape_cast %87 : vector<80xf32> to vector<80x1xf32>
    %cst_35 = arith.constant 3.125000e-02 : f32
    %89 = vector.broadcast %cst_35 : f32 to vector<80x1xf32>
    %90 = arith.mulf %88, %89 : vector<80x1xf32>
    %cst_36 = arith.constant 9.99999974E-6 : f32
    %91 = vector.broadcast %cst_36 : f32 to vector<80x1xf32>
    %92 = arith.addf %90, %91 : vector<80x1xf32>
    %93 = math.rsqrt %92 : vector<80x1xf32>
    %94 = vector.broadcast %93 : vector<80x1xf32> to vector<80x128xf32>
    %95 = arith.mulf %85, %94 : vector<80x128xf32>
    %c0_37 = arith.constant 0 : index
    %c0_38 = arith.constant 0 : index
    %c0_39 = arith.constant 0 : index
    %96 = vector.load %arg9[%c0_37, %c0_38, %c0_39] : memref<2x1x128xf32, #tpu.memory_space<vmem>>, vector<1x1x128xf32>
    %97 = vector.shape_cast %96 : vector<1x1x128xf32> to vector<1x128xf32>
    %98 = vector.broadcast %97 : vector<1x128xf32> to vector<80x128xf32>
    %99 = arith.mulf %95, %98 : vector<80x128xf32>
    %c0_40 = arith.constant 0 : index
    %c0_41 = arith.constant 0 : index
    %c0_42 = arith.constant 0 : index
    %100 = vector.load %arg10[%c0_40, %c0_41, %c0_42] : memref<2x1x128xf32, #tpu.memory_space<vmem>>, vector<1x1x128xf32>
    %101 = vector.shape_cast %100 : vector<1x1x128xf32> to vector<1x128xf32>
    %102 = vector.broadcast %101 : vector<1x128xf32> to vector<80x128xf32>
    %103 = arith.addf %99, %102 : vector<80x128xf32>
    %c0_43 = arith.constant 0 : index
    %c0_44 = arith.constant 0 : index
    %c0_45 = arith.constant 0 : index
    %104 = vector.load %arg11[%c0_43, %c0_44, %c0_45] : memref<2x128x128xbf16, #tpu.memory_space<vmem>>, vector<1x128x128xbf16>
    %105 = vector.shape_cast %104 : vector<1x128x128xbf16> to vector<128x128xbf16>
    %106 = arith.truncf %103 : vector<80x128xf32> to vector<80x128xbf16>
    %cst_46 = arith.constant dense<0.000000e+00> : vector<80x128xf32>
    %107 = tpu.matmul %106, %105, %cst_46 {dimension_numbers = #tpu.dot_dimension_numbers<[1], [0], [0], [1], [0, 0, 1, 1], [], []>} : vector<80x128xbf16>, vector<128x128xbf16>, vector<80x128xf32> -> vector<80x128xf32>
    %c0_47 = arith.constant 0 : index
    %c0_48 = arith.constant 0 : index
    %c0_49 = arith.constant 0 : index
    %108 = vector.load %arg12[%c0_47, %c0_48, %c0_49] : memref<2x1x128xf32, #tpu.memory_space<vmem>>, vector<1x1x128xf32>
    %109 = vector.shape_cast %108 : vector<1x1x128xf32> to vector<1x128xf32>
    %110 = vector.broadcast %109 : vector<1x128xf32> to vector<80x128xf32>
    %111 = arith.addf %107, %110 : vector<80x128xf32>
    %cst_50 = arith.constant 5.000000e-01 : f32
    %112 = vector.broadcast %cst_50 : f32 to vector<80x128xf32>
    %113 = arith.mulf %112, %111 : vector<80x128xf32>
    %cst_51 = arith.constant 4.471500e-02 : f32
    %114 = vector.broadcast %cst_51 : f32 to vector<80x128xf32>
    %115 = arith.mulf %114, %111 : vector<80x128xf32>
    %116 = arith.mulf %115, %111 : vector<80x128xf32>
    %117 = arith.mulf %116, %111 : vector<80x128xf32>
    %118 = arith.addf %111, %117 : vector<80x128xf32>
    %cst_52 = arith.constant 0.797884583 : f32
    %119 = vector.broadcast %cst_52 : f32 to vector<80x128xf32>
    %120 = arith.mulf %119, %118 : vector<80x128xf32>
    %121 = math.tanh %120 : vector<80x128xf32>
    %cst_53 = arith.constant 1.000000e+00 : f32
    %122 = vector.broadcast %cst_53 : f32 to vector<80x128xf32>
    %123 = arith.addf %122, %121 : vector<80x128xf32>
    %124 = arith.mulf %113, %123 : vector<80x128xf32>
    %c0_54 = arith.constant 0 : index
    %c0_55 = arith.constant 0 : index
    %c0_56 = arith.constant 0 : index
    %125 = vector.load %arg13[%c0_54, %c0_55, %c0_56] : memref<2x128x128xbf16, #tpu.memory_space<vmem>>, vector<1x128x128xbf16>
    %126 = vector.shape_cast %125 : vector<1x128x128xbf16> to vector<128x128xbf16>
    %127 = arith.truncf %124 : vector<80x128xf32> to vector<80x128xbf16>
    %cst_57 = arith.constant dense<0.000000e+00> : vector<80x128xf32>
    %128 = tpu.matmul %127, %126, %cst_57 {dimension_numbers = #tpu.dot_dimension_numbers<[1], [0], [0], [1], [0, 0, 1, 1], [], []>} : vector<80x128xbf16>, vector<128x128xbf16>, vector<80x128xf32> -> vector<80x128xf32>
    %c0_58 = arith.constant 0 : index
    %c0_59 = arith.constant 0 : index
    %c0_60 = arith.constant 0 : index
    %129 = vector.load %arg14[%c0_58, %c0_59, %c0_60] : memref<2x1x128xf32, #tpu.memory_space<vmem>>, vector<1x1x128xf32>
    %130 = vector.shape_cast %129 : vector<1x1x128xf32> to vector<1x128xf32>
    %131 = vector.broadcast %130 : vector<1x128xf32> to vector<80x128xf32>
    %132 = arith.addf %128, %131 : vector<80x128xf32>
    %133 = arith.addf %75, %132 : vector<80x128xf32>
    %cst_61 = arith.constant dense<0.000000e+00> : vector<80xf32>
    %134 = vector.multi_reduction <add>, %133, %cst_61 [1] : vector<80x128xf32> to vector<80xf32>
    %135 = vector.shape_cast %134 : vector<80xf32> to vector<80x1xf32>
    %cst_62 = arith.constant 3.125000e-02 : f32
    %136 = vector.broadcast %cst_62 : f32 to vector<80x1xf32>
    %137 = arith.mulf %135, %136 : vector<80x1xf32>
    %138 = vector.broadcast %137 : vector<80x1xf32> to vector<80x128xf32>
    %139 = arith.subf %133, %138 : vector<80x128xf32>
    %cst_63 = arith.constant 0.000000e+00 : f32
    %140 = vector.shape_cast %2 : vector<1x128xi1> to vector<1x128xi1>
    %141 = vector.broadcast %140 : vector<1x128xi1> to vector<80x128xi1>
    %142 = vector.broadcast %cst_63 : f32 to vector<80x128xf32>
    %143 = arith.select %141, %139, %142 : vector<80x128xi1>, vector<80x128xf32>
    %144 = arith.mulf %143, %143 : vector<80x128xf32>
    %cst_64 = arith.constant dense<0.000000e+00> : vector<80xf32>
    %145 = vector.multi_reduction <add>, %144, %cst_64 [1] : vector<80x128xf32> to vector<80xf32>
    %146 = vector.shape_cast %145 : vector<80xf32> to vector<80x1xf32>
    %cst_65 = arith.constant 3.125000e-02 : f32
    %147 = vector.broadcast %cst_65 : f32 to vector<80x1xf32>
    %148 = arith.mulf %146, %147 : vector<80x1xf32>
    %cst_66 = arith.constant 9.99999974E-6 : f32
    %149 = vector.broadcast %cst_66 : f32 to vector<80x1xf32>
    %150 = arith.addf %148, %149 : vector<80x1xf32>
    %151 = math.rsqrt %150 : vector<80x1xf32>
    %152 = vector.broadcast %151 : vector<80x1xf32> to vector<80x128xf32>
    %153 = arith.mulf %143, %152 : vector<80x128xf32>
    %c1_67 = arith.constant 1 : index
    %c0_68 = arith.constant 0 : index
    %c0_69 = arith.constant 0 : index
    %154 = vector.load %arg9[%c1_67, %c0_68, %c0_69] : memref<2x1x128xf32, #tpu.memory_space<vmem>>, vector<1x1x128xf32>
    %155 = vector.shape_cast %154 : vector<1x1x128xf32> to vector<1x128xf32>
    %156 = vector.broadcast %155 : vector<1x128xf32> to vector<80x128xf32>
    %157 = arith.mulf %153, %156 : vector<80x128xf32>
    %c1_70 = arith.constant 1 : index
    %c0_71 = arith.constant 0 : index
    %c0_72 = arith.constant 0 : index
    %158 = vector.load %arg10[%c1_70, %c0_71, %c0_72] : memref<2x1x128xf32, #tpu.memory_space<vmem>>, vector<1x1x128xf32>
    %159 = vector.shape_cast %158 : vector<1x1x128xf32> to vector<1x128xf32>
    %160 = vector.broadcast %159 : vector<1x128xf32> to vector<80x128xf32>
    %161 = arith.addf %157, %160 : vector<80x128xf32>
    %c1_73 = arith.constant 1 : index
    %c0_74 = arith.constant 0 : index
    %c0_75 = arith.constant 0 : index
    %162 = vector.load %arg11[%c1_73, %c0_74, %c0_75] : memref<2x128x128xbf16, #tpu.memory_space<vmem>>, vector<1x128x128xbf16>
    %163 = vector.shape_cast %162 : vector<1x128x128xbf16> to vector<128x128xbf16>
    %164 = arith.truncf %161 : vector<80x128xf32> to vector<80x128xbf16>
    %cst_76 = arith.constant dense<0.000000e+00> : vector<80x128xf32>
    %165 = tpu.matmul %164, %163, %cst_76 {dimension_numbers = #tpu.dot_dimension_numbers<[1], [0], [0], [1], [0, 0, 1, 1], [], []>} : vector<80x128xbf16>, vector<128x128xbf16>, vector<80x128xf32> -> vector<80x128xf32>
    %c1_77 = arith.constant 1 : index
    %c0_78 = arith.constant 0 : index
    %c0_79 = arith.constant 0 : index
    %166 = vector.load %arg12[%c1_77, %c0_78, %c0_79] : memref<2x1x128xf32, #tpu.memory_space<vmem>>, vector<1x1x128xf32>
    %167 = vector.shape_cast %166 : vector<1x1x128xf32> to vector<1x128xf32>
    %168 = vector.broadcast %167 : vector<1x128xf32> to vector<80x128xf32>
    %169 = arith.addf %165, %168 : vector<80x128xf32>
    %cst_80 = arith.constant 5.000000e-01 : f32
    %170 = vector.broadcast %cst_80 : f32 to vector<80x128xf32>
    %171 = arith.mulf %170, %169 : vector<80x128xf32>
    %cst_81 = arith.constant 4.471500e-02 : f32
    %172 = vector.broadcast %cst_81 : f32 to vector<80x128xf32>
    %173 = arith.mulf %172, %169 : vector<80x128xf32>
    %174 = arith.mulf %173, %169 : vector<80x128xf32>
    %175 = arith.mulf %174, %169 : vector<80x128xf32>
    %176 = arith.addf %169, %175 : vector<80x128xf32>
    %cst_82 = arith.constant 0.797884583 : f32
    %177 = vector.broadcast %cst_82 : f32 to vector<80x128xf32>
    %178 = arith.mulf %177, %176 : vector<80x128xf32>
    %179 = math.tanh %178 : vector<80x128xf32>
    %cst_83 = arith.constant 1.000000e+00 : f32
    %180 = vector.broadcast %cst_83 : f32 to vector<80x128xf32>
    %181 = arith.addf %180, %179 : vector<80x128xf32>
    %182 = arith.mulf %171, %181 : vector<80x128xf32>
    %c1_84 = arith.constant 1 : index
    %c0_85 = arith.constant 0 : index
    %c0_86 = arith.constant 0 : index
    %183 = vector.load %arg13[%c1_84, %c0_85, %c0_86] : memref<2x128x128xbf16, #tpu.memory_space<vmem>>, vector<1x128x128xbf16>
    %184 = vector.shape_cast %183 : vector<1x128x128xbf16> to vector<128x128xbf16>
    %185 = arith.truncf %182 : vector<80x128xf32> to vector<80x128xbf16>
    %cst_87 = arith.constant dense<0.000000e+00> : vector<80x128xf32>
    %186 = tpu.matmul %185, %184, %cst_87 {dimension_numbers = #tpu.dot_dimension_numbers<[1], [0], [0], [1], [0, 0, 1, 1], [], []>} : vector<80x128xbf16>, vector<128x128xbf16>, vector<80x128xf32> -> vector<80x128xf32>
    %c1_88 = arith.constant 1 : index
    %c0_89 = arith.constant 0 : index
    %c0_90 = arith.constant 0 : index
    %187 = vector.load %arg14[%c1_88, %c0_89, %c0_90] : memref<2x1x128xf32, #tpu.memory_space<vmem>>, vector<1x1x128xf32>
    %188 = vector.shape_cast %187 : vector<1x1x128xf32> to vector<1x128xf32>
    %189 = vector.broadcast %188 : vector<1x128xf32> to vector<80x128xf32>
    %190 = arith.addf %186, %189 : vector<80x128xf32>
    %191 = arith.addf %133, %190 : vector<80x128xf32>
    %192 = vector.extract_strided_slice %191 {offsets = [0, 0], sizes = [16, 128], strides = [1, 1]} : vector<80x128xf32> to vector<16x128xf32>
    %193 = vector.extract_strided_slice %191 {offsets = [16, 0], sizes = [64, 128], strides = [1, 1]} : vector<80x128xf32> to vector<64x128xf32>
    %cst_91 = arith.constant dense<0.000000e+00> : vector<128xf32>
    %194 = vector.multi_reduction <add>, %192, %cst_91 [0] : vector<16x128xf32> to vector<128xf32>
    %195 = vector.shape_cast %194 : vector<128xf32> to vector<1x128xf32>
    %cst_92 = arith.constant 1.600000e+01 : f32
    %196 = vector.broadcast %cst_92 : f32 to vector<1x128xf32>
    %197 = arith.divf %195, %196 : vector<1x128xf32>
    %cst_93 = arith.constant dense<0.000000e+00> : vector<128xf32>
    %198 = vector.multi_reduction <add>, %193, %cst_93 [0] : vector<64x128xf32> to vector<128xf32>
    %199 = vector.shape_cast %198 : vector<128xf32> to vector<1x128xf32>
    %cst_94 = arith.constant 6.400000e+01 : f32
    %200 = vector.broadcast %cst_94 : f32 to vector<1x128xf32>
    %201 = arith.divf %199, %200 : vector<1x128xf32>
    %202 = vector.broadcast %197 : vector<1x128xf32> to vector<16x128xf32>
    %203 = arith.subf %192, %202 : vector<16x128xf32>
    %204 = arith.mulf %203, %203 : vector<16x128xf32>
    %cst_95 = arith.constant dense<0.000000e+00> : vector<128xf32>
    %205 = vector.multi_reduction <add>, %204, %cst_95 [0] : vector<16x128xf32> to vector<128xf32>
    %206 = vector.shape_cast %205 : vector<128xf32> to vector<1x128xf32>
    %cst_96 = arith.constant 1.600000e+01 : f32
    %207 = vector.broadcast %cst_96 : f32 to vector<1x128xf32>
    %208 = arith.divf %206, %207 : vector<1x128xf32>
    %209 = vector.broadcast %201 : vector<1x128xf32> to vector<64x128xf32>
    %210 = arith.subf %193, %209 : vector<64x128xf32>
    %211 = arith.mulf %210, %210 : vector<64x128xf32>
    %cst_97 = arith.constant dense<0.000000e+00> : vector<128xf32>
    %212 = vector.multi_reduction <add>, %211, %cst_97 [0] : vector<64x128xf32> to vector<128xf32>
    %213 = vector.shape_cast %212 : vector<128xf32> to vector<1x128xf32>
    %cst_98 = arith.constant 6.400000e+01 : f32
    %214 = vector.broadcast %cst_98 : f32 to vector<1x128xf32>
    %215 = arith.divf %213, %214 : vector<1x128xf32>
    %cst_99 = arith.constant 9.99999997E-7 : f32
    %216 = vector.broadcast %cst_99 : f32 to vector<1x128xf32>
    %217 = arith.addf %208, %216 : vector<1x128xf32>
    %218 = math.sqrt %217 : vector<1x128xf32>
    %cst_100 = arith.constant 9.99999997E-7 : f32
    %219 = vector.broadcast %cst_100 : f32 to vector<1x128xf32>
    %220 = arith.addf %215, %219 : vector<1x128xf32>
    %221 = math.sqrt %220 : vector<1x128xf32>
    %222 = arith.subf %197, %201 : vector<1x128xf32>
    %223 = arith.mulf %222, %222 : vector<1x128xf32>
    %224 = arith.subf %218, %221 : vector<1x128xf32>
    %225 = arith.mulf %224, %224 : vector<1x128xf32>
    %226 = arith.addf %223, %225 : vector<1x128xf32>
    %c0_101 = arith.constant 0 : index
    %c0_102 = arith.constant 0 : index
    %c0_103 = arith.constant 0 : index
    %227 = vector.load %arg20[%c0_101, %c0_102, %c0_103] : memref<1x1x128xf32, #tpu.memory_space<vmem>>, vector<1x1x128xf32>
    %228 = vector.shape_cast %227 : vector<1x1x128xf32> to vector<1x128xf32>
    %229 = vector.shape_cast %226 : vector<1x128xf32> to vector<1x1x128xf32>
    tpu.vector_store %arg20[%c0_101, %c0_102, %c0_103], %229 {strides = array<i32>} : memref<1x1x128xf32, #tpu.memory_space<vmem>>, vector<1x1x128xf32>,
    %cst_104 = arith.constant dense<0xFF800000> : vector<128xf32>
    %230 = vector.multi_reduction <maximumf>, %193, %cst_104 [0] : vector<64x128xf32> to vector<128xf32>
    %231 = vector.shape_cast %230 : vector<128xf32> to vector<1x128xf32>
    %232 = vector.shape_cast %231 : vector<1x128xf32> to vector<1x128xf32>
    %233 = vector.broadcast %232 : vector<1x128xf32> to vector<64x128xf32>
    %234 = tpu.concatenate %193, %233 in 1 : vector<64x128xf32>, vector<64x128xf32> -> vector<64x256xf32>
    %c0_105 = arith.constant 0 : index
    %c0_106 = arith.constant 0 : index
    %235 = vector.load %arg15[%c0_105, %c0_106] : memref<256x128xbf16, #tpu.memory_space<vmem>>, vector<256x128xbf16>
    %236 = arith.truncf %234 : vector<64x256xf32> to vector<64x256xbf16>
    %cst_107 = arith.constant dense<0.000000e+00> : vector<64x128xf32>
    %237 = tpu.matmul %236, %235, %cst_107 {dimension_numbers = #tpu.dot_dimension_numbers<[1], [0], [0], [1], [0, 0, 1, 1], [], []>} : vector<64x256xbf16>, vector<256x128xbf16>, vector<64x128xf32> -> vector<64x128xf32>
    %c0_108 = arith.constant 0 : index
    %c0_109 = arith.constant 0 : index
    %238 = vector.load %arg16[%c0_108, %c0_109] : memref<1x128xf32, #tpu.memory_space<vmem>>, vector<1x128xf32>
    %239 = vector.broadcast %238 : vector<1x128xf32> to vector<64x128xf32>
    %240 = arith.addf %237, %239 : vector<64x128xf32>
    %cst_110 = arith.constant 5.000000e-01 : f32
    %241 = vector.broadcast %cst_110 : f32 to vector<64x128xf32>
    %242 = arith.mulf %241, %240 : vector<64x128xf32>
    %cst_111 = arith.constant 4.471500e-02 : f32
    %243 = vector.broadcast %cst_111 : f32 to vector<64x128xf32>
    %244 = arith.mulf %243, %240 : vector<64x128xf32>
    %245 = arith.mulf %244, %240 : vector<64x128xf32>
    %246 = arith.mulf %245, %240 : vector<64x128xf32>
    %247 = arith.addf %240, %246 : vector<64x128xf32>
    %cst_112 = arith.constant 0.797884583 : f32
    %248 = vector.broadcast %cst_112 : f32 to vector<64x128xf32>
    %249 = arith.mulf %248, %247 : vector<64x128xf32>
    %250 = math.tanh %249 : vector<64x128xf32>
    %cst_113 = arith.constant 1.000000e+00 : f32
    %251 = vector.broadcast %cst_113 : f32 to vector<64x128xf32>
    %252 = arith.addf %251, %250 : vector<64x128xf32>
    %253 = arith.mulf %242, %252 : vector<64x128xf32>
    %c0_114 = arith.constant 0 : index
    %c0_115 = arith.constant 0 : index
    %254 = vector.load %arg17[%c0_114, %c0_115] : memref<128x8xbf16, #tpu.memory_space<vmem>>, vector<128x8xbf16>
    %255 = arith.truncf %253 : vector<64x128xf32> to vector<64x128xbf16>
    %cst_116 = arith.constant dense<0.000000e+00> : vector<64x8xf32>
    %256 = tpu.matmul %255, %254, %cst_116 {dimension_numbers = #tpu.dot_dimension_numbers<[1], [0], [0], [1], [0, 0, 1, 1], [], []>} : vector<64x128xbf16>, vector<128x8xbf16>, vector<64x8xf32> -> vector<64x8xf32>
    %c0_117 = arith.constant 0 : index
    %c0_118 = arith.constant 0 : index
    %257 = vector.load %arg18[%c0_117, %c0_118] : memref<1x8xf32, #tpu.memory_space<vmem>>, vector<1x8xf32>
    %258 = vector.broadcast %257 : vector<1x8xf32> to vector<64x8xf32>
    %259 = arith.addf %256, %258 : vector<64x8xf32>
    %260 = arith.addf %12, %259 : vector<64x8xf32>
    %c0_119 = arith.constant 0 : index
    %c0_120 = arith.constant 0 : index
    %c0_121 = arith.constant 0 : index
    %261 = vector.load %arg19[%c0_119, %c0_120, %c0_121] : memref<1x64x8xf32, #tpu.memory_space<vmem>>, vector<1x64x8xf32>
    %262 = vector.shape_cast %261 : vector<1x64x8xf32> to vector<64x8xf32>
    %263 = vector.shape_cast %260 : vector<64x8xf32> to vector<1x64x8xf32>
    tpu.vector_store %arg19[%c0_119, %c0_120, %c0_121], %263 {strides = array<i32>} : memref<1x64x8xf32, #tpu.memory_space<vmem>>, vector<1x64x8xf32>,
    return
  }
  func.func @transform_0(%arg0: i32) -> (i32, i32, i32) {
    %c0_i32 = arith.constant 0 : i32
    %c0_i32_0 = arith.constant 0 : i32
    %c0_i32_1 = arith.constant 0 : i32
    return %arg0, %c0_i32, %c0_i32_0 : i32, i32, i32
  }
  func.func @transform_1(%arg0: i32) -> (i32, i32, i32) {
    %c0_i32 = arith.constant 0 : i32
    %c0_i32_0 = arith.constant 0 : i32
    %c0_i32_1 = arith.constant 0 : i32
    return %arg0, %c0_i32, %c0_i32_0 : i32, i32, i32
  }
  func.func @transform_2(%arg0: i32) -> (i32, i32) {
    %c0_i32 = arith.constant 0 : i32
    %c0_i32_0 = arith.constant 0 : i32
    %c0_i32_1 = arith.constant 0 : i32
    return %c0_i32, %c0_i32_0 : i32, i32
  }
  func.func @transform_3(%arg0: i32) -> (i32, i32) {
    %c0_i32 = arith.constant 0 : i32
    %c0_i32_0 = arith.constant 0 : i32
    %c0_i32_1 = arith.constant 0 : i32
    return %c0_i32, %c0_i32_0 : i32, i32
  }
  func.func @transform_4(%arg0: i32) -> (i32, i32) {
    %c0_i32 = arith.constant 0 : i32
    %c0_i32_0 = arith.constant 0 : i32
    %c0_i32_1 = arith.constant 0 : i32
    return %c0_i32, %c0_i32_0 : i32, i32
  }
  func.func @transform_5(%arg0: i32) -> (i32, i32) {
    %c0_i32 = arith.constant 0 : i32
    %c0_i32_0 = arith.constant 0 : i32
    %c0_i32_1 = arith.constant 0 : i32
    return %c0_i32, %c0_i32_0 : i32, i32
  }
  func.func @transform_6(%arg0: i32) -> (i32, i32) {
    %c0_i32 = arith.constant 0 : i32
    %c0_i32_0 = arith.constant 0 : i32
    %c0_i32_1 = arith.constant 0 : i32
    return %c0_i32, %c0_i32_0 : i32, i32
  }
  func.func @transform_7(%arg0: i32) -> (i32, i32) {
    %c0_i32 = arith.constant 0 : i32
    %c0_i32_0 = arith.constant 0 : i32
    %c0_i32_1 = arith.constant 0 : i32
    return %c0_i32, %c0_i32_0 : i32, i32
  }
  func.func @transform_8(%arg0: i32) -> (i32, i32, i32) {
    %c0_i32 = arith.constant 0 : i32
    %c0_i32_0 = arith.constant 0 : i32
    %c0_i32_1 = arith.constant 0 : i32
    %c0_i32_2 = arith.constant 0 : i32
    return %c0_i32, %c0_i32_0, %c0_i32_1 : i32, i32, i32
  }
  func.func @transform_9(%arg0: i32) -> (i32, i32, i32) {
    %c0_i32 = arith.constant 0 : i32
    %c0_i32_0 = arith.constant 0 : i32
    %c0_i32_1 = arith.constant 0 : i32
    %c0_i32_2 = arith.constant 0 : i32
    return %c0_i32, %c0_i32_0, %c0_i32_1 : i32, i32, i32
  }
  func.func @transform_10(%arg0: i32) -> (i32, i32, i32) {
    %c0_i32 = arith.constant 0 : i32
    %c0_i32_0 = arith.constant 0 : i32
    %c0_i32_1 = arith.constant 0 : i32
    %c0_i32_2 = arith.constant 0 : i32
    return %c0_i32, %c0_i32_0, %c0_i32_1 : i32, i32, i32
  }
  func.func @transform_11(%arg0: i32) -> (i32, i32, i32) {
    %c0_i32 = arith.constant 0 : i32
    %c0_i32_0 = arith.constant 0 : i32
    %c0_i32_1 = arith.constant 0 : i32
    %c0_i32_2 = arith.constant 0 : i32
    return %c0_i32, %c0_i32_0, %c0_i32_1 : i32, i32, i32
  }
  func.func @transform_12(%arg0: i32) -> (i32, i32, i32) {
    %c0_i32 = arith.constant 0 : i32
    %c0_i32_0 = arith.constant 0 : i32
    %c0_i32_1 = arith.constant 0 : i32
    %c0_i32_2 = arith.constant 0 : i32
    return %c0_i32, %c0_i32_0, %c0_i32_1 : i32, i32, i32
  }
  func.func @transform_13(%arg0: i32) -> (i32, i32, i32) {
    %c0_i32 = arith.constant 0 : i32
    %c0_i32_0 = arith.constant 0 : i32
    %c0_i32_1 = arith.constant 0 : i32
    %c0_i32_2 = arith.constant 0 : i32
    return %c0_i32, %c0_i32_0, %c0_i32_1 : i32, i32, i32
  }
  func.func @transform_14(%arg0: i32) -> (i32, i32) {
    %c0_i32 = arith.constant 0 : i32
    %c0_i32_0 = arith.constant 0 : i32
    %c0_i32_1 = arith.constant 0 : i32
    return %c0_i32, %c0_i32_0 : i32, i32
  }
  func.func @transform_15(%arg0: i32) -> (i32, i32) {
    %c0_i32 = arith.constant 0 : i32
    %c0_i32_0 = arith.constant 0 : i32
    %c0_i32_1 = arith.constant 0 : i32
    return %c0_i32, %c0_i32_0 : i32, i32
  }
  func.func @transform_16(%arg0: i32) -> (i32, i32) {
    %c0_i32 = arith.constant 0 : i32
    %c0_i32_0 = arith.constant 0 : i32
    %c0_i32_1 = arith.constant 0 : i32
    return %c0_i32, %c0_i32_0 : i32, i32
  }
  func.func @transform_17(%arg0: i32) -> (i32, i32) {
    %c0_i32 = arith.constant 0 : i32
    %c0_i32_0 = arith.constant 0 : i32
    %c0_i32_1 = arith.constant 0 : i32
    return %c0_i32, %c0_i32_0 : i32, i32
  }
  func.func @transform_18(%arg0: i32) -> (i32, i32, i32) {
    %c0_i32 = arith.constant 0 : i32
    %c0_i32_0 = arith.constant 0 : i32
    %c0_i32_1 = arith.constant 0 : i32
    return %arg0, %c0_i32, %c0_i32_0 : i32, i32, i32
  }
  func.func @transform_19(%arg0: i32) -> (i32, i32, i32) {
    %c0_i32 = arith.constant 0 : i32
    %c0_i32_0 = arith.constant 0 : i32
    %c0_i32_1 = arith.constant 0 : i32
    return %arg0, %c0_i32, %c0_i32_0 : i32, i32, i32
  }
}

</mosaic_0001>

<llo_original>
// kernel: egiinet_forward.1
$region0: #{egiinet_forward.1}
  #allocation0 [shape = 'u32[]', space=smem, size = 0x4, offset = 0x4, fixed_abs, tag = 'smem constant byte address 0x4 - core index']
  #allocation1 [shape = 'u32[72,128]{1,0:T(1,128)}', space=vmem, size = 0x9000, scoped, tag = 'internal scratch']
  %s0 = inlined_call_operand.vmem [shape: bf16[2,16,128], index: 0, kind: input, shape index: {}]
  %s1 = inlined_call_operand.vmem [shape: f32[2,64,8], index: 1, kind: input, shape index: {}]
  %s2 = inlined_call_operand.vmem [shape: bf16[128,128], index: 2, kind: input, shape index: {}]
  %s3 = inlined_call_operand.vmem [shape: f32[1,128], index: 3, kind: input, shape index: {}]
  %s4 = inlined_call_operand.vmem [shape: f32[8,128], index: 4, kind: input, shape index: {}]
  %s5 = inlined_call_operand.vmem [shape: f32[1,128], index: 5, kind: input, shape index: {}]
  %s6 = inlined_call_operand.vmem [shape: bf16[128,128], index: 6, kind: input, shape index: {}]
  %s7 = inlined_call_operand.vmem [shape: f32[1,128], index: 7, kind: input, shape index: {}]
  %s8 = inlined_call_operand.vmem [shape: f32[2,1,128], index: 8, kind: input, shape index: {}]
  %s9 = inlined_call_operand.vmem [shape: f32[2,1,128], index: 9, kind: input, shape index: {}]
  %s10 = inlined_call_operand.vmem [shape: bf16[2,128,128], index: 10, kind: input, shape index: {}]
  %s11 = inlined_call_operand.vmem [shape: f32[2,1,128], index: 11, kind: input, shape index: {}]
  %s12 = inlined_call_operand.vmem [shape: bf16[2,128,128], index: 12, kind: input, shape index: {}]
  %s13 = inlined_call_operand.vmem [shape: f32[2,1,128], index: 13, kind: input, shape index: {}]
  %s14 = inlined_call_operand.vmem [shape: bf16[256,128], index: 14, kind: input, shape index: {}]
  %s15 = inlined_call_operand.vmem [shape: f32[1,128], index: 15, kind: input, shape index: {}]
  %s16 = inlined_call_operand.vmem [shape: bf16[128,8], index: 16, kind: input, shape index: {}]
  %s17 = inlined_call_operand.vmem [shape: f32[1,8], index: 17, kind: input, shape index: {}]
  %s18 = inlined_call_operand.vmem [shape: f32[2,64,8], index: 18, kind: output, shape index: {0}]
  %s19 = inlined_call_operand.vmem [shape: f32[2,1,128], index: 19, kind: output, shape index: {1}]
  %20 = xla_tuple %s18, %s19
  %s21 = sld [smem:[#allocation0]]
  $region113: #{egiinet_forward.1} parent=0
    _
  %s23 = ssub.s32 1, %s21
  %s24 = scalar_select 0, %s23, %s21
  loop: start=0, step=1, limit=4
  $region2: #{egiinet_forward.1} parent=0 // loop_pre_header
    _
  $region3: #{egiinet_forward.1} parent=0 // loop_header
    %s26 = sphi 0, %s30
    %p27 = scmp.ge.s32.totalorder %s26, 4
    %s36 = sphi 0, %s38
    %s39 = sphi 0, %s36
    %s40 = sphi 0, %s39
    %s56 = sphi 0, %s40
    %s62 = sphi 0, %s64
    %s65 = sphi 0, %s62
    %s66 = sphi 0, %s65
    %s82 = sphi 0, %s66
    %s86 = sphi 0, %s86
    %s88 = sphi 0, %s86
    %s89 = sphi 0, %s88
    %s103 = sphi 0, %s89
    %s107 = sphi 0, %s107
    %s109 = sphi 0, %s107
    %s110 = sphi 0, %s109
    %s124 = sphi 0, %s110
    %s128 = sphi 0, %s128
    %s130 = sphi 0, %s128
    %s131 = sphi 0, %s130
    %s145 = sphi 0, %s131
    %s149 = sphi 0, %s149
    %s151 = sphi 0, %s149
    %s152 = sphi 0, %s151
    %s166 = sphi 0, %s152
    %s170 = sphi 0, %s170
    %s172 = sphi 0, %s170
    %s173 = sphi 0, %s172
    %s187 = sphi 0, %s173
    %s191 = sphi 0, %s191
    %s193 = sphi 0, %s191
    %s194 = sphi 0, %s193
    %s208 = sphi 0, %s194
    %s212 = sphi 0, %s212
    %s214 = sphi 0, %s212
    %s215 = sphi 0, %s214
    %s229 = sphi 0, %s215
    %s233 = sphi 0, %s233
    %s235 = sphi 0, %s233
    %s236 = sphi 0, %s235
    %s250 = sphi 0, %s236
    %s254 = sphi 0, %s254
    %s256 = sphi 0, %s254
    %s257 = sphi 0, %s256
    %s271 = sphi 0, %s257
    %s275 = sphi 0, %s275
    %s277 = sphi 0, %s275
    %s278 = sphi 0, %s277
    %s292 = sphi 0, %s278
    %s296 = sphi 0, %s296
    %s298 = sphi 0, %s296
    %s299 = sphi 0, %s298
    %s313 = sphi 0, %s299
    %s317 = sphi 0, %s317
    %s319 = sphi 0, %s317
    %s320 = sphi 0, %s319
    %s334 = sphi 0, %s320
    %s338 = sphi 0, %s338
    %s340 = sphi 0, %s338
    %s341 = sphi 0, %s340
    %s355 = sphi 0, %s341
    %s359 = sphi 0, %s359
    %s361 = sphi 0, %s359
    %s362 = sphi 0, %s361
    %s376 = sphi 0, %s362
    %s380 = sphi 0, %s380
    %s382 = sphi 0, %s380
    %s383 = sphi 0, %s382
    %s397 = sphi 0, %s383
    %s401 = sphi 0, %s401
    %s403 = sphi 0, %s401
    %s404 = sphi 0, %s403
    %s418 = sphi 0, %s404
    %s424 = sphi 0, %s426
    %s427 = sphi 0, %s424
    %s428 = sphi 0, %s427
    %s444 = sphi 0, %s428
    %s450 = sphi 0, %s452
    %s453 = sphi 0, %s450
    %s454 = sphi 0, %s453
    %s470 = sphi 0, %s454
  $region4: #{egiinet_forward.1} parent=0 // loop_header_branch
    %29 = sbr.rel (%p27) target = $region8
  $region5: #{egiinet_forward.1} parent=0 // loop_body
    %s31 = ssub.s32 %s26, 1
    %s32 = ssub.s32 %s26, 2
    %s33 = sadd.s32 %s26, 1
    %s34 = ssub.s32 %s26, %s33
    %p35 = scmp.eq.s32.totalorder %s34, 0
    %s37 = sadd.s32 %s36, 1
    %s38 = scalar_select %p35, %s36, %s37
    %p41 = pneg %p35
    %p42 = scmp.eq.s32.totalorder %s26, 1
    %p43 = por %p41, %p42
    %p44 = scmp.ne.s32.totalorder %s36, %s39
    %p45 = scmp.eq.s32.totalorder %s26, 0
    %p46 = por %p44, %p45
    %p47 = scmp.ne.s32.totalorder %s36, %s39
    %p48 = scmp.eq.s32.totalorder %s31, 1
    %p49 = por %p47, %p48
    %p50 = scmp.ne.s32.totalorder %s39, %s40
    %p51 = scmp.eq.s32.totalorder %s31, 0
    %p52 = por %p50, %p51
    %p53 = scmp.ne.s32.totalorder %s39, %s40
    %p54 = scmp.eq.s32.totalorder %s32, 1
    %p55 = por %p53, %p54
    %p57 = scmp.ne.s32.totalorder %s40, %s56
    %p58 = scmp.eq.s32.totalorder %s32, 0
    %p59 = por %p57, %p58
    %s60 = ssub.s32 %s26, %s33
    %p61 = scmp.eq.s32.totalorder %s60, 0
    %s63 = sadd.s32 %s62, 1
    %s64 = scalar_select %p61, %s62, %s63
    %p67 = pneg %p61
    %p68 = scmp.eq.s32.totalorder %s26, 1
    %p69 = por %p67, %p68
    %p70 = scmp.ne.s32.totalorder %s62, %s65
    %p71 = scmp.eq.s32.totalorder %s26, 0
    %p72 = por %p70, %p71
    %p73 = scmp.ne.s32.totalorder %s62, %s65
    %p74 = scmp.eq.s32.totalorder %s31, 1
    %p75 = por %p73, %p74
    %p76 = scmp.ne.s32.totalorder %s65, %s66
    %p77 = scmp.eq.s32.totalorder %s31, 0
    %p78 = por %p76, %p77
    %p79 = scmp.ne.s32.totalorder %s65, %s66
    %p80 = scmp.eq.s32.totalorder %s32, 1
    %p81 = por %p79, %p80
    %p83 = scmp.ne.s32.totalorder %s66, %s82
    %p84 = scmp.eq.s32.totalorder %s32, 0
    %p85 = por %p83, %p84
    %s87 = sadd.s32 %s86, 1
    %p90 = scmp.eq.s32.totalorder %s26, 1
    %p91 = scmp.ne.s32.totalorder %s86, %s88
    %p92 = scmp.eq.s32.totalorder %s26, 0
    %p93 = por %p91, %p92
    %p94 = scmp.ne.s32.totalorder %s86, %s88
    %p95 = scmp.eq.s32.totalorder %s31, 1
    %p96 = por %p94, %p95
    %p97 = scmp.ne.s32.totalorder %s88, %s89
    %p98 = scmp.eq.s32.totalorder %s31, 0
    %p99 = por %p97, %p98
    %p100 = scmp.ne.s32.totalorder %s88, %s89
    %p101 = scmp.eq.s32.totalorder %s32, 1
    %p102 = por %p100, %p101
    %p104 = scmp.ne.s32.totalorder %s89, %s103
    %p105 = scmp.eq.s32.totalorder %s32, 0
    %p106 = por %p104, %p105
    %s108 = sadd.s32 %s107, 1
    %p111 = scmp.eq.s32.totalorder %s26, 1
    %p112 = scmp.ne.s32.totalorder %s107, %s109
    %p113 = scmp.eq.s32.totalorder %s26, 0
    %p114 = por %p112, %p113
    %p115 = scmp.ne.s32.totalorder %s107, %s109
    %p116 = scmp.eq.s32.totalorder %s31, 1
    %p117 = por %p115, %p116
    %p118 = scmp.ne.s32.totalorder %s109, %s110
    %p119 = scmp.eq.s32.totalorder %s31, 0
    %p120 = por %p118, %p119
    %p121 = scmp.ne.s32.totalorder %s109, %s110
    %p122 = scmp.eq.s32.totalorder %s32, 1
    %p123 = por %p121, %p122
    %p125 = scmp.ne.s32.totalorder %s110, %s124
    %p126 = scmp.eq.s32.totalorder %s32, 0
    %p127 = por %p125, %p126
    %s129 = sadd.s32 %s128, 1
    %p132 = scmp.eq.s32.totalorder %s26, 1
    %p133 = scmp.ne.s32.totalorder %s128, %s130
    %p134 = scmp.eq.s32.totalorder %s26, 0
    %p135 = por %p133, %p134
    %p136 = scmp.ne.s32.totalorder %s128, %s130
    %p137 = scmp.eq.s32.totalorder %s31, 1
    %p138 = por %p136, %p137
    %p139 = scmp.ne.s32.totalorder %s130, %s131
    %p140 = scmp.eq.s32.totalorder %s31, 0
    %p141 = por %p139, %p140
    %p142 = scmp.ne.s32.totalorder %s130, %s131
    %p143 = scmp.eq.s32.totalorder %s32, 1
    %p144 = por %p142, %p143
    %p146 = scmp.ne.s32.totalorder %s131, %s145
    %p147 = scmp.eq.s32.totalorder %s32, 0
    %p148 = por %p146, %p147
    %s150 = sadd.s32 %s149, 1
    %p153 = scmp.eq.s32.totalorder %s26, 1
    %p154 = scmp.ne.s32.totalorder %s149, %s151
    %p155 = scmp.eq.s32.totalorder %s26, 0
    %p156 = por %p154, %p155
    %p157 = scmp.ne.s32.totalorder %s149, %s151
    %p158 = scmp.eq.s32.totalorder %s31, 1
    %p159 = por %p157, %p158
    %p160 = scmp.ne.s32.totalorder %s151, %s152
    %p161 = scmp.eq.s32.totalorder %s31, 0
    %p162 = por %p160, %p161
    %p163 = scmp.ne.s32.totalorder %s151, %s152
    %p164 = scmp.eq.s32.totalorder %s32, 1
    %p165 = por %p163, %p164
    %p167 = scmp.ne.s32.totalorder %s152, %s166
    %p168 = scmp.eq.s32.totalorder %s32, 0
    %p169 = por %p167, %p168
    %s171 = sadd.s32 %s170, 1
    %p174 = scmp.eq.s32.totalorder %s26, 1
    %p175 = scmp.ne.s32.totalorder %s170, %s172
    %p176 = scmp.eq.s32.totalorder %s26, 0
    %p177 = por %p175, %p176
    %p178 = scmp.ne.s32.totalorder %s170, %s172
    %p179 = scmp.eq.s32.totalorder %s31, 1
    %p180 = por %p178, %p179
    %p181 = scmp.ne.s32.totalorder %s172, %s173
    %p182 = scmp.eq.s32.totalorder %s31, 0
    %p183 = por %p181, %p182
    %p184 = scmp.ne.s32.totalorder %s172, %s173
    %p185 = scmp.eq.s32.totalorder %s32, 1
    %p186 = por %p184, %p185
    %p188 = scmp.ne.s32.totalorder %s173, %s187
    %p189 = scmp.eq.s32.totalorder %s32, 0
    %p190 = por %p188, %p189
    %s192 = sadd.s32 %s191, 1
    %p195 = scmp.eq.s32.totalorder %s26, 1
    %p196 = scmp.ne.s32.totalorder %s191, %s193
    %p197 = scmp.eq.s32.totalorder %s26, 0
    %p198 = por %p196, %p197
    %p199 = scmp.ne.s32.totalorder %s191, %s193
    %p200 = scmp.eq.s32.totalorder %s31, 1
    %p201 = por %p199, %p200
    %p202 = scmp.ne.s32.totalorder %s193, %s194
    %p203 = scmp.eq.s32.totalorder %s31, 0
    %p204 = por %p202, %p203
    %p205 = scmp.ne.s32.totalorder %s193, %s194
    %p206 = scmp.eq.s32.totalorder %s32, 1
    %p207 = por %p205, %p206
    %p209 = scmp.ne.s32.totalorder %s194, %s208
    %p210 = scmp.eq.s32.totalorder %s32, 0
    %p211 = por %p209, %p210
    %s213 = sadd.s32 %s212, 1
    %p216 = scmp.eq.s32.totalorder %s26, 1
    %p217 = scmp.ne.s32.totalorder %s212, %s214
    %p218 = scmp.eq.s32.totalorder %s26, 0
    %p219 = por %p217, %p218
    %p220 = scmp.ne.s32.totalorder %s212, %s214
    %p221 = scmp.eq.s32.totalorder %s31, 1
    %p222 = por %p220, %p221
    %p223 = scmp.ne.s32.totalorder %s214, %s215
    %p224 = scmp.eq.s32.totalorder %s31, 0
    %p225 = por %p223, %p224
    %p226 = scmp.ne.s32.totalorder %s214, %s215
    %p227 = scmp.eq.s32.totalorder %s32, 1
    %p228 = por %p226, %p227
    %p230 = scmp.ne.s32.totalorder %s215, %s229
    %p231 = scmp.eq.s32.totalorder %s32, 0
    %p232 = por %p230, %p231
    %s234 = sadd.s32 %s233, 1
    %p237 = scmp.eq.s32.totalorder %s26, 1
    %p238 = scmp.ne.s32.totalorder %s233, %s235
    %p239 = scmp.eq.s32.totalorder %s26, 0
    %p240 = por %p238, %p239
    %p241 = scmp.ne.s32.totalorder %s233, %s235
    %p242 = scmp.eq.s32.totalorder %s31, 1
    %p243 = por %p241, %p242
    %p244 = scmp.ne.s32.totalorder %s235, %s236
    %p245 = scmp.eq.s32.totalorder %s31, 0
    %p246 = por %p244, %p245
    %p247 = scmp.ne.s32.totalorder %s235, %s236
    %p248 = scmp.eq.s32.totalorder %s32, 1
    %p249 = por %p247, %p248
    %p251 = scmp.ne.s32.totalorder %s236, %s250
    %p252 = scmp.eq.s32.totalorder %s32, 0
    %p253 = por %p251, %p252
    %s255 = sadd.s32 %s254, 1
    %p258 = scmp.eq.s32.totalorder %s26, 1
    %p259 = scmp.ne.s32.totalorder %s254, %s256
    %p260 = scmp.eq.s32.totalorder %s26, 0
    %p261 = por %p259, %p260
    %p262 = scmp.ne.s32.totalorder %s254, %s256
    %p263 = scmp.eq.s32.totalorder %s31, 1
    %p264 = por %p262, %p263
    %p265 = scmp.ne.s32.totalorder %s256, %s257
    %p266 = scmp.eq.s32.totalorder %s31, 0
    %p267 = por %p265, %p266
    %p268 = scmp.ne.s32.totalorder %s256, %s257
    %p269 = scmp.eq.s32.totalorder %s32, 1
    %p270 = por %p268, %p269
    %p272 = scmp.ne.s32.totalorder %s257, %s271
    %p273 = scmp.eq.s32.totalorder %s32, 0
    %p274 = por %p272, %p273
    %s276 = sadd.s32 %s275, 1
    %p279 = scmp.eq.s32.totalorder %s26, 1
    %p280 = scmp.ne.s32.totalorder %s275, %s277
    %p281 = scmp.eq.s32.totalorder %s26, 0
    %p282 = por %p280, %p281
    %p283 = scmp.ne.s32.totalorder %s275, %s277
    %p284 = scmp.eq.s32.totalorder %s31, 1
    %p285 = por %p283, %p284
    %p286 = scmp.ne.s32.totalorder %s277, %s278
    %p287 = scmp.eq.s32.totalorder %s31, 0
    %p288 = por %p286, %p287
    %p289 = scmp.ne.s32.totalorder %s277, %s278
    %p290 = scmp.eq.s32.totalorder %s32, 1
    %p291 = por %p289, %p290
    %p293 = scmp.ne.s32.totalorder %s278, %s292
    %p294 = scmp.eq.s32.totalorder %s32, 0
    %p295 = por %p293, %p294
    %s297 = sadd.s32 %s296, 1
    %p300 = scmp.eq.s32.totalorder %s26, 1
    %p301 = scmp.ne.s32.totalorder %s296, %s298
    %p302 = scmp.eq.s32.totalorder %s26, 0
    %p303 = por %p301, %p302
    %p304 = scmp.ne.s32.totalorder %s296, %s298
    %p305 = scmp.eq.s32.totalorder %s31, 1
    %p306 = por %p304, %p305
    %p307 = scmp.ne.s32.totalorder %s298, %s299
    %p308 = scmp.eq.s32.totalorder %s31, 0
    %p309 = por %p307, %p308
    %p310 = scmp.ne.s32.totalorder %s298, %s299
    %p311 = scmp.eq.s32.totalorder %s32, 1
    %p312 = por %p310, %p311
    %p314 = scmp.ne.s32.totalorder %s299, %s313
    %p315 = scmp.eq.s32.totalorder %s32, 0
    %p316 = por %p314, %p315
    %s318 = sadd.s32 %s317, 1
    %p321 = scmp.eq.s32.totalorder %s26, 1
    %p322 = scmp.ne.s32.totalorder %s317, %s319
    %p323 = scmp.eq.s32.totalorder %s26, 0
    %p324 = por %p322, %p323
    %p325 = scmp.ne.s32.totalorder %s317, %s319
    %p326 = scmp.eq.s32.totalorder %s31, 1
    %p327 = por %p325, %p326
    %p328 = scmp.ne.s32.totalorder %s319, %s320
    %p329 = scmp.eq.s32.totalorder %s31, 0
    %p330 = por %p328, %p329
    %p331 = scmp.ne.s32.totalorder %s319, %s320
    %p332 = scmp.eq.s32.totalorder %s32, 1
    %p333 = por %p331, %p332
    %p335 = scmp.ne.s32.totalorder %s320, %s334
    %p336 = scmp.eq.s32.totalorder %s32, 0
    %p337 = por %p335, %p336
    %s339 = sadd.s32 %s338, 1
    %p342 = scmp.eq.s32.totalorder %s26, 1
    %p343 = scmp.ne.s32.totalorder %s338, %s340
    %p344 = scmp.eq.s32.totalorder %s26, 0
    %p345 = por %p343, %p344
    %p346 = scmp.ne.s32.totalorder %s338, %s340
    %p347 = scmp.eq.s32.totalorder %s31, 1
    %p348 = por %p346, %p347
    %p349 = scmp.ne.s32.totalorder %s340, %s341
    %p350 = scmp.eq.s32.totalorder %s31, 0
    %p351 = por %p349, %p350
    %p352 = scmp.ne.s32.totalorder %s340, %s341
    %p353 = scmp.eq.s32.totalorder %s32, 1
    %p354 = por %p352, %p353
    %p356 = scmp.ne.s32.totalorder %s341, %s355
    %p357 = scmp.eq.s32.totalorder %s32, 0
    %p358 = por %p356, %p357
    %s360 = sadd.s32 %s359, 1
    %p363 = scmp.eq.s32.totalorder %s26, 1
    %p364 = scmp.ne.s32.totalorder %s359, %s361
    %p365 = scmp.eq.s32.totalorder %s26, 0
    %p366 = por %p364, %p365
    %p367 = scmp.ne.s32.totalorder %s359, %s361
    %p368 = scmp.eq.s32.totalorder %s31, 1
    %p369 = por %p367, %p368
    %p370 = scmp.ne.s32.totalorder %s361, %s362
    %p371 = scmp.eq.s32.totalorder %s31, 0
    %p372 = por %p370, %p371
    %p373 = scmp.ne.s32.totalorder %s361, %s362
    %p374 = scmp.eq.s32.totalorder %s32, 1
    %p375 = por %p373, %p374
    %p377 = scmp.ne.s32.totalorder %s362, %s376
    %p378 = scmp.eq.s32.totalorder %s32, 0
    %p379 = por %p377, %p378
    %s381 = sadd.s32 %s380, 1
    %p384 = scmp.eq.s32.totalorder %s26, 1
    %p385 = scmp.ne.s32.totalorder %s380, %s382
    %p386 = scmp.eq.s32.totalorder %s26, 0
    %p387 = por %p385, %p386
    %p388 = scmp.ne.s32.totalorder %s380, %s382
    %p389 = scmp.eq.s32.totalorder %s31, 1
    %p390 = por %p388, %p389
    %p391 = scmp.ne.s32.totalorder %s382, %s383
    %p392 = scmp.eq.s32.totalorder %s31, 0
    %p393 = por %p391, %p392
    %p394 = scmp.ne.s32.totalorder %s382, %s383
    %p395 = scmp.eq.s32.totalorder %s32, 1
    %p396 = por %p394, %p395
    %p398 = scmp.ne.s32.totalorder %s383, %s397
    %p399 = scmp.eq.s32.totalorder %s32, 0
    %p400 = por %p398, %p399
    %s402 = sadd.s32 %s401, 1
    %p405 = scmp.eq.s32.totalorder %s26, 1
    %p406 = scmp.ne.s32.totalorder %s401, %s403
    %p407 = scmp.eq.s32.totalorder %s26, 0
    %p408 = por %p406, %p407
    %p409 = scmp.ne.s32.totalorder %s401, %s403
    %p410 = scmp.eq.s32.totalorder %s31, 1
    %p411 = por %p409, %p410
    %p412 = scmp.ne.s32.totalorder %s403, %s404
    %p413 = scmp.eq.s32.totalorder %s31, 0
    %p414 = por %p412, %p413
    %p415 = scmp.ne.s32.totalorder %s403, %s404
    %p416 = scmp.eq.s32.totalorder %s32, 1
    %p417 = por %p415, %p416
    %p419 = scmp.ne.s32.totalorder %s404, %s418
    %p420 = scmp.eq.s32.totalorder %s32, 0
    %p421 = por %p419, %p420
    %s422 = ssub.s32 %s26, %s33
    %p423 = scmp.eq.s32.totalorder %s422, 0
    %s425 = sadd.s32 %s424, 1
    %s426 = scalar_select %p423, %s424, %s425
    %p429 = pneg %p423
    %p430 = scmp.eq.s32.totalorder %s26, 1
    %p431 = por %p429, %p430
    %p432 = scmp.ne.s32.totalorder %s424, %s427
    %p433 = scmp.eq.s32.totalorder %s26, 0
    %p434 = por %p432, %p433
    %p435 = scmp.ne.s32.totalorder %s424, %s427
    %p436 = scmp.eq.s32.totalorder %s31, 1
    %p437 = por %p435, %p436
    %p438 = scmp.ne.s32.totalorder %s427, %s428
    %p439 = scmp.eq.s32.totalorder %s31, 0
    %p440 = por %p438, %p439
    %p441 = scmp.ne.s32.totalorder %s427, %s428
    %p442 = scmp.eq.s32.totalorder %s32, 1
    %p443 = por %p441, %p442
    %p445 = scmp.ne.s32.totalorder %s428, %s444
    %p446 = scmp.eq.s32.totalorder %s32, 0
    %p447 = por %p445, %p446
    %s448 = ssub.s32 %s26, %s33
    %p449 = scmp.eq.s32.totalorder %s448, 0
    %s451 = sadd.s32 %s450, 1
    %s452 = scalar_select %p449, %s450, %s451
    %p455 = pneg %p449
    %p456 = scmp.eq.s32.totalorder %s26, 1
    %p457 = por %p455, %p456
    %p458 = scmp.ne.s32.totalorder %s450, %s453
    %p459 = scmp.eq.s32.totalorder %s26, 0
    %p460 = por %p458, %p459
    %p461 = scmp.ne.s32.totalorder %s450, %s453
    %p462 = scmp.eq.s32.totalorder %s31, 1
    %p463 = por %p461, %p462
    %p464 = scmp.ne.s32.totalorder %s453, %s454
    %p465 = scmp.eq.s32.totalorder %s31, 0
    %p466 = por %p464, %p465
    %p467 = scmp.ne.s32.totalorder %s453, %s454
    %p468 = scmp.eq.s32.totalorder %s32, 1
    %p469 = por %p467, %p468
    %p471 = scmp.ne.s32.totalorder %s454, %s470
    %p472 = scmp.eq.s32.totalorder %s32, 0
    %p473 = por %p471, %p472
    %p474 = scmp.le.s32.totalorder 1, %s26
    %p475 = scmp.lt.s32.totalorder %s26, 3
    %p476 = pnand %p474, %p475
    %p477 = pneg %p476
    // Predicated region
    $region9: #{egiinet_forward.1} parent=5 // pred_check
      _
    $region10: #{egiinet_forward.1} parent=5 // pred_check_branch
      %479 = sbr.rel (%p476) target = $region12
    $region11: #{egiinet_forward.1} parent=5 // pred_region
      %s480 = ssub.s32 %s26, 1
      // Predicated region
      $region13: #{egiinet_forward.1} parent=11 // pred_check
        %p481 = pneg %p99
      $region14: #{egiinet_forward.1} parent=11 // pred_check_branch
        %483 = sbr.rel (%p481) target = $region16
      $region15: #{egiinet_forward.1} parent=11 // pred_region
        _
      $region16: #{egiinet_forward.1} parent=11 // pred_fallthru
        _
      // Predicated region
      $region17: #{egiinet_forward.1} parent=11 // pred_check
        %p484 = pneg %p120
      $region18: #{egiinet_forward.1} parent=11 // pred_check_branch
        %486 = sbr.rel (%p484) target = $region20
      $region19: #{egiinet_forward.1} parent=11 // pred_region
        _
      $region20: #{egiinet_forward.1} parent=11 // pred_fallthru
        _
      // Predicated region
      $region21: #{egiinet_forward.1} parent=11 // pred_check
        %p487 = pneg %p141
      $region22: #{egiinet_forward.1} parent=11 // pred_check_branch
        %489 = sbr.rel (%p487) target = $region24
      $region23: #{egiinet_forward.1} parent=11 // pred_region
        _
      $region24: #{egiinet_forward.1} parent=11 // pred_fallthru
        _
      // Predicated region
      $region25: #{egiinet_forward.1} parent=11 // pred_check
        %p490 = pneg %p162
      $region26: #{egiinet_forward.1} parent=11 // pred_check_branch
        %492 = sbr.rel (%p490) target = $region28
      $region27: #{egiinet_forward.1} parent=11 // pred_region
        _
      $region28: #{egiinet_forward.1} parent=11 // pred_fallthru
        _
      // Predicated region
      $region29: #{egiinet_forward.1} parent=11 // pred_check
        %p493 = pneg %p183
      $region30: #{egiinet_forward.1} parent=11 // pred_check_branch
        %495 = sbr.rel (%p493) target = $region32
      $region31: #{egiinet_forward.1} parent=11 // pred_region
        _
      $region32: #{egiinet_forward.1} parent=11 // pred_fallthru
        _
      // Predicated region
      $region33: #{egiinet_forward.1} parent=11 // pred_check
        %p496 = pneg %p204
      $region34: #{egiinet_forward.1} parent=11 // pred_check_branch
        %498 = sbr.rel (%p496) target = $region36
      $region35: #{egiinet_forward.1} parent=11 // pred_region
        _
      $region36: #{egiinet_forward.1} parent=11 // pred_fallthru
        _
      // Predicated region
      $region37: #{egiinet_forward.1} parent=11 // pred_check
        %p499 = pneg %p225
      $region38: #{egiinet_forward.1} parent=11 // pred_check_branch
        %501 = sbr.rel (%p499) target = $region40
      $region39: #{egiinet_forward.1} parent=11 // pred_region
        _
      $region40: #{egiinet_forward.1} parent=11 // pred_fallthru
        _
      // Predicated region
      $region41: #{egiinet_forward.1} parent=11 // pred_check
        %p502 = pneg %p246
      $region42: #{egiinet_forward.1} parent=11 // pred_check_branch
        %504 = sbr.rel (%p502) target = $region44
      $region43: #{egiinet_forward.1} parent=11 // pred_region
        _
      $region44: #{egiinet_forward.1} parent=11 // pred_fallthru
        _
      // Predicated region
      $region45: #{egiinet_forward.1} parent=11 // pred_check
        %p505 = pneg %p267
      $region46: #{egiinet_forward.1} parent=11 // pred_check_branch
        %507 = sbr.rel (%p505) target = $region48
      $region47: #{egiinet_forward.1} parent=11 // pred_region
        _
      $region48: #{egiinet_forward.1} parent=11 // pred_fallthru
        _
      // Predicated region
      $region49: #{egiinet_forward.1} parent=11 // pred_check
        %p508 = pneg %p288
      $region50: #{egiinet_forward.1} parent=11 // pred_check_branch
        %510 = sbr.rel (%p508) target = $region52
      $region51: #{egiinet_forward.1} parent=11 // pred_region
        _
      $region52: #{egiinet_forward.1} parent=11 // pred_fallthru
        _
      // Predicated region
      $region53: #{egiinet_forward.1} parent=11 // pred_check
        %p511 = pneg %p309
      $region54: #{egiinet_forward.1} parent=11 // pred_check_branch
        %513 = sbr.rel (%p511) target = $region56
      $region55: #{egiinet_forward.1} parent=11 // pred_region
        _
      $region56: #{egiinet_forward.1} parent=11 // pred_fallthru
        _
      // Predicated region
      $region57: #{egiinet_forward.1} parent=11 // pred_check
        %p514 = pneg %p330
      $region58: #{egiinet_forward.1} parent=11 // pred_check_branch
        %516 = sbr.rel (%p514) target = $region60
      $region59: #{egiinet_forward.1} parent=11 // pred_region
        _
      $region60: #{egiinet_forward.1} parent=11 // pred_fallthru
        _
      // Predicated region
      $region61: #{egiinet_forward.1} parent=11 // pred_check
        %p517 = pneg %p351
      $region62: #{egiinet_forward.1} parent=11 // pred_check_branch
        %519 = sbr.rel (%p517) target = $region64
      $region63: #{egiinet_forward.1} parent=11 // pred_region
        _
      $region64: #{egiinet_forward.1} parent=11 // pred_fallthru
        _
      // Predicated region
      $region65: #{egiinet_forward.1} parent=11 // pred_check
        %p520 = pneg %p372
      $region66: #{egiinet_forward.1} parent=11 // pred_check_branch
        %522 = sbr.rel (%p520) target = $region68
      $region67: #{egiinet_forward.1} parent=11 // pred_region
        _
      $region68: #{egiinet_forward.1} parent=11 // pred_fallthru
        _
      // Predicated region
      $region69: #{egiinet_forward.1} parent=11 // pred_check
        %p523 = pneg %p393
      $region70: #{egiinet_forward.1} parent=11 // pred_check_branch
        %525 = sbr.rel (%p523) target = $region72
      $region71: #{egiinet_forward.1} parent=11 // pred_region
        _
      $region72: #{egiinet_forward.1} parent=11 // pred_fallthru
        _
      // Predicated region
      $region73: #{egiinet_forward.1} parent=11 // pred_check
        %p526 = pneg %p414
      $region74: #{egiinet_forward.1} parent=11 // pred_check_branch
        %528 = sbr.rel (%p526) target = $region76
      $region75: #{egiinet_forward.1} parent=11 // pred_region
        _
      $region76: #{egiinet_forward.1} parent=11 // pred_fallthru
        _
    $region12: #{egiinet_forward.1} parent=5 // pred_fallthru
      _
    %p529 = scmp.lt.s32.totalorder %s26, 2
    // Predicated region
    $region77: #{egiinet_forward.1} parent=5 // pred_check
      %p530 = pneg %p529
    $region78: #{egiinet_forward.1} parent=5 // pred_check_branch
      %532 = sbr.rel (%p530) target = $region80
    $region79: #{egiinet_forward.1} parent=5 // pred_region
      // Predicated region
      $region81: #{egiinet_forward.1} parent=79 // pred_check
        %p533 = pneg %p46
      $region82: #{egiinet_forward.1} parent=79 // pred_check_branch
        %535 = sbr.rel (%p533) target = $region84
      $region83: #{egiinet_forward.1} parent=79 // pred_region
        %p536 = scmp.lt.s32.totalorder %s26, 1
        %s537 = scalar_select %p536, %s26, 1
        %s538 = smul.addr %s537, 2
        %s539 = smul.addr %s538, 4
        %s540 = scalar_lea.vmem %s0, %s539
      $region84: #{egiinet_forward.1} parent=79 // pred_fallthru
        _
      // Predicated region
      $region85: #{egiinet_forward.1} parent=79 // pred_check
        %p541 = pneg %p72
      $region86: #{egiinet_forward.1} parent=79 // pred_check_branch
        %543 = sbr.rel (%p541) target = $region88
      $region87: #{egiinet_forward.1} parent=79 // pred_region
        %p544 = scmp.lt.s32.totalorder %s26, 1
        %s545 = scalar_select %p544, %s26, 1
        %s546 = smul.addr %s545, 8
        %s547 = smul.addr %s546, 8
        %s548 = scalar_lea.vmem %s1, %s547
      $region88: #{egiinet_forward.1} parent=79 // pred_fallthru
        _
    $region80: #{egiinet_forward.1} parent=5 // pred_fallthru
      _
    %p549 = scmp.le.s32.totalorder 1, %s26
    %p550 = scmp.lt.s32.totalorder %s26, 3
    %p551 = pnand %p549, %p550
    %p552 = pneg %p551
    // Predicated region
    $region89: #{egiinet_forward.1} parent=5 // pred_check
      _
    $region90: #{egiinet_forward.1} parent=5 // pred_check_branch
      %554 = sbr.rel (%p551) target = $region92
    $region91: #{egiinet_forward.1} parent=5 // pred_region
      %s555 = ssub.s32 %s26, 1
      %p556 = scmp.lt.s32.totalorder %s31, 1
      %s557 = scalar_select %p556, %s31, 1
      %s558 = smul.addr %s557, 2
      %s559 = smul.addr %s558, 4
      %s560 = scalar_lea.vmem %s0, %s559
      %p561 = pneg %p52
      %p562 = pneg %p49
      %p563 = scmp.lt.s32.totalorder %s31, 1
      %s564 = scalar_select %p563, %s31, 1
      %s565 = smul.addr %s564, 8
      %s566 = smul.addr %s565, 8
      %s567 = scalar_lea.vmem %s1, %s566
      %p568 = pneg %p78
      %p569 = pneg %p75
      %p570 = pneg %p99
      %p571 = pneg %p96
      %p572 = pneg %p120
      %p573 = pneg %p117
      %p574 = pneg %p141
      %p575 = pneg %p138
      %p576 = pneg %p162
      %p577 = pneg %p159
      %p578 = pneg %p183
      %p579 = pneg %p180
      %p580 = pneg %p204
      %p581 = pneg %p201
      %p582 = pneg %p225
      %p583 = pneg %p222
      %p584 = pneg %p246
      %p585 = pneg %p243
      %p586 = pneg %p267
      %p587 = pneg %p264
      %p588 = pneg %p288
      %p589 = pneg %p285
      %p590 = pneg %p309
      %p591 = pneg %p306
      %p592 = pneg %p330
      %p593 = pneg %p327
      %p594 = pneg %p351
      %p595 = pneg %p348
      %p596 = pneg %p372
      %p597 = pneg %p369
      %p598 = pneg %p393
      %p599 = pneg %p390
      %p600 = pneg %p414
      %p601 = pneg %p411
      %p602 = pneg %p440
      %p603 = pneg %p437
      %p604 = scmp.lt.s32.totalorder %s31, 1
      %s605 = scalar_select %p604, %s31, 1
      %s606 = smul.addr %s605, 8
      %s607 = smul.addr %s606, 8
      %s608 = scalar_lea.vmem %s18, %s607
      %p609 = pneg %p466
      %p610 = pneg %p463
      %p611 = scmp.lt.s32.totalorder %s31, 1
      %s612 = scalar_select %p611, %s31, 1
      %s613 = scalar_lea.vmem %s19, %s612
      %p614 = scmp.lt.s32.totalorder %s31, 1
      %s615 = scalar_select %p614, %s31, 1
      %s616 = smul.addr %s615, 2
      %s617 = smul.addr %s616, 4
      %s618 = scalar_lea.vmem %s0, %s617
      %p619 = scmp.lt.s32.totalorder %s31, 1
      %s620 = scalar_select %p619, %s31, 1
      %s621 = smul.addr %s620, 8
      %s622 = smul.addr %s621, 8
      %s623 = scalar_lea.vmem %s1, %s622
      %p624 = scmp.lt.s32.totalorder %s31, 1
      %s625 = scalar_select %p624, %s31, 1
      %s626 = smul.addr %s625, 8
      %s627 = smul.addr %s626, 8
      %s628 = scalar_lea.vmem %s18, %s627
      %p629 = scmp.lt.s32.totalorder %s31, 1
      %s630 = scalar_select %p629, %s31, 1
      %s631 = scalar_lea.vmem %s19, %s630
      %v632 = vlaneseq
      %v633 = vand.u32 %v632, 127
      %vm634 = vcmp.lt.s32.totalorder %v633, 32
      %v635 = vld [vmem:[%s618] sm:$0xf]
      %v636 = vld [vmem:[%s618 + $0x4] sm:$0xf]
      %v637 = vld [vmem:[%s2] sm:$0xf]
      %v638 = vld [vmem:[%s2 + $0x4] sm:$0xf]
      %v639 = vld [vmem:[%s2 + $0x8] sm:$0xf]
      %v640 = vld [vmem:[%s2 + $0xc] sm:$0xf]
      %v641 = vld [vmem:[%s2 + $0x10] sm:$0xf]
      %v642 = vld [vmem:[%s2 + $0x14] sm:$0xf]
      %v643 = vld [vmem:[%s2 + $0x18] sm:$0xf]
      %v644 = vld [vmem:[%s2 + $0x1c] sm:$0xf]
      %v645 = vld [vmem:[%s2 + $0x20] sm:$0xf]
      %v646 = vld [vmem:[%s2 + $0x24] sm:$0xf]
      %v647 = vld [vmem:[%s2 + $0x28] sm:$0xf]
      %v648 = vld [vmem:[%s2 + $0x2c] sm:$0xf]
      %v649 = vld [vmem:[%s2 + $0x30] sm:$0xf]
      %v650 = vld [vmem:[%s2 + $0x34] sm:$0xf]
      %v651 = vld [vmem:[%s2 + $0x38] sm:$0xf]
      %v652 = vld [vmem:[%s2 + $0x3c] sm:$0xf]
      %v653 = vld [vmem:[%s3] sm:$0x1]
      %v655 = vperm.slane %v653, 0
      %v659 = vunpack.c.l.b16 %v635
      %v660 = vunpack.c.l.b16 %v636
      %v661 = vpack.c.b16 %v660, %v659
      %v679 = vunpack.c.l.b16 %v637
      %v680 = vunpack.c.l.b16 %v638
      %v681 = vunpack.c.l.b16 %v639
      %v682 = vunpack.c.l.b16 %v640
      %v683 = vunpack.c.l.b16 %v641
      %v684 = vunpack.c.l.b16 %v642
      %v685 = vunpack.c.l.b16 %v643
      %v686 = vunpack.c.l.b16 %v644
      %v687 = vunpack.c.l.b16 %v645
      %v688 = vunpack.c.l.b16 %v646
      %v689 = vunpack.c.l.b16 %v647
      %v690 = vunpack.c.l.b16 %v648
      %v691 = vunpack.c.l.b16 %v649
      %v692 = vunpack.c.l.b16 %v650
      %v693 = vunpack.c.l.b16 %v651
      %v694 = vunpack.c.l.b16 %v652
      %v695 = vpack.c.b16 %v680, %v679
      %v696 = vpack.c.b16 %v682, %v681
      %v697 = vpack.c.b16 %v684, %v683
      %v698 = vpack.c.b16 %v686, %v685
      %v699 = vpack.c.b16 %v688, %v687
      %v700 = vpack.c.b16 %v690, %v689
      %v701 = vpack.c.b16 %v692, %v691
      %v702 = vpack.c.b16 %v694, %v693
      %711 = vmatpush.bf16.msra.mxu0 %v702
      %712 = vmatpush.bf16.msra.mxu0 %v701
      %713 = vmatpush.bf16.msra.mxu0 %v700
      %714 = vmatpush.bf16.msra.mxu0 %v699
      %715 = vmatpush.bf16.msra.mxu0 %v698
      %716 = vmatpush.bf16.msra.mxu0 %v697
      %717 = vmatpush.bf16.msra.mxu0 %v696
      %718 = vmatpush.bf16.msra.mxu0 %v695
      %719 = vmatmul.bf16.gmra.mxu0 %v661
      %v720 = vpop.f32.mrf.mxu0
      %v721 = vadd.f32 %v655, %v720
      %v722 = vpop.f32.mrf.mxu0
      %v723 = vadd.f32 %v655, %v722
      %724 = vdwg.mxu0
      %v725 = vld [vmem:[%s623] sm:$0xff]
      %v726 = vld [vmem:[%s623 + $0x8] sm:$0xff]
      %v727 = vld [vmem:[%s623 + $0x10] sm:$0xff]
      %v728 = vld [vmem:[%s623 + $0x18] sm:$0xff]
      %v729 = vld [vmem:[%s623 + $0x20] sm:$0xff]
      %v730 = vld [vmem:[%s623 + $0x28] sm:$0xff]
      %v731 = vld [vmem:[%s623 + $0x30] sm:$0xff]
      %v732 = vld [vmem:[%s623 + $0x38] sm:$0xff]
      %vm733 = vcmp.eq.s32.totalorder %v633, 0
      %v734 = vsel %vm733, 1, 0
      %vm735 = vcmp.eq.s32.totalorder %v734, 1
      %v736 = vsel %vm735, %v725, 0.0
      %v737 = vsel %vm735, %v726, 0.0
      %v738 = vsel %vm735, %v727, 0.0
      %v739 = vsel %vm735, %v728, 0.0
      %v740 = vsel %vm735, %v729, 0.0
      %v741 = vsel %vm735, %v730, 0.0
      %v742 = vsel %vm735, %v731, 0.0
      %v743 = vsel %vm735, %v732, 0.0
      %vm744 = vcmask 64512
      %v745 = vsel %vm744, %v736, 0.0
      %746 = vadd.xlane.f32.xlu0 %v745
      %v747 = vpop.xlane.xlu0 %746
      %v748 = vsel %vm744, %v737, 0.0
      %749 = vadd.xlane.f32.xlu0 %v748
      %v750 = vpop.xlane.xlu0 %749
      %v751 = vsel %vm744, %v738, 0.0
      %752 = vadd.xlane.f32.xlu0 %v751
      %v753 = vpop.xlane.xlu0 %752
      %v754 = vsel %vm744, %v739, 0.0
      %755 = vadd.xlane.f32.xlu0 %v754
      %v756 = vpop.xlane.xlu0 %755
      %v757 = vsel %vm744, %v740, 0.0
      %758 = vadd.xlane.f32.xlu0 %v757
      %v759 = vpop.xlane.xlu0 %758
      %v760 = vsel %vm744, %v741, 0.0
      %761 = vadd.xlane.f32.xlu0 %v760
      %v762 = vpop.xlane.xlu0 %761
      %v763 = vsel %vm744, %v742, 0.0
      %764 = vadd.xlane.f32.xlu0 %v763
      %v765 = vpop.xlane.xlu0 %764
      %v766 = vsel %vm744, %v743, 0.0
      %767 = vadd.xlane.f32.xlu0 %v766
      %v768 = vpop.xlane.xlu0 %767
      %v769 = vld [vmem:[%s4] sm:$0x1]
      %v770 = vperm.slane %v769, 0
      %v771 = vmul.f32 %v747, %v770
      %v772 = vmul.f32 %v750, %v770
      %v773 = vmul.f32 %v753, %v770
      %v774 = vmul.f32 %v756, %v770
      %v775 = vmul.f32 %v759, %v770
      %v776 = vmul.f32 %v762, %v770
      %v777 = vmul.f32 %v765, %v770
      %v778 = vmul.f32 %v768, %v770
      %v779 = vadd.f32 %v771, 0.0
      %v780 = vadd.f32 %v772, 0.0
      %v781 = vadd.f32 %v773, 0.0
      %v782 = vadd.f32 %v774, 0.0
      %v783 = vadd.f32 %v775, 0.0
      %v784 = vadd.f32 %v776, 0.0
      %v785 = vadd.f32 %v777, 0.0
      %v786 = vadd.f32 %v778, 0.0
      %vm787 = vcmp.eq.s32.totalorder %v633, 1
      %v788 = vsel %vm787, 1, 0
      %vm789 = vcmp.eq.s32.totalorder %v788, 1
      %v790 = vsel %vm789, %v725, 0.0
      %v791 = vsel %vm789, %v726, 0.0
      %v792 = vsel %vm789, %v727, 0.0
      %v793 = vsel %vm789, %v728, 0.0
      %v794 = vsel %vm789, %v729, 0.0
      %v795 = vsel %vm789, %v730, 0.0
      %v796 = vsel %vm789, %v731, 0.0
      %v797 = vsel %vm789, %v732, 0.0
      %v798 = vsel %vm744, %v790, 0.0
      %799 = vadd.xlane.f32.xlu0 %v798
      %v800 = vpop.xlane.xlu0 %799
      %v801 = vsel %vm744, %v791, 0.0
      %802 = vadd.xlane.f32.xlu0 %v801
      %v803 = vpop.xlane.xlu0 %802
      %v804 = vsel %vm744, %v792, 0.0
      %805 = vadd.xlane.f32.xlu0 %v804
      %v806 = vpop.xlane.xlu0 %805
      %v807 = vsel %vm744, %v793, 0.0
      %808 = vadd.xlane.f32.xlu0 %v807
      %v809 = vpop.xlane.xlu0 %808
      %v810 = vsel %vm744, %v794, 0.0
      %811 = vadd.xlane.f32.xlu0 %v810
      %v812 = vpop.xlane.xlu0 %811
      %v813 = vsel %vm744, %v795, 0.0
      %814 = vadd.xlane.f32.xlu0 %v813
      %v815 = vpop.xlane.xlu0 %814
      %v816 = vsel %vm744, %v796, 0.0
      %817 = vadd.xlane.f32.xlu0 %v816
      %v818 = vpop.xlane.xlu0 %817
      %v819 = vsel %vm744, %v797, 0.0
      %820 = vadd.xlane.f32.xlu0 %v819
      %v821 = vpop.xlane.xlu0 %820
      %v822 = vld [vmem:[%s4 + $0x1] sm:$0x1]
      %v823 = vperm.slane %v822, 0
      %v824 = vmul.f32 %v800, %v823
      %v825 = vmul.f32 %v803, %v823
      %v826 = vmul.f32 %v806, %v823
      %v827 = vmul.f32 %v809, %v823
      %v828 = vmul.f32 %v812, %v823
      %v829 = vmul.f32 %v815, %v823
      %v830 = vmul.f32 %v818, %v823
      %v831 = vmul.f32 %v821, %v823
      %v832 = vadd.f32 %v779, %v824
      %v833 = vadd.f32 %v780, %v825
      %v834 = vadd.f32 %v781, %v826
      %v835 = vadd.f32 %v782, %v827
      %v836 = vadd.f32 %v783, %v828
      %v837 = vadd.f32 %v784, %v829
      %v838 = vadd.f32 %v785, %v830
      %v839 = vadd.f32 %v786, %v831
      %vm840 = vcmp.eq.s32.totalorder %v633, 2
      %v841 = vsel %vm840, 1, 0
      %vm842 = vcmp.eq.s32.totalorder %v841, 1
      %v843 = vsel %vm842, %v725, 0.0
      %v844 = vsel %vm842, %v726, 0.0
      %v845 = vsel %vm842, %v727, 0.0
      %v846 = vsel %vm842, %v728, 0.0
      %v847 = vsel %vm842, %v729, 0.0
      %v848 = vsel %vm842, %v730, 0.0
      %v849 = vsel %vm842, %v731, 0.0
      %v850 = vsel %vm842, %v732, 0.0
      %v851 = vsel %vm744, %v843, 0.0
      %852 = vadd.xlane.f32.xlu0 %v851
      %v853 = vpop.xlane.xlu0 %852
      %v854 = vsel %vm744, %v844, 0.0
      %855 = vadd.xlane.f32.xlu0 %v854
      %v856 = vpop.xlane.xlu0 %855
      %v857 = vsel %vm744, %v845, 0.0
      %858 = vadd.xlane.f32.xlu0 %v857
      %v859 = vpop.xlane.xlu0 %858
      %v860 = vsel %vm744, %v846, 0.0
      %861 = vadd.xlane.f32.xlu0 %v860
      %v862 = vpop.xlane.xlu0 %861
      %v863 = vsel %vm744, %v847, 0.0
      %864 = vadd.xlane.f32.xlu0 %v863
      %v865 = vpop.xlane.xlu0 %864
      %v866 = vsel %vm744, %v848, 0.0
      %867 = vadd.xlane.f32.xlu0 %v866
      %v868 = vpop.xlane.xlu0 %867
      %v869 = vsel %vm744, %v849, 0.0
      %870 = vadd.xlane.f32.xlu0 %v869
      %v871 = vpop.xlane.xlu0 %870
      %v872 = vsel %vm744, %v850, 0.0
      %873 = vadd.xlane.f32.xlu0 %v872
      %v874 = vpop.xlane.xlu0 %873
      %v875 = vld [vmem:[%s4 + $0x2] sm:$0x1]
      %v876 = vperm.slane %v875, 0
      %v877 = vmul.f32 %v853, %v876
      %v878 = vmul.f32 %v856, %v876
      %v879 = vmul.f32 %v859, %v876
      %v880 = vmul.f32 %v862, %v876
      %v881 = vmul.f32 %v865, %v876
      %v882 = vmul.f32 %v868, %v876
      %v883 = vmul.f32 %v871, %v876
      %v884 = vmul.f32 %v874, %v876
      %v885 = vadd.f32 %v832, %v877
      %v886 = vadd.f32 %v833, %v878
      %v887 = vadd.f32 %v834, %v879
      %v888 = vadd.f32 %v835, %v880
      %v889 = vadd.f32 %v836, %v881
      %v890 = vadd.f32 %v837, %v882
      %v891 = vadd.f32 %v838, %v883
      %v892 = vadd.f32 %v839, %v884
      %v893 = vld [vmem:[%s5] sm:$0x1]
      %v895 = vperm.slane %v893, 0
      %v897 = vadd.f32 %v885, %v895
      %v898 = vadd.f32 %v886, %v895
      %v899 = vadd.f32 %v887, %v895
      %v900 = vadd.f32 %v888, %v895
      %v901 = vadd.f32 %v889, %v895
      %v902 = vadd.f32 %v890, %v895
      %v903 = vadd.f32 %v891, %v895
      %v904 = vadd.f32 %v892, %v895
      %v905 = vmul.f32 %v897, 0.5
      %v906 = vmul.f32 %v898, 0.5
      %v907 = vmul.f32 %v899, 0.5
      %v908 = vmul.f32 %v900, 0.5
      %v909 = vmul.f32 %v901, 0.5
      %v910 = vmul.f32 %v902, 0.5
      %v911 = vmul.f32 %v903, 0.5
      %v912 = vmul.f32 %v904, 0.5
      %v913 = vmul.f32 %v897, 0.044715
      %v914 = vmul.f32 %v898, 0.044715
      %v915 = vmul.f32 %v899, 0.044715
      %v916 = vmul.f32 %v900, 0.044715
      %v917 = vmul.f32 %v901, 0.044715
      %v918 = vmul.f32 %v902, 0.044715
      %v919 = vmul.f32 %v903, 0.044715
      %v920 = vmul.f32 %v904, 0.044715
      %v921 = vmul.f32 %v913, %v897
      %v922 = vmul.f32 %v914, %v898
      %v923 = vmul.f32 %v915, %v899
      %v924 = vmul.f32 %v916, %v900
      %v925 = vmul.f32 %v917, %v901
      %v926 = vmul.f32 %v918, %v902
      %v927 = vmul.f32 %v919, %v903
      %v928 = vmul.f32 %v920, %v904
      %v929 = vmul.f32 %v921, %v897
      %v930 = vmul.f32 %v922, %v898
      %v931 = vmul.f32 %v923, %v899
      %v932 = vmul.f32 %v924, %v900
      %v933 = vmul.f32 %v925, %v901
      %v934 = vmul.f32 %v926, %v902
      %v935 = vmul.f32 %v927, %v903
      %v936 = vmul.f32 %v928, %v904
      %v937 = vadd.f32 %v897, %v929
      %v938 = vadd.f32 %v898, %v930
      %v939 = vadd.f32 %v899, %v931
      %v940 = vadd.f32 %v900, %v932
      %v941 = vadd.f32 %v901, %v933
      %v942 = vadd.f32 %v902, %v934
      %v943 = vadd.f32 %v903, %v935
      %v944 = vadd.f32 %v904, %v936
      %v945 = vmul.f32 %v937, 0.7978846
      %v946 = vmul.f32 %v938, 0.7978846
      %v947 = vmul.f32 %v939, 0.7978846
      %v948 = vmul.f32 %v940, 0.7978846
      %v949 = vmul.f32 %v941, 0.7978846
      %v950 = vmul.f32 %v942, 0.7978846
      %v951 = vmul.f32 %v943, 0.7978846
      %v952 = vmul.f32 %v944, 0.7978846
      %v953 = vtanh.pop %v945
      %v954 = vtanh.pop %v946
      %v955 = vtanh.pop %v947
      %v956 = vtanh.pop %v948
      %v957 = vtanh.pop %v949
      %v958 = vtanh.pop %v950
      %v959 = vtanh.pop %v951
      %v960 = vtanh.pop %v952
      %v961 = vadd.f32 %v953, 1.0
      %v962 = vadd.f32 %v954, 1.0
      %v963 = vadd.f32 %v955, 1.0
      %v964 = vadd.f32 %v956, 1.0
      %v965 = vadd.f32 %v957, 1.0
      %v966 = vadd.f32 %v958, 1.0
      %v967 = vadd.f32 %v959, 1.0
      %v968 = vadd.f32 %v960, 1.0
      %v969 = vmul.f32 %v905, %v961
      %v970 = vmul.f32 %v906, %v962
      %v971 = vmul.f32 %v907, %v963
      %v972 = vmul.f32 %v908, %v964
      %v973 = vmul.f32 %v909, %v965
      %v974 = vmul.f32 %v910, %v966
      %v975 = vmul.f32 %v911, %v967
      %v976 = vmul.f32 %v912, %v968
      %v977 = vld [vmem:[%s6] sm:$0xf]
      %v978 = vld [vmem:[%s6 + $0x4] sm:$0xf]
      %v979 = vld [vmem:[%s6 + $0x8] sm:$0xf]
      %v980 = vld [vmem:[%s6 + $0xc] sm:$0xf]
      %v981 = vld [vmem:[%s6 + $0x10] sm:$0xf]
      %v982 = vld [vmem:[%s6 + $0x14] sm:$0xf]
      %v983 = vld [vmem:[%s6 + $0x18] sm:$0xf]
      %v984 = vld [vmem:[%s6 + $0x1c] sm:$0xf]
      %v985 = vld [vmem:[%s6 + $0x20] sm:$0xf]
      %v986 = vld [vmem:[%s6 + $0x24] sm:$0xf]
      %v987 = vld [vmem:[%s6 + $0x28] sm:$0xf]
      %v988 = vld [vmem:[%s6 + $0x2c] sm:$0xf]
      %v989 = vld [vmem:[%s6 + $0x30] sm:$0xf]
      %v990 = vld [vmem:[%s6 + $0x34] sm:$0xf]
      %v991 = vld [vmem:[%s6 + $0x38] sm:$0xf]
      %v992 = vld [vmem:[%s6 + $0x3c] sm:$0xf]
      %v993 = vpack.c.bf16 %v970, %v969
      %v994 = vpack.c.bf16 %v972, %v971
      %v995 = vpack.c.bf16 %v974, %v973
      %v996 = vpack.c.bf16 %v976, %v975
      %v997 = vld [vmem:[%s7] sm:$0x1]
      %v999 = vperm.slane %v997, 0
      %v1017 = vunpack.c.l.b16 %v977
      %v1018 = vunpack.c.l.b16 %v978
      %v1019 = vunpack.c.l.b16 %v979
      %v1020 = vunpack.c.l.b16 %v980
      %v1021 = vunpack.c.l.b16 %v981
      %v1022 = vunpack.c.l.b16 %v982
      %v1023 = vunpack.c.l.b16 %v983
      %v1024 = vunpack.c.l.b16 %v984
      %v1025 = vunpack.c.l.b16 %v985
      %v1026 = vunpack.c.l.b16 %v986
      %v1027 = vunpack.c.l.b16 %v987
      %v1028 = vunpack.c.l.b16 %v988
      %v1029 = vunpack.c.l.b16 %v989
      %v1030 = vunpack.c.l.b16 %v990
      %v1031 = vunpack.c.l.b16 %v991
      %v1032 = vunpack.c.l.b16 %v992
      %v1033 = vpack.c.b16 %v1018, %v1017
      %v1034 = vpack.c.b16 %v1020, %v1019
      %v1035 = vpack.c.b16 %v1022, %v1021
      %v1036 = vpack.c.b16 %v1024, %v1023
      %v1037 = vpack.c.b16 %v1026, %v1025
      %v1038 = vpack.c.b16 %v1028, %v1027
      %v1039 = vpack.c.b16 %v1030, %v1029
      %v1040 = vpack.c.b16 %v1032, %v1031
      %1049 = vmatpush.bf16.msra.mxu0 %v1040
      %1050 = vmatpush.bf16.msra.mxu0 %v1039
      %1051 = vmatpush.bf16.msra.mxu0 %v1038
      %1052 = vmatpush.bf16.msra.mxu0 %v1037
      %1053 = vmatpush.bf16.msra.mxu0 %v1036
      %1054 = vmatpush.bf16.msra.mxu0 %v1035
      %1055 = vmatpush.bf16.msra.mxu0 %v1034
      %1056 = vmatpush.bf16.msra.mxu0 %v1033
      %1057 = vmatmul.bf16.gmra.mxu0 %v993
      %v1058 = vpop.f32.mrf.mxu0
      %v1059 = vadd.f32 %v999, %v1058
      %v1060 = vpop.f32.mrf.mxu0
      %v1061 = vadd.f32 %v999, %v1060
      %1062 = vmatmul.bf16.gmra.mxu0 %v994
      %v1063 = vpop.f32.mrf.mxu0
      %v1064 = vadd.f32 %v999, %v1063
      %v1065 = vpop.f32.mrf.mxu0
      %v1066 = vadd.f32 %v999, %v1065
      %1067 = vmatmul.bf16.gmra.mxu0 %v995
      %v1068 = vpop.f32.mrf.mxu0
      %v1069 = vadd.f32 %v999, %v1068
      %v1070 = vpop.f32.mrf.mxu0
      %v1071 = vadd.f32 %v999, %v1070
      %1072 = vmatmul.bf16.gmra.mxu0 %v996
      %v1073 = vpop.f32.mrf.mxu0
      %v1074 = vadd.f32 %v999, %v1073
      %v1075 = vpop.f32.mrf.mxu0
      %v1076 = vadd.f32 %v999, %v1075
      %1077 = vdwg.mxu0
      %1078 = vadd.xlane.f32.xlu0 %v721
      %v1079 = vpop.xlane.xlu0 %1078
      %1080 = vadd.xlane.f32.xlu0 %v723
      %v1081 = vpop.xlane.xlu0 %1080
      %1082 = vadd.xlane.f32.xlu0 %v1059
      %v1083 = vpop.xlane.xlu0 %1082
      %1084 = vadd.xlane.f32.xlu0 %v1061
      %v1085 = vpop.xlane.xlu0 %1084
      %1086 = vadd.xlane.f32.xlu0 %v1064
      %v1087 = vpop.xlane.xlu0 %1086
      %1088 = vadd.xlane.f32.xlu0 %v1066
      %v1089 = vpop.xlane.xlu0 %1088
      %1090 = vadd.xlane.f32.xlu0 %v1069
      %v1091 = vpop.xlane.xlu0 %1090
      %1092 = vadd.xlane.f32.xlu0 %v1071
      %v1093 = vpop.xlane.xlu0 %1092
      %1094 = vadd.xlane.f32.xlu0 %v1074
      %v1095 = vpop.xlane.xlu0 %1094
      %1096 = vadd.xlane.f32.xlu0 %v1076
      %v1097 = vpop.xlane.xlu0 %1096
      %v1098 = vmul.f32 %v1079, 0.03125
      %v1099 = vmul.f32 %v1081, 0.03125
      %v1100 = vmul.f32 %v1083, 0.03125
      %v1101 = vmul.f32 %v1085, 0.03125
      %v1102 = vmul.f32 %v1087, 0.03125
      %v1103 = vmul.f32 %v1089, 0.03125
      %v1104 = vmul.f32 %v1091, 0.03125
      %v1105 = vmul.f32 %v1093, 0.03125
      %v1106 = vmul.f32 %v1095, 0.03125
      %v1107 = vmul.f32 %v1097, 0.03125
      %v1108 = vsub.f32 %v721, %v1098
      %v1109 = vsub.f32 %v723, %v1099
      %v1110 = vsub.f32 %v1059, %v1100
      %v1111 = vsub.f32 %v1061, %v1101
      %v1112 = vsub.f32 %v1064, %v1102
      %v1113 = vsub.f32 %v1066, %v1103
      %v1114 = vsub.f32 %v1069, %v1104
      %v1115 = vsub.f32 %v1071, %v1105
      %v1116 = vsub.f32 %v1074, %v1106
      %v1117 = vsub.f32 %v1076, %v1107
      %v1118 = vsel %vm634, 1, 0
      %vm1119 = vcmp.eq.s32.totalorder %v1118, 1
      %v1120 = vsel %vm1119, %v1108, 0.0
      %v1121 = vsel %vm1119, %v1109, 0.0
      %v1122 = vsel %vm1119, %v1110, 0.0
      %v1123 = vsel %vm1119, %v1111, 0.0
      %v1124 = vsel %vm1119, %v1112, 0.0
      %v1125 = vsel %vm1119, %v1113, 0.0
      %v1126 = vsel %vm1119, %v1114, 0.0
      %v1127 = vsel %vm1119, %v1115, 0.0
      %v1128 = vsel %vm1119, %v1116, 0.0
      %v1129 = vsel %vm1119, %v1117, 0.0
      %v1130 = vmul.f32 %v1120, %v1120
      %v1131 = vmul.f32 %v1121, %v1121
      %v1132 = vmul.f32 %v1122, %v1122
      %v1133 = vmul.f32 %v1123, %v1123
      %v1134 = vmul.f32 %v1124, %v1124
      %v1135 = vmul.f32 %v1125, %v1125
      %v1136 = vmul.f32 %v1126, %v1126
      %v1137 = vmul.f32 %v1127, %v1127
      %v1138 = vmul.f32 %v1128, %v1128
      %v1139 = vmul.f32 %v1129, %v1129
      %1140 = vadd.xlane.f32.xlu0 %v1130
      %v1141 = vpop.xlane.xlu0 %1140
      %1142 = vadd.xlane.f32.xlu0 %v1131
      %v1143 = vpop.xlane.xlu0 %1142
      %1144 = vadd.xlane.f32.xlu0 %v1132
      %v1145 = vpop.xlane.xlu0 %1144
      %1146 = vadd.xlane.f32.xlu0 %v1133
      %v1147 = vpop.xlane.xlu0 %1146
      %1148 = vadd.xlane.f32.xlu0 %v1134
      %v1149 = vpop.xlane.xlu0 %1148
      %1150 = vadd.xlane.f32.xlu0 %v1135
      %v1151 = vpop.xlane.xlu0 %1150
      %1152 = vadd.xlane.f32.xlu0 %v1136
      %v1153 = vpop.xlane.xlu0 %1152
      %1154 = vadd.xlane.f32.xlu0 %v1137
      %v1155 = vpop.xlane.xlu0 %1154
      %1156 = vadd.xlane.f32.xlu0 %v1138
      %v1157 = vpop.xlane.xlu0 %1156
      %1158 = vadd.xlane.f32.xlu0 %v1139
      %v1159 = vpop.xlane.xlu0 %1158
      %v1160 = vmul.f32 %v1141, 0.03125
      %v1161 = vmul.f32 %v1143, 0.03125
      %v1162 = vmul.f32 %v1145, 0.03125
      %v1163 = vmul.f32 %v1147, 0.03125
      %v1164 = vmul.f32 %v1149, 0.03125
      %v1165 = vmul.f32 %v1151, 0.03125
      %v1166 = vmul.f32 %v1153, 0.03125
      %v1167 = vmul.f32 %v1155, 0.03125
      %v1168 = vmul.f32 %v1157, 0.03125
      %v1169 = vmul.f32 %v1159, 0.03125
      %v1170 = vadd.f32 %v1160, 1e-05
      %v1171 = vadd.f32 %v1161, 1e-05
      %v1172 = vadd.f32 %v1162, 1e-05
      %v1173 = vadd.f32 %v1163, 1e-05
      %v1174 = vadd.f32 %v1164, 1e-05
      %v1175 = vadd.f32 %v1165, 1e-05
      %v1176 = vadd.f32 %v1166, 1e-05
      %v1177 = vadd.f32 %v1167, 1e-05
      %v1178 = vadd.f32 %v1168, 1e-05
      %v1179 = vadd.f32 %v1169, 1e-05
      %v1180 = vrsqrt.pop %v1170
      %v1181 = vmul.f32 %v1180, %v1170
      %v1182 = vmul.f32 %v1181, %v1180
      %v1183 = vmul.f32 0.5, %v1182
      %v1184 = vsub.f32 1.5, %v1183
      %v1185 = vmul.f32 %v1180, %v1184
      %vm1186 = vweird.f32 %v1170
      %vm1187 = vweird.f32 %v1180
      %vm1188 = vmor %vm1186, %vm1187
      %v1189 = vsel %vm1188, %v1180, %v1185
      %v1190 = vrsqrt.pop %v1171
      %v1191 = vmul.f32 %v1190, %v1171
      %v1192 = vmul.f32 %v1191, %v1190
      %v1193 = vmul.f32 0.5, %v1192
      %v1194 = vsub.f32 1.5, %v1193
      %v1195 = vmul.f32 %v1190, %v1194
      %vm1196 = vweird.f32 %v1171
      %vm1197 = vweird.f32 %v1190
      %vm1198 = vmor %vm1196, %vm1197
      %v1199 = vsel %vm1198, %v1190, %v1195
      %v1200 = vrsqrt.pop %v1172
      %v1201 = vmul.f32 %v1200, %v1172
      %v1202 = vmul.f32 %v1201, %v1200
      %v1203 = vmul.f32 0.5, %v1202
      %v1204 = vsub.f32 1.5, %v1203
      %v1205 = vmul.f32 %v1200, %v1204
      %vm1206 = vweird.f32 %v1172
      %vm1207 = vweird.f32 %v1200
      %vm1208 = vmor %vm1206, %vm1207
      %v1209 = vsel %vm1208, %v1200, %v1205
      %v1210 = vrsqrt.pop %v1173
      %v1211 = vmul.f32 %v1210, %v1173
      %v1212 = vmul.f32 %v1211, %v1210
      %v1213 = vmul.f32 0.5, %v1212
      %v1214 = vsub.f32 1.5, %v1213
      %v1215 = vmul.f32 %v1210, %v1214
      %vm1216 = vweird.f32 %v1173
      %vm1217 = vweird.f32 %v1210
      %vm1218 = vmor %vm1216, %vm1217
      %v1219 = vsel %vm1218, %v1210, %v1215
      %v1220 = vrsqrt.pop %v1174
      %v1221 = vmul.f32 %v1220, %v1174
      %v1222 = vmul.f32 %v1221, %v1220
      %v1223 = vmul.f32 0.5, %v1222
      %v1224 = vsub.f32 1.5, %v1223
      %v1225 = vmul.f32 %v1220, %v1224
      %vm1226 = vweird.f32 %v1174
      %vm1227 = vweird.f32 %v1220
      %vm1228 = vmor %vm1226, %vm1227
      %v1229 = vsel %vm1228, %v1220, %v1225
      %v1230 = vrsqrt.pop %v1175
      %v1231 = vmul.f32 %v1230, %v1175
      %v1232 = vmul.f32 %v1231, %v1230
      %v1233 = vmul.f32 0.5, %v1232
      %v1234 = vsub.f32 1.5, %v1233
      %v1235 = vmul.f32 %v1230, %v1234
      %vm1236 = vweird.f32 %v1175
      %vm1237 = vweird.f32 %v1230
      %vm1238 = vmor %vm1236, %vm1237
      %v1239 = vsel %vm1238, %v1230, %v1235
      %v1240 = vrsqrt.pop %v1176
      %v1241 = vmul.f32 %v1240, %v1176
      %v1242 = vmul.f32 %v1241, %v1240
      %v1243 = vmul.f32 0.5, %v1242
      %v1244 = vsub.f32 1.5, %v1243
      %v1245 = vmul.f32 %v1240, %v1244
      %vm1246 = vweird.f32 %v1176
      %vm1247 = vweird.f32 %v1240
      %vm1248 = vmor %vm1246, %vm1247
      %v1249 = vsel %vm1248, %v1240, %v1245
      %v1250 = vrsqrt.pop %v1177
      %v1251 = vmul.f32 %v1250, %v1177
      %v1252 = vmul.f32 %v1251, %v1250
      %v1253 = vmul.f32 0.5, %v1252
      %v1254 = vsub.f32 1.5, %v1253
      %v1255 = vmul.f32 %v1250, %v1254
      %vm1256 = vweird.f32 %v1177
      %vm1257 = vweird.f32 %v1250
      %vm1258 = vmor %vm1256, %vm1257
      %v1259 = vsel %vm1258, %v1250, %v1255
      %v1260 = vrsqrt.pop %v1178
      %v1261 = vmul.f32 %v1260, %v1178
      %v1262 = vmul.f32 %v1261, %v1260
      %v1263 = vmul.f32 0.5, %v1262
      %v1264 = vsub.f32 1.5, %v1263
      %v1265 = vmul.f32 %v1260, %v1264
      %vm1266 = vweird.f32 %v1178
      %vm1267 = vweird.f32 %v1260
      %vm1268 = vmor %vm1266, %vm1267
      %v1269 = vsel %vm1268, %v1260, %v1265
      %v1270 = vrsqrt.pop %v1179
      %v1271 = vmul.f32 %v1270, %v1179
      %v1272 = vmul.f32 %v1271, %v1270
      %v1273 = vmul.f32 0.5, %v1272
      %v1274 = vsub.f32 1.5, %v1273
      %v1275 = vmul.f32 %v1270, %v1274
      %vm1276 = vweird.f32 %v1179
      %vm1277 = vweird.f32 %v1270
      %vm1278 = vmor %vm1276, %vm1277
      %v1279 = vsel %vm1278, %v1270, %v1275
      %v1280 = vmul.f32 %v1120, %v1189
      %v1281 = vmul.f32 %v1121, %v1199
      %v1282 = vmul.f32 %v1122, %v1209
      %v1283 = vmul.f32 %v1123, %v1219
      %v1284 = vmul.f32 %v1124, %v1229
      %v1285 = vmul.f32 %v1125, %v1239
      %v1286 = vmul.f32 %v1126, %v1249
      %v1287 = vmul.f32 %v1127, %v1259
      %v1288 = vmul.f32 %v1128, %v1269
      %v1289 = vmul.f32 %v1129, %v1279
      %v1290 = vld [vmem:[%s8] sm:$0x1]
      %v1292 = vperm.slane %v1290, 0
      %v1294 = vmul.f32 %v1280, %v1292
      %v1295 = vmul.f32 %v1281, %v1292
      %v1296 = vmul.f32 %v1282, %v1292
      %v1297 = vmul.f32 %v1283, %v1292
      %v1298 = vmul.f32 %v1284, %v1292
      %v1299 = vmul.f32 %v1285, %v1292
      %v1300 = vmul.f32 %v1286, %v1292
      %v1301 = vmul.f32 %v1287, %v1292
      %v1302 = vmul.f32 %v1288, %v1292
      %v1303 = vmul.f32 %v1289, %v1292
      %v1304 = vld [vmem:[%s9] sm:$0x1]
      %v1306 = vperm.slane %v1304, 0
      %v1308 = vadd.f32 %v1294, %v1306
      %v1309 = vadd.f32 %v1295, %v1306
      %v1310 = vadd.f32 %v1296, %v1306
      %v1311 = vadd.f32 %v1297, %v1306
      %v1312 = vadd.f32 %v1298, %v1306
      %v1313 = vadd.f32 %v1299, %v1306
      %v1314 = vadd.f32 %v1300, %v1306
      %v1315 = vadd.f32 %v1301, %v1306
      %v1316 = vadd.f32 %v1302, %v1306
      %v1317 = vadd.f32 %v1303, %v1306
      %v1318 = vld [vmem:[%s10] sm:$0xf]
      %v1319 = vld [vmem:[%s10 + $0x4] sm:$0xf]
      %v1320 = vld [vmem:[%s10 + $0x8] sm:$0xf]
      %v1321 = vld [vmem:[%s10 + $0xc] sm:$0xf]
      %v1322 = vld [vmem:[%s10 + $0x10] sm:$0xf]
      %v1323 = vld [vmem:[%s10 + $0x14] sm:$0xf]
      %v1324 = vld [vmem:[%s10 + $0x18] sm:$0xf]
      %v1325 = vld [vmem:[%s10 + $0x1c] sm:$0xf]
      %v1326 = vld [vmem:[%s10 + $0x20] sm:$0xf]
      %v1327 = vld [vmem:[%s10 + $0x24] sm:$0xf]
      %v1328 = vld [vmem:[%s10 + $0x28] sm:$0xf]
      %v1329 = vld [vmem:[%s10 + $0x2c] sm:$0xf]
      %v1330 = vld [vmem:[%s10 + $0x30] sm:$0xf]
      %v1331 = vld [vmem:[%s10 + $0x34] sm:$0xf]
      %v1332 = vld [vmem:[%s10 + $0x38] sm:$0xf]
      %v1333 = vld [vmem:[%s10 + $0x3c] sm:$0xf]
      %v1334 = vpack.c.bf16 %v1309, %v1308
      %v1335 = vpack.c.bf16 %v1311, %v1310
      %v1336 = vpack.c.bf16 %v1313, %v1312
      %v1337 = vpack.c.bf16 %v1315, %v1314
      %v1338 = vpack.c.bf16 %v1317, %v1316
      %v1339 = vld [vmem:[%s11] sm:$0x1]
      %v1341 = vperm.slane %v1339, 0
      %v1359 = vunpack.c.l.b16 %v1318
      %v1360 = vunpack.c.l.b16 %v1319
      %v1361 = vunpack.c.l.b16 %v1320
      %v1362 = vunpack.c.l.b16 %v1321
      %v1363 = vunpack.c.l.b16 %v1322
      %v1364 = vunpack.c.l.b16 %v1323
      %v1365 = vunpack.c.l.b16 %v1324
      %v1366 = vunpack.c.l.b16 %v1325
      %v1367 = vunpack.c.l.b16 %v1326
      %v1368 = vunpack.c.l.b16 %v1327
      %v1369 = vunpack.c.l.b16 %v1328
      %v1370 = vunpack.c.l.b16 %v1329
      %v1371 = vunpack.c.l.b16 %v1330
      %v1372 = vunpack.c.l.b16 %v1331
      %v1373 = vunpack.c.l.b16 %v1332
      %v1374 = vunpack.c.l.b16 %v1333
      %v1375 = vpack.c.b16 %v1360, %v1359
      %v1376 = vpack.c.b16 %v1362, %v1361
      %v1377 = vpack.c.b16 %v1364, %v1363
      %v1378 = vpack.c.b16 %v1366, %v1365
      %v1379 = vpack.c.b16 %v1368, %v1367
      %v1380 = vpack.c.b16 %v1370, %v1369
      %v1381 = vpack.c.b16 %v1372, %v1371
      %v1382 = vpack.c.b16 %v1374, %v1373
      %1391 = vmatpush.bf16.msra.mxu0 %v1382
      %1392 = vmatpush.bf16.msra.mxu0 %v1381
      %1393 = vmatpush.bf16.msra.mxu0 %v1380
      %1394 = vmatpush.bf16.msra.mxu0 %v1379
      %1395 = vmatpush.bf16.msra.mxu0 %v1378
      %1396 = vmatpush.bf16.msra.mxu0 %v1377
      %1397 = vmatpush.bf16.msra.mxu0 %v1376
      %1398 = vmatpush.bf16.msra.mxu0 %v1375
      %1399 = vmatmul.bf16.gmra.mxu0 %v1334
      %v1400 = vpop.f32.mrf.mxu0
      %v1401 = vadd.f32 %v1341, %v1400
      %v1402 = vpop.f32.mrf.mxu0
      %v1403 = vadd.f32 %v1341, %v1402
      %1404 = vmatmul.bf16.gmra.mxu0 %v1335
      %v1405 = vpop.f32.mrf.mxu0
      %v1406 = vadd.f32 %v1341, %v1405
      %v1407 = vpop.f32.mrf.mxu0
      %v1408 = vadd.f32 %v1341, %v1407
      %1409 = vmatmul.bf16.gmra.mxu0 %v1336
      %v1410 = vpop.f32.mrf.mxu0
      %v1411 = vadd.f32 %v1341, %v1410
      %v1412 = vpop.f32.mrf.mxu0
      %v1413 = vadd.f32 %v1341, %v1412
      %1414 = vmatmul.bf16.gmra.mxu0 %v1337
      %v1415 = vpop.f32.mrf.mxu0
      %v1416 = vadd.f32 %v1341, %v1415
      %v1417 = vpop.f32.mrf.mxu0
      %v1418 = vadd.f32 %v1341, %v1417
      %1419 = vmatmul.bf16.gmra.mxu0 %v1338
      %v1420 = vpop.f32.mrf.mxu0
      %v1421 = vadd.f32 %v1341, %v1420
      %v1422 = vpop.f32.mrf.mxu0
      %v1423 = vadd.f32 %v1341, %v1422
      %1424 = vdwg.mxu0
      %v1425 = vmul.f32 %v1401, 0.5
      %v1426 = vmul.f32 %v1403, 0.5
      %v1427 = vmul.f32 %v1406, 0.5
      %v1428 = vmul.f32 %v1408, 0.5
      %v1429 = vmul.f32 %v1411, 0.5
      %v1430 = vmul.f32 %v1413, 0.5
      %v1431 = vmul.f32 %v1416, 0.5
      %v1432 = vmul.f32 %v1418, 0.5
      %v1433 = vmul.f32 %v1421, 0.5
      %v1434 = vmul.f32 %v1423, 0.5
      %v1435 = vmul.f32 %v1401, 0.044715
      %v1436 = vmul.f32 %v1403, 0.044715
      %v1437 = vmul.f32 %v1406, 0.044715
      %v1438 = vmul.f32 %v1408, 0.044715
      %v1439 = vmul.f32 %v1411, 0.044715
      %v1440 = vmul.f32 %v1413, 0.044715
      %v1441 = vmul.f32 %v1416, 0.044715
      %v1442 = vmul.f32 %v1418, 0.044715
      %v1443 = vmul.f32 %v1421, 0.044715
      %v1444 = vmul.f32 %v1423, 0.044715
      %v1445 = vmul.f32 %v1435, %v1401
      %v1446 = vmul.f32 %v1436, %v1403
      %v1447 = vmul.f32 %v1437, %v1406
      %v1448 = vmul.f32 %v1438, %v1408
      %v1449 = vmul.f32 %v1439, %v1411
      %v1450 = vmul.f32 %v1440, %v1413
      %v1451 = vmul.f32 %v1441, %v1416
      %v1452 = vmul.f32 %v1442, %v1418
      %v1453 = vmul.f32 %v1443, %v1421
      %v1454 = vmul.f32 %v1444, %v1423
      %v1455 = vmul.f32 %v1445, %v1401
      %v1456 = vmul.f32 %v1446, %v1403
      %v1457 = vmul.f32 %v1447, %v1406
      %v1458 = vmul.f32 %v1448, %v1408
      %v1459 = vmul.f32 %v1449, %v1411
      %v1460 = vmul.f32 %v1450, %v1413
      %v1461 = vmul.f32 %v1451, %v1416
      %v1462 = vmul.f32 %v1452, %v1418
      %v1463 = vmul.f32 %v1453, %v1421
      %v1464 = vmul.f32 %v1454, %v1423
      %v1465 = vadd.f32 %v1401, %v1455
      %v1466 = vadd.f32 %v1403, %v1456
      %v1467 = vadd.f32 %v1406, %v1457
      %v1468 = vadd.f32 %v1408, %v1458
      %v1469 = vadd.f32 %v1411, %v1459
      %v1470 = vadd.f32 %v1413, %v1460
      %v1471 = vadd.f32 %v1416, %v1461
      %v1472 = vadd.f32 %v1418, %v1462
      %v1473 = vadd.f32 %v1421, %v1463
      %v1474 = vadd.f32 %v1423, %v1464
      %v1475 = vmul.f32 %v1465, 0.7978846
      %v1476 = vmul.f32 %v1466, 0.7978846
      %v1477 = vmul.f32 %v1467, 0.7978846
      %v1478 = vmul.f32 %v1468, 0.7978846
      %v1479 = vmul.f32 %v1469, 0.7978846
      %v1480 = vmul.f32 %v1470, 0.7978846
      %v1481 = vmul.f32 %v1471, 0.7978846
      %v1482 = vmul.f32 %v1472, 0.7978846
      %v1483 = vmul.f32 %v1473, 0.7978846
      %v1484 = vmul.f32 %v1474, 0.7978846
      %v1485 = vtanh.pop %v1475
      %v1486 = vtanh.pop %v1476
      %v1487 = vtanh.pop %v1477
      %v1488 = vtanh.pop %v1478
      %v1489 = vtanh.pop %v1479
      %v1490 = vtanh.pop %v1480
      %v1491 = vtanh.pop %v1481
      %v1492 = vtanh.pop %v1482
      %v1493 = vtanh.pop %v1483
      %v1494 = vtanh.pop %v1484
      %v1495 = vadd.f32 %v1485, 1.0
      %v1496 = vadd.f32 %v1486, 1.0
      %v1497 = vadd.f32 %v1487, 1.0
      %v1498 = vadd.f32 %v1488, 1.0
      %v1499 = vadd.f32 %v1489, 1.0
      %v1500 = vadd.f32 %v1490, 1.0
      %v1501 = vadd.f32 %v1491, 1.0
      %v1502 = vadd.f32 %v1492, 1.0
      %v1503 = vadd.f32 %v1493, 1.0
      %v1504 = vadd.f32 %v1494, 1.0
      %v1505 = vmul.f32 %v1425, %v1495
      %v1506 = vmul.f32 %v1426, %v1496
      %v1507 = vmul.f32 %v1427, %v1497
      %v1508 = vmul.f32 %v1428, %v1498
      %v1509 = vmul.f32 %v1429, %v1499
      %v1510 = vmul.f32 %v1430, %v1500
      %v1511 = vmul.f32 %v1431, %v1501
      %v1512 = vmul.f32 %v1432, %v1502
      %v1513 = vmul.f32 %v1433, %v1503
      %v1514 = vmul.f32 %v1434, %v1504
      %v1515 = vld [vmem:[%s12] sm:$0xf]
      %v1516 = vld [vmem:[%s12 + $0x4] sm:$0xf]
      %v1517 = vld [vmem:[%s12 + $0x8] sm:$0xf]
      %v1518 = vld [vmem:[%s12 + $0xc] sm:$0xf]
      %v1519 = vld [vmem:[%s12 + $0x10] sm:$0xf]
      %v1520 = vld [vmem:[%s12 + $0x14] sm:$0xf]
      %v1521 = vld [vmem:[%s12 + $0x18] sm:$0xf]
      %v1522 = vld [vmem:[%s12 + $0x1c] sm:$0xf]
      %v1523 = vld [vmem:[%s12 + $0x20] sm:$0xf]
      %v1524 = vld [vmem:[%s12 + $0x24] sm:$0xf]
      %v1525 = vld [vmem:[%s12 + $0x28] sm:$0xf]
      %v1526 = vld [vmem:[%s12 + $0x2c] sm:$0xf]
      %v1527 = vld [vmem:[%s12 + $0x30] sm:$0xf]
      %v1528 = vld [vmem:[%s12 + $0x34] sm:$0xf]
      %v1529 = vld [vmem:[%s12 + $0x38] sm:$0xf]
      %v1530 = vld [vmem:[%s12 + $0x3c] sm:$0xf]
      %v1531 = vpack.c.bf16 %v1506, %v1505
      %v1532 = vpack.c.bf16 %v1508, %v1507
      %v1533 = vpack.c.bf16 %v1510, %v1509
      %v1534 = vpack.c.bf16 %v1512, %v1511
      %v1535 = vpack.c.bf16 %v1514, %v1513
      %v1536 = vld [vmem:[%s13] sm:$0x1]
      %v1538 = vperm.slane %v1536, 0
      %v1556 = vunpack.c.l.b16 %v1515
      %v1557 = vunpack.c.l.b16 %v1516
      %v1558 = vunpack.c.l.b16 %v1517
      %v1559 = vunpack.c.l.b16 %v1518
      %v1560 = vunpack.c.l.b16 %v1519
      %v1561 = vunpack.c.l.b16 %v1520
      %v1562 = vunpack.c.l.b16 %v1521
      %v1563 = vunpack.c.l.b16 %v1522
      %v1564 = vunpack.c.l.b16 %v1523
      %v1565 = vunpack.c.l.b16 %v1524
      %v1566 = vunpack.c.l.b16 %v1525
      %v1567 = vunpack.c.l.b16 %v1526
      %v1568 = vunpack.c.l.b16 %v1527
      %v1569 = vunpack.c.l.b16 %v1528
      %v1570 = vunpack.c.l.b16 %v1529
      %v1571 = vunpack.c.l.b16 %v1530
      %v1572 = vpack.c.b16 %v1557, %v1556
      %v1573 = vpack.c.b16 %v1559, %v1558
      %v1574 = vpack.c.b16 %v1561, %v1560
      %v1575 = vpack.c.b16 %v1563, %v1562
      %v1576 = vpack.c.b16 %v1565, %v1564
      %v1577 = vpack.c.b16 %v1567, %v1566
      %v1578 = vpack.c.b16 %v1569, %v1568
      %v1579 = vpack.c.b16 %v1571, %v1570
      %1588 = vmatpush.bf16.msra.mxu0 %v1579
      %1589 = vmatpush.bf16.msra.mxu0 %v1578
      %1590 = vmatpush.bf16.msra.mxu0 %v1577
      %1591 = vmatpush.bf16.msra.mxu0 %v1576
      %1592 = vmatpush.bf16.msra.mxu0 %v1575
      %1593 = vmatpush.bf16.msra.mxu0 %v1574
      %1594 = vmatpush.bf16.msra.mxu0 %v1573
      %1595 = vmatpush.bf16.msra.mxu0 %v1572
      %1596 = vmatmul.bf16.gmra.mxu0 %v1531
      %v1597 = vpop.f32.mrf.mxu0
      %v1598 = vadd.f32 %v1538, %v1597
      %v1599 = vpop.f32.mrf.mxu0
      %v1600 = vadd.f32 %v1538, %v1599
      %1601 = vmatmul.bf16.gmra.mxu0 %v1532
      %v1602 = vpop.f32.mrf.mxu0
      %v1603 = vadd.f32 %v1538, %v1602
      %v1604 = vpop.f32.mrf.mxu0
      %v1605 = vadd.f32 %v1538, %v1604
      %1606 = vmatmul.bf16.gmra.mxu0 %v1533
      %v1607 = vpop.f32.mrf.mxu0
      %v1608 = vadd.f32 %v1538, %v1607
      %v1609 = vpop.f32.mrf.mxu0
      %v1610 = vadd.f32 %v1538, %v1609
      %1611 = vmatmul.bf16.gmra.mxu0 %v1534
      %v1612 = vpop.f32.mrf.mxu0
      %v1613 = vadd.f32 %v1538, %v1612
      %v1614 = vpop.f32.mrf.mxu0
      %v1615 = vadd.f32 %v1538, %v1614
      %1616 = vmatmul.bf16.gmra.mxu0 %v1535
      %v1617 = vpop.f32.mrf.mxu0
      %v1618 = vadd.f32 %v1538, %v1617
      %v1619 = vpop.f32.mrf.mxu0
      %v1620 = vadd.f32 %v1538, %v1619
      %1621 = vdwg.mxu0
      %v1622 = vadd.f32 %v721, %v1598
      %v1623 = vadd.f32 %v723, %v1600
      %v1624 = vadd.f32 %v1059, %v1603
      %v1625 = vadd.f32 %v1061, %v1605
      %v1626 = vadd.f32 %v1064, %v1608
      %v1627 = vadd.f32 %v1066, %v1610
      %v1628 = vadd.f32 %v1069, %v1613
      %v1629 = vadd.f32 %v1071, %v1615
      %v1630 = vadd.f32 %v1074, %v1618
      %v1631 = vadd.f32 %v1076, %v1620
      %1632 = vadd.xlane.f32.xlu0 %v1622
      %v1633 = vpop.xlane.xlu0 %1632
      %1634 = vadd.xlane.f32.xlu0 %v1623
      %v1635 = vpop.xlane.xlu0 %1634
      %1636 = vadd.xlane.f32.xlu0 %v1624
      %v1637 = vpop.xlane.xlu0 %1636
      %1638 = vadd.xlane.f32.xlu0 %v1625
      %v1639 = vpop.xlane.xlu0 %1638
      %1640 = vadd.xlane.f32.xlu0 %v1626
      %v1641 = vpop.xlane.xlu0 %1640
      %1642 = vadd.xlane.f32.xlu0 %v1627
      %v1643 = vpop.xlane.xlu0 %1642
      %1644 = vadd.xlane.f32.xlu0 %v1628
      %v1645 = vpop.xlane.xlu0 %1644
      %1646 = vadd.xlane.f32.xlu0 %v1629
      %v1647 = vpop.xlane.xlu0 %1646
      %1648 = vadd.xlane.f32.xlu0 %v1630
      %v1649 = vpop.xlane.xlu0 %1648
      %1650 = vadd.xlane.f32.xlu0 %v1631
      %v1651 = vpop.xlane.xlu0 %1650
      %v1652 = vmul.f32 %v1633, 0.03125
      %v1653 = vmul.f32 %v1635, 0.03125
      %v1654 = vmul.f32 %v1637, 0.03125
      %v1655 = vmul.f32 %v1639, 0.03125
      %v1656 = vmul.f32 %v1641, 0.03125
      %v1657 = vmul.f32 %v1643, 0.03125
      %v1658 = vmul.f32 %v1645, 0.03125
      %v1659 = vmul.f32 %v1647, 0.03125
      %v1660 = vmul.f32 %v1649, 0.03125
      %v1661 = vmul.f32 %v1651, 0.03125
      %v1662 = vsub.f32 %v1622, %v1652
      %v1663 = vsub.f32 %v1623, %v1653
      %v1664 = vsub.f32 %v1624, %v1654
      %v1665 = vsub.f32 %v1625, %v1655
      %v1666 = vsub.f32 %v1626, %v1656
      %v1667 = vsub.f32 %v1627, %v1657
      %v1668 = vsub.f32 %v1628, %v1658
      %v1669 = vsub.f32 %v1629, %v1659
      %v1670 = vsub.f32 %v1630, %v1660
      %v1671 = vsub.f32 %v1631, %v1661
      %v1672 = vsel %vm1119, %v1662, 0.0
      %v1673 = vsel %vm1119, %v1663, 0.0
      %v1674 = vsel %vm1119, %v1664, 0.0
      %v1675 = vsel %vm1119, %v1665, 0.0
      %v1676 = vsel %vm1119, %v1666, 0.0
      %v1677 = vsel %vm1119, %v1667, 0.0
      %v1678 = vsel %vm1119, %v1668, 0.0
      %v1679 = vsel %vm1119, %v1669, 0.0
      %v1680 = vsel %vm1119, %v1670, 0.0
      %v1681 = vsel %vm1119, %v1671, 0.0
      %v1682 = vmul.f32 %v1672, %v1672
      %v1683 = vmul.f32 %v1673, %v1673
      %v1684 = vmul.f32 %v1674, %v1674
      %v1685 = vmul.f32 %v1675, %v1675
      %v1686 = vmul.f32 %v1676, %v1676
      %v1687 = vmul.f32 %v1677, %v1677
      %v1688 = vmul.f32 %v1678, %v1678
      %v1689 = vmul.f32 %v1679, %v1679
      %v1690 = vmul.f32 %v1680, %v1680
      %v1691 = vmul.f32 %v1681, %v1681
      %1692 = vadd.xlane.f32.xlu0 %v1682
      %v1693 = vpop.xlane.xlu0 %1692
      %1694 = vadd.xlane.f32.xlu0 %v1683
      %v1695 = vpop.xlane.xlu0 %1694
      %1696 = vadd.xlane.f32.xlu0 %v1684
      %v1697 = vpop.xlane.xlu0 %1696
      %1698 = vadd.xlane.f32.xlu0 %v1685
      %v1699 = vpop.xlane.xlu0 %1698
      %1700 = vadd.xlane.f32.xlu0 %v1686
      %v1701 = vpop.xlane.xlu0 %1700
      %1702 = vadd.xlane.f32.xlu0 %v1687
      %v1703 = vpop.xlane.xlu0 %1702
      %1704 = vadd.xlane.f32.xlu0 %v1688
      %v1705 = vpop.xlane.xlu0 %1704
      %1706 = vadd.xlane.f32.xlu0 %v1689
      %v1707 = vpop.xlane.xlu0 %1706
      %1708 = vadd.xlane.f32.xlu0 %v1690
      %v1709 = vpop.xlane.xlu0 %1708
      %1710 = vadd.xlane.f32.xlu0 %v1691
      %v1711 = vpop.xlane.xlu0 %1710
      %v1712 = vmul.f32 %v1693, 0.03125
      %v1713 = vmul.f32 %v1695, 0.03125
      %v1714 = vmul.f32 %v1697, 0.03125
      %v1715 = vmul.f32 %v1699, 0.03125
      %v1716 = vmul.f32 %v1701, 0.03125
      %v1717 = vmul.f32 %v1703, 0.03125
      %v1718 = vmul.f32 %v1705, 0.03125
      %v1719 = vmul.f32 %v1707, 0.03125
      %v1720 = vmul.f32 %v1709, 0.03125
      %v1721 = vmul.f32 %v1711, 0.03125
      %v1722 = vadd.f32 %v1712, 1e-05
      %v1723 = vadd.f32 %v1713, 1e-05
      %v1724 = vadd.f32 %v1714, 1e-05
      %v1725 = vadd.f32 %v1715, 1e-05
      %v1726 = vadd.f32 %v1716, 1e-05
      %v1727 = vadd.f32 %v1717, 1e-05
      %v1728 = vadd.f32 %v1718, 1e-05
      %v1729 = vadd.f32 %v1719, 1e-05
      %v1730 = vadd.f32 %v1720, 1e-05
      %v1731 = vadd.f32 %v1721, 1e-05
      %v1732 = vrsqrt.pop %v1722
      %v1733 = vmul.f32 %v1732, %v1722
      %v1734 = vmul.f32 %v1733, %v1732
      %v1735 = vmul.f32 0.5, %v1734
      %v1736 = vsub.f32 1.5, %v1735
      %v1737 = vmul.f32 %v1732, %v1736
      %vm1738 = vweird.f32 %v1722
      %vm1739 = vweird.f32 %v1732
      %vm1740 = vmor %vm1738, %vm1739
      %v1741 = vsel %vm1740, %v1732, %v1737
      %v1742 = vrsqrt.pop %v1723
      %v1743 = vmul.f32 %v1742, %v1723
      %v1744 = vmul.f32 %v1743, %v1742
      %v1745 = vmul.f32 0.5, %v1744
      %v1746 = vsub.f32 1.5, %v1745
      %v1747 = vmul.f32 %v1742, %v1746
      %vm1748 = vweird.f32 %v1723
      %vm1749 = vweird.f32 %v1742
      %vm1750 = vmor %vm1748, %vm1749
      %v1751 = vsel %vm1750, %v1742, %v1747
      %v1752 = vrsqrt.pop %v1724
      %v1753 = vmul.f32 %v1752, %v1724
      %v1754 = vmul.f32 %v1753, %v1752
      %v1755 = vmul.f32 0.5, %v1754
      %v1756 = vsub.f32 1.5, %v1755
      %v1757 = vmul.f32 %v1752, %v1756
      %vm1758 = vweird.f32 %v1724
      %vm1759 = vweird.f32 %v1752
      %vm1760 = vmor %vm1758, %vm1759
      %v1761 = vsel %vm1760, %v1752, %v1757
      %v1762 = vrsqrt.pop %v1725
      %v1763 = vmul.f32 %v1762, %v1725
      %v1764 = vmul.f32 %v1763, %v1762
      %v1765 = vmul.f32 0.5, %v1764
      %v1766 = vsub.f32 1.5, %v1765
      %v1767 = vmul.f32 %v1762, %v1766
      %vm1768 = vweird.f32 %v1725
      %vm1769 = vweird.f32 %v1762
      %vm1770 = vmor %vm1768, %vm1769
      %v1771 = vsel %vm1770, %v1762, %v1767
      %v1772 = vrsqrt.pop %v1726
      %v1773 = vmul.f32 %v1772, %v1726
      %v1774 = vmul.f32 %v1773, %v1772
      %v1775 = vmul.f32 0.5, %v1774
      %v1776 = vsub.f32 1.5, %v1775
      %v1777 = vmul.f32 %v1772, %v1776
      %vm1778 = vweird.f32 %v1726
      %vm1779 = vweird.f32 %v1772
      %vm1780 = vmor %vm1778, %vm1779
      %v1781 = vsel %vm1780, %v1772, %v1777
      %v1782 = vrsqrt.pop %v1727
      %v1783 = vmul.f32 %v1782, %v1727
      %v1784 = vmul.f32 %v1783, %v1782
      %v1785 = vmul.f32 0.5, %v1784
      %v1786 = vsub.f32 1.5, %v1785
      %v1787 = vmul.f32 %v1782, %v1786
      %vm1788 = vweird.f32 %v1727
      %vm1789 = vweird.f32 %v1782
      %vm1790 = vmor %vm1788, %vm1789
      %v1791 = vsel %vm1790, %v1782, %v1787
      %v1792 = vrsqrt.pop %v1728
      %v1793 = vmul.f32 %v1792, %v1728
      %v1794 = vmul.f32 %v1793, %v1792
      %v1795 = vmul.f32 0.5, %v1794
      %v1796 = vsub.f32 1.5, %v1795
      %v1797 = vmul.f32 %v1792, %v1796
      %vm1798 = vweird.f32 %v1728
      %vm1799 = vweird.f32 %v1792
      %vm1800 = vmor %vm1798, %vm1799
      %v1801 = vsel %vm1800, %v1792, %v1797
      %v1802 = vrsqrt.pop %v1729
      %v1803 = vmul.f32 %v1802, %v1729
      %v1804 = vmul.f32 %v1803, %v1802
      %v1805 = vmul.f32 0.5, %v1804
      %v1806 = vsub.f32 1.5, %v1805
      %v1807 = vmul.f32 %v1802, %v1806
      %vm1808 = vweird.f32 %v1729
      %vm1809 = vweird.f32 %v1802
      %vm1810 = vmor %vm1808, %vm1809
      %v1811 = vsel %vm1810, %v1802, %v1807
      %v1812 = vrsqrt.pop %v1730
      %v1813 = vmul.f32 %v1812, %v1730
      %v1814 = vmul.f32 %v1813, %v1812
      %v1815 = vmul.f32 0.5, %v1814
      %v1816 = vsub.f32 1.5, %v1815
      %v1817 = vmul.f32 %v1812, %v1816
      %vm1818 = vweird.f32 %v1730
      %vm1819 = vweird.f32 %v1812
      %vm1820 = vmor %vm1818, %vm1819
      %v1821 = vsel %vm1820, %v1812, %v1817
      %v1822 = vrsqrt.pop %v1731
      %v1823 = vmul.f32 %v1822, %v1731
      %v1824 = vmul.f32 %v1823, %v1822
      %v1825 = vmul.f32 0.5, %v1824
      %v1826 = vsub.f32 1.5, %v1825
      %v1827 = vmul.f32 %v1822, %v1826
      %vm1828 = vweird.f32 %v1731
      %vm1829 = vweird.f32 %v1822
      %vm1830 = vmor %vm1828, %vm1829
      %v1831 = vsel %vm1830, %v1822, %v1827
      %v1832 = vmul.f32 %v1672, %v1741
      %v1833 = vmul.f32 %v1673, %v1751
      %v1834 = vmul.f32 %v1674, %v1761
      %v1835 = vmul.f32 %v1675, %v1771
      %v1836 = vmul.f32 %v1676, %v1781
      %v1837 = vmul.f32 %v1677, %v1791
      %v1838 = vmul.f32 %v1678, %v1801
      %v1839 = vmul.f32 %v1679, %v1811
      %v1840 = vmul.f32 %v1680, %v1821
      %v1841 = vmul.f32 %v1681, %v1831
      %s1842 = scalar_lea.vmem %s8, 1
      %v1843 = vld [vmem:[%s1842] sm:$0x1]
      %v1845 = vperm.slane %v1843, 0
      %v1847 = vmul.f32 %v1832, %v1845
      %v1848 = vmul.f32 %v1833, %v1845
      %v1849 = vmul.f32 %v1834, %v1845
      %v1850 = vmul.f32 %v1835, %v1845
      %v1851 = vmul.f32 %v1836, %v1845
      %v1852 = vmul.f32 %v1837, %v1845
      %v1853 = vmul.f32 %v1838, %v1845
      %v1854 = vmul.f32 %v1839, %v1845
      %v1855 = vmul.f32 %v1840, %v1845
      %v1856 = vmul.f32 %v1841, %v1845
      %s1857 = scalar_lea.vmem %s9, 1
      %v1858 = vld [vmem:[%s1857] sm:$0x1]
      %v1860 = vperm.slane %v1858, 0
      %v1862 = vadd.f32 %v1847, %v1860
      %v1863 = vadd.f32 %v1848, %v1860
      %v1864 = vadd.f32 %v1849, %v1860
      %v1865 = vadd.f32 %v1850, %v1860
      %v1866 = vadd.f32 %v1851, %v1860
      %v1867 = vadd.f32 %v1852, %v1860
      %v1868 = vadd.f32 %v1853, %v1860
      %v1869 = vadd.f32 %v1854, %v1860
      %v1870 = vadd.f32 %v1855, %v1860
      %v1871 = vadd.f32 %v1856, %v1860
      %s1872 = scalar_lea.vmem %s10, 64
      %v1873 = vld [vmem:[%s1872] sm:$0xf]
      %v1874 = vld [vmem:[%s1872 + $0x4] sm:$0xf]
      %v1875 = vld [vmem:[%s1872 + $0x8] sm:$0xf]
      %v1876 = vld [vmem:[%s1872 + $0xc] sm:$0xf]
      %v1877 = vld [vmem:[%s1872 + $0x10] sm:$0xf]
      %v1878 = vld [vmem:[%s1872 + $0x14] sm:$0xf]
      %v1879 = vld [vmem:[%s1872 + $0x18] sm:$0xf]
      %v1880 = vld [vmem:[%s1872 + $0x1c] sm:$0xf]
      %v1881 = vld [vmem:[%s1872 + $0x20] sm:$0xf]
      %v1882 = vld [vmem:[%s1872 + $0x24] sm:$0xf]
      %v1883 = vld [vmem:[%s1872 + $0x28] sm:$0xf]
      %v1884 = vld [vmem:[%s1872 + $0x2c] sm:$0xf]
      %v1885 = vld [vmem:[%s1872 + $0x30] sm:$0xf]
      %v1886 = vld [vmem:[%s1872 + $0x34] sm:$0xf]
      %v1887 = vld [vmem:[%s1872 + $0x38] sm:$0xf]
      %v1888 = vld [vmem:[%s1872 + $0x3c] sm:$0xf]
      %v1889 = vpack.c.bf16 %v1863, %v1862
      %v1890 = vpack.c.bf16 %v1865, %v1864
      %v1891 = vpack.c.bf16 %v1867, %v1866
      %v1892 = vpack.c.bf16 %v1869, %v1868
      %v1893 = vpack.c.bf16 %v1871, %v1870
      %s1894 = scalar_lea.vmem %s11, 1
      %v1895 = vld [vmem:[%s1894] sm:$0x1]
      %v1897 = vperm.slane %v1895, 0
      %v1915 = vunpack.c.l.b16 %v1873
      %v1916 = vunpack.c.l.b16 %v1874
      %v1917 = vunpack.c.l.b16 %v1875
      %v1918 = vunpack.c.l.b16 %v1876
      %v1919 = vunpack.c.l.b16 %v1877
      %v1920 = vunpack.c.l.b16 %v1878
      %v1921 = vunpack.c.l.b16 %v1879
      %v1922 = vunpack.c.l.b16 %v1880
      %v1923 = vunpack.c.l.b16 %v1881
      %v1924 = vunpack.c.l.b16 %v1882
      %v1925 = vunpack.c.l.b16 %v1883
      %v1926 = vunpack.c.l.b16 %v1884
      %v1927 = vunpack.c.l.b16 %v1885
      %v1928 = vunpack.c.l.b16 %v1886
      %v1929 = vunpack.c.l.b16 %v1887
      %v1930 = vunpack.c.l.b16 %v1888
      %v1931 = vpack.c.b16 %v1916, %v1915
      %v1932 = vpack.c.b16 %v1918, %v1917
      %v1933 = vpack.c.b16 %v1920, %v1919
      %v1934 = vpack.c.b16 %v1922, %v1921
      %v1935 = vpack.c.b16 %v1924, %v1923
      %v1936 = vpack.c.b16 %v1926, %v1925
      %v1937 = vpack.c.b16 %v1928, %v1927
      %v1938 = vpack.c.b16 %v1930, %v1929
      %1947 = vmatpush.bf16.msra.mxu0 %v1938
      %1948 = vmatpush.bf16.msra.mxu0 %v1937
      %1949 = vmatpush.bf16.msra.mxu0 %v1936
      %1950 = vmatpush.bf16.msra.mxu0 %v1935
      %1951 = vmatpush.bf16.msra.mxu0 %v1934
      %1952 = vmatpush.bf16.msra.mxu0 %v1933
      %1953 = vmatpush.bf16.msra.mxu0 %v1932
      %1954 = vmatpush.bf16.msra.mxu0 %v1931
      %1955 = vmatmul.bf16.gmra.mxu0 %v1889
      %v1956 = vpop.f32.mrf.mxu0
      %v1957 = vadd.f32 %v1897, %v1956
      %v1958 = vpop.f32.mrf.mxu0
      %v1959 = vadd.f32 %v1897, %v1958
      %1960 = vmatmul.bf16.gmra.mxu0 %v1890
      %v1961 = vpop.f32.mrf.mxu0
      %v1962 = vadd.f32 %v1897, %v1961
      %v1963 = vpop.f32.mrf.mxu0
      %v1964 = vadd.f32 %v1897, %v1963
      %1965 = vmatmul.bf16.gmra.mxu0 %v1891
      %v1966 = vpop.f32.mrf.mxu0
      %v1967 = vadd.f32 %v1897, %v1966
      %v1968 = vpop.f32.mrf.mxu0
      %v1969 = vadd.f32 %v1897, %v1968
      %1970 = vmatmul.bf16.gmra.mxu0 %v1892
      %v1971 = vpop.f32.mrf.mxu0
      %v1972 = vadd.f32 %v1897, %v1971
      %v1973 = vpop.f32.mrf.mxu0
      %v1974 = vadd.f32 %v1897, %v1973
      %1975 = vmatmul.bf16.gmra.mxu0 %v1893
      %v1976 = vpop.f32.mrf.mxu0
      %v1977 = vadd.f32 %v1897, %v1976
      %v1978 = vpop.f32.mrf.mxu0
      %v1979 = vadd.f32 %v1897, %v1978
      %1980 = vdwg.mxu0
      %v1981 = vmul.f32 %v1957, 0.5
      %v1982 = vmul.f32 %v1959, 0.5
      %v1983 = vmul.f32 %v1962, 0.5
      %v1984 = vmul.f32 %v1964, 0.5
      %v1985 = vmul.f32 %v1967, 0.5
      %v1986 = vmul.f32 %v1969, 0.5
      %v1987 = vmul.f32 %v1972, 0.5
      %v1988 = vmul.f32 %v1974, 0.5
      %v1989 = vmul.f32 %v1977, 0.5
      %v1990 = vmul.f32 %v1979, 0.5
      %v1991 = vmul.f32 %v1957, 0.044715
      %v1992 = vmul.f32 %v1959, 0.044715
      %v1993 = vmul.f32 %v1962, 0.044715
      %v1994 = vmul.f32 %v1964, 0.044715
      %v1995 = vmul.f32 %v1967, 0.044715
      %v1996 = vmul.f32 %v1969, 0.044715
      %v1997 = vmul.f32 %v1972, 0.044715
      %v1998 = vmul.f32 %v1974, 0.044715
      %v1999 = vmul.f32 %v1977, 0.044715
      %v2000 = vmul.f32 %v1979, 0.044715
      %v2001 = vmul.f32 %v1991, %v1957
      %v2002 = vmul.f32 %v1992, %v1959
      %v2003 = vmul.f32 %v1993, %v1962
      %v2004 = vmul.f32 %v1994, %v1964
      %v2005 = vmul.f32 %v1995, %v1967
      %v2006 = vmul.f32 %v1996, %v1969
      %v2007 = vmul.f32 %v1997, %v1972
      %v2008 = vmul.f32 %v1998, %v1974
      %v2009 = vmul.f32 %v1999, %v1977
      %v2010 = vmul.f32 %v2000, %v1979
      %v2011 = vmul.f32 %v2001, %v1957
      %v2012 = vmul.f32 %v2002, %v1959
      %v2013 = vmul.f32 %v2003, %v1962
      %v2014 = vmul.f32 %v2004, %v1964
      %v2015 = vmul.f32 %v2005, %v1967
      %v2016 = vmul.f32 %v2006, %v1969
      %v2017 = vmul.f32 %v2007, %v1972
      %v2018 = vmul.f32 %v2008, %v1974
      %v2019 = vmul.f32 %v2009, %v1977
      %v2020 = vmul.f32 %v2010, %v1979
      %v2021 = vadd.f32 %v1957, %v2011
      %v2022 = vadd.f32 %v1959, %v2012
      %v2023 = vadd.f32 %v1962, %v2013
      %v2024 = vadd.f32 %v1964, %v2014
      %v2025 = vadd.f32 %v1967, %v2015
      %v2026 = vadd.f32 %v1969, %v2016
      %v2027 = vadd.f32 %v1972, %v2017
      %v2028 = vadd.f32 %v1974, %v2018
      %v2029 = vadd.f32 %v1977, %v2019
      %v2030 = vadd.f32 %v1979, %v2020
      %v2031 = vmul.f32 %v2021, 0.7978846
      %v2032 = vmul.f32 %v2022, 0.7978846
      %v2033 = vmul.f32 %v2023, 0.7978846
      %v2034 = vmul.f32 %v2024, 0.7978846
      %v2035 = vmul.f32 %v2025, 0.7978846
      %v2036 = vmul.f32 %v2026, 0.7978846
      %v2037 = vmul.f32 %v2027, 0.7978846
      %v2038 = vmul.f32 %v2028, 0.7978846
      %v2039 = vmul.f32 %v2029, 0.7978846
      %v2040 = vmul.f32 %v2030, 0.7978846
      %v2041 = vtanh.pop %v2031
      %v2042 = vtanh.pop %v2032
      %v2043 = vtanh.pop %v2033
      %v2044 = vtanh.pop %v2034
      %v2045 = vtanh.pop %v2035
      %v2046 = vtanh.pop %v2036
      %v2047 = vtanh.pop %v2037
      %v2048 = vtanh.pop %v2038
      %v2049 = vtanh.pop %v2039
      %v2050 = vtanh.pop %v2040
      %v2051 = vadd.f32 %v2041, 1.0
      %v2052 = vadd.f32 %v2042, 1.0
      %v2053 = vadd.f32 %v2043, 1.0
      %v2054 = vadd.f32 %v2044, 1.0
      %v2055 = vadd.f32 %v2045, 1.0
      %v2056 = vadd.f32 %v2046, 1.0
      %v2057 = vadd.f32 %v2047, 1.0
      %v2058 = vadd.f32 %v2048, 1.0
      %v2059 = vadd.f32 %v2049, 1.0
      %v2060 = vadd.f32 %v2050, 1.0
      %v2061 = vmul.f32 %v1981, %v2051
      %v2062 = vmul.f32 %v1982, %v2052
      %v2063 = vmul.f32 %v1983, %v2053
      %v2064 = vmul.f32 %v1984, %v2054
      %v2065 = vmul.f32 %v1985, %v2055
      %v2066 = vmul.f32 %v1986, %v2056
      %v2067 = vmul.f32 %v1987, %v2057
      %v2068 = vmul.f32 %v1988, %v2058
      %v2069 = vmul.f32 %v1989, %v2059
      %v2070 = vmul.f32 %v1990, %v2060
      %s2071 = scalar_lea.vmem %s12, 64
      %v2072 = vld [vmem:[%s2071] sm:$0xf]
      %v2073 = vld [vmem:[%s2071 + $0x4] sm:$0xf]
      %v2074 = vld [vmem:[%s2071 + $0x8] sm:$0xf]
      %v2075 = vld [vmem:[%s2071 + $0xc] sm:$0xf]
      %v2076 = vld [vmem:[%s2071 + $0x10] sm:$0xf]
      %v2077 = vld [vmem:[%s2071 + $0x14] sm:$0xf]
      %v2078 = vld [vmem:[%s2071 + $0x18] sm:$0xf]
      %v2079 = vld [vmem:[%s2071 + $0x1c] sm:$0xf]
      %v2080 = vld [vmem:[%s2071 + $0x20] sm:$0xf]
      %v2081 = vld [vmem:[%s2071 + $0x24] sm:$0xf]
      %v2082 = vld [vmem:[%s2071 + $0x28] sm:$0xf]
      %v2083 = vld [vmem:[%s2071 + $0x2c] sm:$0xf]
      %v2084 = vld [vmem:[%s2071 + $0x30] sm:$0xf]
      %v2085 = vld [vmem:[%s2071 + $0x34] sm:$0xf]
      %v2086 = vld [vmem:[%s2071 + $0x38] sm:$0xf]
      %v2087 = vld [vmem:[%s2071 + $0x3c] sm:$0xf]
      %v2088 = vpack.c.bf16 %v2062, %v2061
      %v2089 = vpack.c.bf16 %v2064, %v2063
      %v2090 = vpack.c.bf16 %v2066, %v2065
      %v2091 = vpack.c.bf16 %v2068, %v2067
      %v2092 = vpack.c.bf16 %v2070, %v2069
      %s2093 = scalar_lea.vmem %s13, 1
      %v2094 = vld [vmem:[%s2093] sm:$0x1]
      %v2096 = vperm.slane %v2094, 0
      %v2114 = vunpack.c.l.b16 %v2072
      %v2115 = vunpack.c.l.b16 %v2073
      %v2116 = vunpack.c.l.b16 %v2074
      %v2117 = vunpack.c.l.b16 %v2075
      %v2118 = vunpack.c.l.b16 %v2076
      %v2119 = vunpack.c.l.b16 %v2077
      %v2120 = vunpack.c.l.b16 %v2078
      %v2121 = vunpack.c.l.b16 %v2079
      %v2122 = vunpack.c.l.b16 %v2080
      %v2123 = vunpack.c.l.b16 %v2081
      %v2124 = vunpack.c.l.b16 %v2082
      %v2125 = vunpack.c.l.b16 %v2083
      %v2126 = vunpack.c.l.b16 %v2084
      %v2127 = vunpack.c.l.b16 %v2085
      %v2128 = vunpack.c.l.b16 %v2086
      %v2129 = vunpack.c.l.b16 %v2087
      %v2130 = vpack.c.b16 %v2115, %v2114
      %v2131 = vpack.c.b16 %v2117, %v2116
      %v2132 = vpack.c.b16 %v2119, %v2118
      %v2133 = vpack.c.b16 %v2121, %v2120
      %v2134 = vpack.c.b16 %v2123, %v2122
      %v2135 = vpack.c.b16 %v2125, %v2124
      %v2136 = vpack.c.b16 %v2127, %v2126
      %v2137 = vpack.c.b16 %v2129, %v2128
      %2146 = vmatpush.bf16.msra.mxu0 %v2137
      %2147 = vmatpush.bf16.msra.mxu0 %v2136
      %2148 = vmatpush.bf16.msra.mxu0 %v2135
      %2149 = vmatpush.bf16.msra.mxu0 %v2134
      %2150 = vmatpush.bf16.msra.mxu0 %v2133
      %2151 = vmatpush.bf16.msra.mxu0 %v2132
      %2152 = vmatpush.bf16.msra.mxu0 %v2131
      %2153 = vmatpush.bf16.msra.mxu0 %v2130
      %2154 = vmatmul.bf16.gmra.mxu0 %v2088
      %v2155 = vpop.f32.mrf.mxu0
      %v2156 = vadd.f32 %v2096, %v2155
      %v2157 = vpop.f32.mrf.mxu0
      %v2158 = vadd.f32 %v2096, %v2157
      %2159 = vmatmul.bf16.gmra.mxu0 %v2089
      %v2160 = vpop.f32.mrf.mxu0
      %v2161 = vadd.f32 %v2096, %v2160
      %v2162 = vpop.f32.mrf.mxu0
      %v2163 = vadd.f32 %v2096, %v2162
      %2164 = vmatmul.bf16.gmra.mxu0 %v2090
      %v2165 = vpop.f32.mrf.mxu0
      %v2166 = vadd.f32 %v2096, %v2165
      %v2167 = vpop.f32.mrf.mxu0
      %v2168 = vadd.f32 %v2096, %v2167
      %2169 = vmatmul.bf16.gmra.mxu0 %v2091
      %v2170 = vpop.f32.mrf.mxu0
      %v2171 = vadd.f32 %v2096, %v2170
      %v2172 = vpop.f32.mrf.mxu0
      %v2173 = vadd.f32 %v2096, %v2172
      %2174 = vmatmul.bf16.gmra.mxu0 %v2092
      %v2175 = vpop.f32.mrf.mxu0
      %v2176 = vadd.f32 %v2096, %v2175
      %v2177 = vpop.f32.mrf.mxu0
      %v2178 = vadd.f32 %v2096, %v2177
      %2179 = vdwg.mxu0
      %v2180 = vadd.f32 %v1622, %v2156
      %v2181 = vadd.f32 %v1623, %v2158
      %v2182 = vadd.f32 %v1624, %v2161
      %v2183 = vadd.f32 %v1625, %v2163
      %v2184 = vadd.f32 %v1626, %v2166
      %v2185 = vadd.f32 %v1627, %v2168
      %v2186 = vadd.f32 %v1628, %v2171
      %v2187 = vadd.f32 %v1629, %v2173
      %v2188 = vadd.f32 %v1630, %v2176
      %v2189 = vadd.f32 %v1631, %v2178
      %v2190 = vadd.f32 %v2180, %v2181
      %v2191 = vrot.slane %v2190, 4
      %v2192 = vadd.f32 %v2190, %v2191
      %v2193 = vrot.slane %v2192, 2
      %v2194 = vadd.f32 %v2192, %v2193
      %v2195 = vrot.slane %v2194, 1
      %v2196 = vadd.f32 %v2194, %v2195
      %v2197 = vrcp.pop 16.0
      %v2198 = vmul.f32 16.0, %v2197
      %v2199 = vsub.f32 1.0, %v2198
      %v2200 = vmul.f32 %v2197, %v2199
      %v2201 = vadd.f32 %v2197, %v2200
      %vm2202 = vweird.f32 %v2197
      %v2203 = vsel %vm2202, %v2197, %v2201
      %v2204 = vmul.f32 %v2196, %v2203
      %v2205 = vadd.f32 %v2182, %v2183
      %v2206 = vadd.f32 %v2205, %v2184
      %v2207 = vadd.f32 %v2206, %v2185
      %v2208 = vadd.f32 %v2207, %v2186
      %v2209 = vadd.f32 %v2208, %v2187
      %v2210 = vadd.f32 %v2209, %v2188
      %v2211 = vadd.f32 %v2210, %v2189
      %v2212 = vrot.slane %v2211, 4
      %v2213 = vadd.f32 %v2211, %v2212
      %v2214 = vrot.slane %v2213, 2
      %v2215 = vadd.f32 %v2213, %v2214
      %v2216 = vrot.slane %v2215, 1
      %v2217 = vadd.f32 %v2215, %v2216
      %v2218 = vrcp.pop 64.0
      %v2219 = vmul.f32 64.0, %v2218
      %v2220 = vsub.f32 1.0, %v2219
      %v2221 = vmul.f32 %v2218, %v2220
      %v2222 = vadd.f32 %v2218, %v2221
      %vm2223 = vweird.f32 %v2218
      %v2224 = vsel %vm2223, %v2218, %v2222
      %v2225 = vmul.f32 %v2217, %v2224
      %v2226 = vsub.f32 %v2180, %v2204
      %v2227 = vsub.f32 %v2181, %v2204
      %v2228 = vmul.f32 %v2226, %v2226
      %v2229 = vmul.f32 %v2227, %v2227
      %v2230 = vadd.f32 %v2228, %v2229
      %v2231 = vrot.slane %v2230, 4
      %v2232 = vadd.f32 %v2230, %v2231
      %v2233 = vrot.slane %v2232, 2
      %v2234 = vadd.f32 %v2232, %v2233
      %v2235 = vrot.slane %v2234, 1
      %v2236 = vadd.f32 %v2234, %v2235
      %v2237 = vmul.f32 %v2236, %v2203
      %v2238 = vsub.f32 %v2182, %v2225
      %v2239 = vsub.f32 %v2183, %v2225
      %v2240 = vsub.f32 %v2184, %v2225
      %v2241 = vsub.f32 %v2185, %v2225
      %v2242 = vsub.f32 %v2186, %v2225
      %v2243 = vsub.f32 %v2187, %v2225
      %v2244 = vsub.f32 %v2188, %v2225
      %v2245 = vsub.f32 %v2189, %v2225
      %v2246 = vmul.f32 %v2238, %v2238
      %v2247 = vmul.f32 %v2239, %v2239
      %v2248 = vmul.f32 %v2240, %v2240
      %v2249 = vmul.f32 %v2241, %v2241
      %v2250 = vmul.f32 %v2242, %v2242
      %v2251 = vmul.f32 %v2243, %v2243
      %v2252 = vmul.f32 %v2244, %v2244
      %v2253 = vmul.f32 %v2245, %v2245
      %v2254 = vadd.f32 %v2246, %v2247
      %v2255 = vadd.f32 %v2254, %v2248
      %v2256 = vadd.f32 %v2255, %v2249
      %v2257 = vadd.f32 %v2256, %v2250
      %v2258 = vadd.f32 %v2257, %v2251
      %v2259 = vadd.f32 %v2258, %v2252
      %v2260 = vadd.f32 %v2259, %v2253
      %v2261 = vrot.slane %v2260, 4
      %v2262 = vadd.f32 %v2260, %v2261
      %v2263 = vrot.slane %v2262, 2
      %v2264 = vadd.f32 %v2262, %v2263
      %v2265 = vrot.slane %v2264, 1
      %v2266 = vadd.f32 %v2264, %v2265
      %v2267 = vmul.f32 %v2266, %v2224
      %v2268 = vadd.f32 %v2237, 1e-06
      %v2269 = vrsqrt.pop %v2268
      %v2270 = vmul.f32 %v2269, %v2268
      %v2271 = vmul.f32 %v2270, %v2269
      %v2272 = vmul.f32 0.5, %v2271
      %v2273 = vsub.f32 1.5, %v2272
      %v2274 = vmul.f32 %v2269, %v2273
      %v2275 = vmul.f32 %v2268, %v2274
      %vm2276 = vcmp.eq.f32.partialorder %v2268, inf
      %v2277 = vsel %vm2276, %v2268, %v2275
      %vm2278 = vcmp.eq.f32.partialorder %v2268, 0.0
      %v2279 = vand.u32 %v2268, 2147483648
      %v2280 = vsel %vm2278, %v2279, %v2277
      %v2281 = vadd.f32 %v2267, 1e-06
      %v2282 = vrsqrt.pop %v2281
      %v2283 = vmul.f32 %v2282, %v2281
      %v2284 = vmul.f32 %v2283, %v2282
      %v2285 = vmul.f32 0.5, %v2284
      %v2286 = vsub.f32 1.5, %v2285
      %v2287 = vmul.f32 %v2282, %v2286
      %v2288 = vmul.f32 %v2281, %v2287
      %vm2289 = vcmp.eq.f32.partialorder %v2281, inf
      %v2290 = vsel %vm2289, %v2281, %v2288
      %vm2291 = vcmp.eq.f32.partialorder %v2281, 0.0
      %v2292 = vand.u32 %v2281, 2147483648
      %v2293 = vsel %vm2291, %v2292, %v2290
      %v2294 = vsub.f32 %v2204, %v2225
      %v2295 = vmul.f32 %v2294, %v2294
      %v2296 = vsub.f32 %v2280, %v2293
      %v2297 = vmul.f32 %v2296, %v2296
      %v2298 = vadd.f32 %v2295, %v2297
      %2299 = vst [vmem:[%s631] sm:$0x1] %v2298
      %v2300 = vmax.f32 %v2182, %v2186
      %v2301 = vmax.f32 %v2183, %v2187
      %v2302 = vmax.f32 %v2184, %v2188
      %v2303 = vmax.f32 %v2185, %v2189
      %v2304 = vmax.f32 %v2300, %v2301
      %v2305 = vmax.f32 %v2302, %v2303
      %v2306 = vmax.f32 %v2304, %v2305
      %v2307 = vrot.slane %v2306, 4
      %v2308 = vmax.f32 %v2306, %v2307
      %v2309 = vrot.slane %v2308, 2
      %v2310 = vmax.f32 %v2308, %v2309
      %v2311 = vrot.slane %v2310, 1
      %v2312 = vmax.f32 %v2310, %v2311
      %v2313 = vld [vmem:[%s14] sm:$0xf]
      %v2314 = vld [vmem:[%s14 + $0x4] sm:$0xf]
      %v2315 = vld [vmem:[%s14 + $0x8] sm:$0xf]
      %v2316 = vld [vmem:[%s14 + $0xc] sm:$0xf]
      %v2317 = vld [vmem:[%s14 + $0x10] sm:$0xf]
      %v2318 = vld [vmem:[%s14 + $0x14] sm:$0xf]
      %v2319 = vld [vmem:[%s14 + $0x18] sm:$0xf]
      %v2320 = vld [vmem:[%s14 + $0x1c] sm:$0xf]
      %v2321 = vld [vmem:[%s14 + $0x20] sm:$0xf]
      %v2322 = vld [vmem:[%s14 + $0x24] sm:$0xf]
      %v2323 = vld [vmem:[%s14 + $0x28] sm:$0xf]
      %v2324 = vld [vmem:[%s14 + $0x2c] sm:$0xf]
      %v2325 = vld [vmem:[%s14 + $0x30] sm:$0xf]
      %v2326 = vld [vmem:[%s14 + $0x34] sm:$0xf]
      %v2327 = vld [vmem:[%s14 + $0x38] sm:$0xf]
      %v2328 = vld [vmem:[%s14 + $0x3c] sm:$0xf]
      %v2329 = vld [vmem:[%s14 + $0x40] sm:$0xf]
      %v2330 = vld [vmem:[%s14 + $0x44] sm:$0xf]
      %v2331 = vld [vmem:[%s14 + $0x48] sm:$0xf]
      %v2332 = vld [vmem:[%s14 + $0x4c] sm:$0xf]
      %v2333 = vld [vmem:[%s14 + $0x50] sm:$0xf]
      %v2334 = vld [vmem:[%s14 + $0x54] sm:$0xf]
      %v2335 = vld [vmem:[%s14 + $0x58] sm:$0xf]
      %v2336 = vld [vmem:[%s14 + $0x5c] sm:$0xf]
      %v2337 = vld [vmem:[%s14 + $0x60] sm:$0xf]
      %v2338 = vld [vmem:[%s14 + $0x64] sm:$0xf]
      %v2339 = vld [vmem:[%s14 + $0x68] sm:$0xf]
      %v2340 = vld [vmem:[%s14 + $0x6c] sm:$0xf]
      %v2341 = vld [vmem:[%s14 + $0x70] sm:$0xf]
      %v2342 = vld [vmem:[%s14 + $0x74] sm:$0xf]
      %v2343 = vld [vmem:[%s14 + $0x78] sm:$0xf]
      %v2344 = vld [vmem:[%s14 + $0x7c] sm:$0xf]
      %v2345 = vpack.c.bf16 %v2183, %v2182
      %v2346 = vpack.c.bf16 %v2312, %v2312
      %v2347 = vpack.c.bf16 %v2185, %v2184
      %v2348 = vpack.c.bf16 %v2187, %v2186
      %v2349 = vpack.c.bf16 %v2189, %v2188
      %v2350 = vld [vmem:[%s15] sm:$0x1]
      %v2352 = vperm.slane %v2350, 0
      %v2386 = vunpack.c.l.b16 %v2313
      %v2387 = vunpack.c.l.b16 %v2314
      %v2388 = vunpack.c.l.b16 %v2315
      %v2389 = vunpack.c.l.b16 %v2316
      %v2390 = vunpack.c.l.b16 %v2317
      %v2391 = vunpack.c.l.b16 %v2318
      %v2392 = vunpack.c.l.b16 %v2319
      %v2393 = vunpack.c.l.b16 %v2320
      %v2394 = vunpack.c.l.b16 %v2321
      %v2395 = vunpack.c.l.b16 %v2322
      %v2396 = vunpack.c.l.b16 %v2323
      %v2397 = vunpack.c.l.b16 %v2324
      %v2398 = vunpack.c.l.b16 %v2325
      %v2399 = vunpack.c.l.b16 %v2326
      %v2400 = vunpack.c.l.b16 %v2327
      %v2401 = vunpack.c.l.b16 %v2328
      %v2402 = vunpack.c.l.b16 %v2329
      %v2403 = vunpack.c.l.b16 %v2330
      %v2404 = vunpack.c.l.b16 %v2331
      %v2405 = vunpack.c.l.b16 %v2332
      %v2406 = vunpack.c.l.b16 %v2333
      %v2407 = vunpack.c.l.b16 %v2334
      %v2408 = vunpack.c.l.b16 %v2335
      %v2409 = vunpack.c.l.b16 %v2336
      %v2410 = vunpack.c.l.b16 %v2337
      %v2411 = vunpack.c.l.b16 %v2338
      %v2412 = vunpack.c.l.b16 %v2339
      %v2413 = vunpack.c.l.b16 %v2340
      %v2414 = vunpack.c.l.b16 %v2341
      %v2415 = vunpack.c.l.b16 %v2342
      %v2416 = vunpack.c.l.b16 %v2343
      %v2417 = vunpack.c.l.b16 %v2344
      %v2418 = vpack.c.b16 %v2387, %v2386
      %v2419 = vpack.c.b16 %v2389, %v2388
      %v2420 = vpack.c.b16 %v2391, %v2390
      %v2421 = vpack.c.b16 %v2393, %v2392
      %v2422 = vpack.c.b16 %v2395, %v2394
      %v2423 = vpack.c.b16 %v2397, %v2396
      %v2424 = vpack.c.b16 %v2399, %v2398
      %v2425 = vpack.c.b16 %v2401, %v2400
      %v2426 = vpack.c.b16 %v2403, %v2402
      %v2427 = vpack.c.b16 %v2405, %v2404
      %v2428 = vpack.c.b16 %v2407, %v2406
      %v2429 = vpack.c.b16 %v2409, %v2408
      %v2430 = vpack.c.b16 %v2411, %v2410
      %v2431 = vpack.c.b16 %v2413, %v2412
      %v2432 = vpack.c.b16 %v2415, %v2414
      %v2433 = vpack.c.b16 %v2417, %v2416
      %2450 = vmatpush.bf16.msra.mxu0 %v2425
      %2451 = vmatpush.bf16.msra.mxu0 %v2424
      %2452 = vmatpush.bf16.msra.mxu0 %v2423
      %2453 = vmatpush.bf16.msra.mxu0 %v2422
      %2454 = vmatpush.bf16.msra.mxu0 %v2421
      %2455 = vmatpush.bf16.msra.mxu0 %v2420
      %2456 = vmatpush.bf16.msra.mxu0 %v2419
      %2457 = vmatpush.bf16.msra.mxu0 %v2418
      %2458 = vmatmul.bf16.gmra.mxu0 %v2345
      %v2459 = vpop.f32.mrf.mxu0
      %v2460 = vadd.f32 %v2352, %v2459
      %v2461 = vpop.f32.mrf.mxu0
      %v2462 = vadd.f32 %v2352, %v2461
      %2463 = vmatmul.bf16.gmra.mxu0 %v2347
      %v2464 = vpop.f32.mrf.mxu0
      %v2465 = vadd.f32 %v2352, %v2464
      %v2466 = vpop.f32.mrf.mxu0
      %v2467 = vadd.f32 %v2352, %v2466
      %2468 = vmatmul.bf16.gmra.mxu0 %v2348
      %v2469 = vpop.f32.mrf.mxu0
      %v2470 = vadd.f32 %v2352, %v2469
      %v2471 = vpop.f32.mrf.mxu0
      %v2472 = vadd.f32 %v2352, %v2471
      %2473 = vmatmul.bf16.gmra.mxu0 %v2349
      %v2474 = vpop.f32.mrf.mxu0
      %v2475 = vadd.f32 %v2352, %v2474
      %v2476 = vpop.f32.mrf.mxu0
      %v2477 = vadd.f32 %v2352, %v2476
      %2478 = vdwg.mxu0
      %2479 = vmatpush.bf16.msra.mxu0 %v2433
      %2480 = vmatpush.bf16.msra.mxu0 %v2432
      %2481 = vmatpush.bf16.msra.mxu0 %v2431
      %2482 = vmatpush.bf16.msra.mxu0 %v2430
      %2483 = vmatpush.bf16.msra.mxu0 %v2429
      %2484 = vmatpush.bf16.msra.mxu0 %v2428
      %2485 = vmatpush.bf16.msra.mxu0 %v2427
      %2486 = vmatpush.bf16.msra.mxu0 %v2426
      %2487 = vmatmul.bf16.gmra.mxu0 %v2346
      %v2488 = vpop.f32.mrf.mxu0
      %v2489 = vadd.f32 %v2460, %v2488
      %v2490 = vpop.f32.mrf.mxu0
      %v2491 = vadd.f32 %v2462, %v2490
      %2492 = vmatmul.bf16.gmra.mxu0 %v2346
      %v2493 = vpop.f32.mrf.mxu0
      %v2494 = vadd.f32 %v2465, %v2493
      %v2495 = vpop.f32.mrf.mxu0
      %v2496 = vadd.f32 %v2467, %v2495
      %2497 = vmatmul.bf16.gmra.mxu0 %v2346
      %v2498 = vpop.f32.mrf.mxu0
      %v2499 = vadd.f32 %v2470, %v2498
      %v2500 = vpop.f32.mrf.mxu0
      %v2501 = vadd.f32 %v2472, %v2500
      %2502 = vmatmul.bf16.gmra.mxu0 %v2346
      %v2503 = vpop.f32.mrf.mxu0
      %v2504 = vadd.f32 %v2475, %v2503
      %v2505 = vpop.f32.mrf.mxu0
      %v2506 = vadd.f32 %v2477, %v2505
      %2507 = vdwg.mxu0
      %v2508 = vmul.f32 %v2489, 0.5
      %v2509 = vmul.f32 %v2491, 0.5
      %v2510 = vmul.f32 %v2494, 0.5
      %v2511 = vmul.f32 %v2496, 0.5
      %v2512 = vmul.f32 %v2499, 0.5
      %v2513 = vmul.f32 %v2501, 0.5
      %v2514 = vmul.f32 %v2504, 0.5
      %v2515 = vmul.f32 %v2506, 0.5
      %v2516 = vmul.f32 %v2489, 0.044715
      %v2517 = vmul.f32 %v2491, 0.044715
      %v2518 = vmul.f32 %v2494, 0.044715
      %v2519 = vmul.f32 %v2496, 0.044715
      %v2520 = vmul.f32 %v2499, 0.044715
      %v2521 = vmul.f32 %v2501, 0.044715
      %v2522 = vmul.f32 %v2504, 0.044715
      %v2523 = vmul.f32 %v2506, 0.044715
      %v2524 = vmul.f32 %v2516, %v2489
      %v2525 = vmul.f32 %v2517, %v2491
      %v2526 = vmul.f32 %v2518, %v2494
      %v2527 = vmul.f32 %v2519, %v2496
      %v2528 = vmul.f32 %v2520, %v2499
      %v2529 = vmul.f32 %v2521, %v2501
      %v2530 = vmul.f32 %v2522, %v2504
      %v2531 = vmul.f32 %v2523, %v2506
      %v2532 = vmul.f32 %v2524, %v2489
      %v2533 = vmul.f32 %v2525, %v2491
      %v2534 = vmul.f32 %v2526, %v2494
      %v2535 = vmul.f32 %v2527, %v2496
      %v2536 = vmul.f32 %v2528, %v2499
      %v2537 = vmul.f32 %v2529, %v2501
      %v2538 = vmul.f32 %v2530, %v2504
      %v2539 = vmul.f32 %v2531, %v2506
      %v2540 = vadd.f32 %v2489, %v2532
      %v2541 = vadd.f32 %v2491, %v2533
      %v2542 = vadd.f32 %v2494, %v2534
      %v2543 = vadd.f32 %v2496, %v2535
      %v2544 = vadd.f32 %v2499, %v2536
      %v2545 = vadd.f32 %v2501, %v2537
      %v2546 = vadd.f32 %v2504, %v2538
      %v2547 = vadd.f32 %v2506, %v2539
      %v2548 = vmul.f32 %v2540, 0.7978846
      %v2549 = vmul.f32 %v2541, 0.7978846
      %v2550 = vmul.f32 %v2542, 0.7978846
      %v2551 = vmul.f32 %v2543, 0.7978846
      %v2552 = vmul.f32 %v2544, 0.7978846
      %v2553 = vmul.f32 %v2545, 0.7978846
      %v2554 = vmul.f32 %v2546, 0.7978846
      %v2555 = vmul.f32 %v2547, 0.7978846
      %v2556 = vtanh.pop %v2548
      %v2557 = vtanh.pop %v2549
      %v2558 = vtanh.pop %v2550
      %v2559 = vtanh.pop %v2551
      %v2560 = vtanh.pop %v2552
      %v2561 = vtanh.pop %v2553
      %v2562 = vtanh.pop %v2554
      %v2563 = vtanh.pop %v2555
      %v2564 = vadd.f32 %v2556, 1.0
      %v2565 = vadd.f32 %v2557, 1.0
      %v2566 = vadd.f32 %v2558, 1.0
      %v2567 = vadd.f32 %v2559, 1.0
      %v2568 = vadd.f32 %v2560, 1.0
      %v2569 = vadd.f32 %v2561, 1.0
      %v2570 = vadd.f32 %v2562, 1.0
      %v2571 = vadd.f32 %v2563, 1.0
      %v2572 = vmul.f32 %v2508, %v2564
      %v2573 = vmul.f32 %v2509, %v2565
      %v2574 = vmul.f32 %v2510, %v2566
      %v2575 = vmul.f32 %v2511, %v2567
      %v2576 = vmul.f32 %v2512, %v2568
      %v2577 = vmul.f32 %v2513, %v2569
      %v2578 = vmul.f32 %v2514, %v2570
      %v2579 = vmul.f32 %v2515, %v2571
      %v2580 = vld [vmem:[%s16] sm:$0xf]
      %v2581 = vld [vmem:[%s16 + $0x4] sm:$0xf]
      %v2582 = vld [vmem:[%s16 + $0x8] sm:$0xf]
      %v2583 = vld [vmem:[%s16 + $0xc] sm:$0xf]
      %v2584 = vld [vmem:[%s16 + $0x10] sm:$0xf]
      %v2585 = vld [vmem:[%s16 + $0x14] sm:$0xf]
      %v2586 = vld [vmem:[%s16 + $0x18] sm:$0xf]
      %v2587 = vld [vmem:[%s16 + $0x1c] sm:$0xf]
      %v2588 = vld [vmem:[%s16 + $0x20] sm:$0xf]
      %v2589 = vld [vmem:[%s16 + $0x24] sm:$0xf]
      %v2590 = vld [vmem:[%s16 + $0x28] sm:$0xf]
      %v2591 = vld [vmem:[%s16 + $0x2c] sm:$0xf]
      %v2592 = vld [vmem:[%s16 + $0x30] sm:$0xf]
      %v2593 = vld [vmem:[%s16 + $0x34] sm:$0xf]
      %v2594 = vld [vmem:[%s16 + $0x38] sm:$0xf]
      %v2595 = vld [vmem:[%s16 + $0x3c] sm:$0xf]
      %v2596 = vpack.c.bf16 %v2573, %v2572
      %v2597 = vpack.c.bf16 %v2575, %v2574
      %v2598 = vpack.c.bf16 %v2577, %v2576
      %v2599 = vpack.c.bf16 %v2579, %v2578
      %v2600 = vld [vmem:[%s17] sm:$0x1]
      %v2602 = vperm.slane %v2600, 0
      %v2620 = vunpack.c.l.b16 %v2580
      %v2621 = vunpack.c.l.b16 %v2581
      %v2622 = vunpack.c.l.b16 %v2582
      %v2623 = vunpack.c.l.b16 %v2583
      %v2624 = vunpack.c.l.b16 %v2584
      %v2625 = vunpack.c.l.b16 %v2585
      %v2626 = vunpack.c.l.b16 %v2586
      %v2627 = vunpack.c.l.b16 %v2587
      %v2628 = vunpack.c.l.b16 %v2588
      %v2629 = vunpack.c.l.b16 %v2589
      %v2630 = vunpack.c.l.b16 %v2590
      %v2631 = vunpack.c.l.b16 %v2591
      %v2632 = vunpack.c.l.b16 %v2592
      %v2633 = vunpack.c.l.b16 %v2593
      %v2634 = vunpack.c.l.b16 %v2594
      %v2635 = vunpack.c.l.b16 %v2595
      %v2636 = vpack.c.b16 %v2621, %v2620
      %v2637 = vpack.c.b16 %v2623, %v2622
      %v2638 = vpack.c.b16 %v2625, %v2624
      %v2639 = vpack.c.b16 %v2627, %v2626
      %v2640 = vpack.c.b16 %v2629, %v2628
      %v2641 = vpack.c.b16 %v2631, %v2630
      %v2642 = vpack.c.b16 %v2633, %v2632
      %v2643 = vpack.c.b16 %v2635, %v2634
      %2652 = vmatpush.bf16.msra.mxu0 %v2643
      %2653 = vmatpush.bf16.msra.mxu0 %v2642
      %2654 = vmatpush.bf16.msra.mxu0 %v2641
      %2655 = vmatpush.bf16.msra.mxu0 %v2640
      %2656 = vmatpush.bf16.msra.mxu0 %v2639
      %2657 = vmatpush.bf16.msra.mxu0 %v2638
      %2658 = vmatpush.bf16.msra.mxu0 %v2637
      %2659 = vmatpush.bf16.msra.mxu0 %v2636
      %2660 = vmatmul.bf16.gmra.mxu0 %v2596
      %v2661 = vpop.f32.mrf.mxu0
      %v2662 = vadd.f32 %v2602, %v2661
      %v2663 = vpop.f32.mrf.mxu0
      %v2664 = vadd.f32 %v2602, %v2663
      %2665 = vmatmul.bf16.gmra.mxu0 %v2597
      %v2666 = vpop.f32.mrf.mxu0
      %v2667 = vadd.f32 %v2602, %v2666
      %v2668 = vpop.f32.mrf.mxu0
      %v2669 = vadd.f32 %v2602, %v2668
      %2670 = vmatmul.bf16.gmra.mxu0 %v2598
      %v2671 = vpop.f32.mrf.mxu0
      %v2672 = vadd.f32 %v2602, %v2671
      %v2673 = vpop.f32.mrf.mxu0
      %v2674 = vadd.f32 %v2602, %v2673
      %2675 = vmatmul.bf16.gmra.mxu0 %v2599
      %v2676 = vpop.f32.mrf.mxu0
      %v2677 = vadd.f32 %v2602, %v2676
      %v2678 = vpop.f32.mrf.mxu0
      %v2679 = vadd.f32 %v2602, %v2678
      %2680 = vdwg.mxu0
      %v2681 = vadd.f32 %v725, %v2662
      %v2682 = vadd.f32 %v726, %v2664
      %v2683 = vadd.f32 %v727, %v2667
      %v2684 = vadd.f32 %v728, %v2669
      %v2685 = vadd.f32 %v729, %v2672
      %v2686 = vadd.f32 %v730, %v2674
      %v2687 = vadd.f32 %v731, %v2677
      %v2688 = vadd.f32 %v732, %v2679
      %2689 = vst.msk [vmem:[%s628] sm:$0xff] %vm744, %v2681
      %2690 = vst.msk [vmem:[%s628 + $0x8] sm:$0xff] %vm744, %v2682
      %2691 = vst.msk [vmem:[%s628 + $0x10] sm:$0xff] %vm744, %v2683
      %2692 = vst.msk [vmem:[%s628 + $0x18] sm:$0xff] %vm744, %v2684
      %2693 = vst.msk [vmem:[%s628 + $0x20] sm:$0xff] %vm744, %v2685
      %2694 = vst.msk [vmem:[%s628 + $0x28] sm:$0xff] %vm744, %v2686
      %2695 = vst.msk [vmem:[%s628 + $0x30] sm:$0xff] %vm744, %v2687
      %2696 = vst.msk [vmem:[%s628 + $0x38] sm:$0xff] %vm744, %v2688
      %p2697 = scmp.lt.s32.totalorder %s31, 1
      %s2698 = scalar_select %p2697, %s31, 1
      %s2699 = smul.addr %s2698, 8
      %s2700 = smul.addr %s2699, 8
      %s2701 = scalar_lea.vmem %s18, %s2700
      %p2702 = scmp.lt.s32.totalorder %s31, 1
      %s2703 = scalar_select %p2702, %s31, 1
      %s2704 = scalar_lea.vmem %s19, %s2703
      // Predicated region
      $region93: #{egiinet_forward.1} parent=91 // pred_check
        %p2705 = pneg %p437
      $region94: #{egiinet_forward.1} parent=91 // pred_check_branch
        %2707 = sbr.rel (%p2705) target = $region96
      $region95: #{egiinet_forward.1} parent=91 // pred_region
        _
      $region96: #{egiinet_forward.1} parent=91 // pred_fallthru
        _
      // Predicated region
      $region97: #{egiinet_forward.1} parent=91 // pred_check
        %p2708 = pneg %p463
      $region98: #{egiinet_forward.1} parent=91 // pred_check_branch
        %2710 = sbr.rel (%p2708) target = $region100
      $region99: #{egiinet_forward.1} parent=91 // pred_region
        _
      $region100: #{egiinet_forward.1} parent=91 // pred_fallthru
        _
    $region92: #{egiinet_forward.1} parent=5 // pred_fallthru
      _
    %p2711 = scmp.le.s32.totalorder 2, %s26
    // Predicated region
    $region101: #{egiinet_forward.1} parent=5 // pred_check
      %p2712 = pneg %p2711
    $region102: #{egiinet_forward.1} parent=5 // pred_check_branch
      %2714 = sbr.rel (%p2712) target = $region104
    $region103: #{egiinet_forward.1} parent=5 // pred_region
      %s2715 = ssub.s32 %s26, 2
      // Predicated region
      $region105: #{egiinet_forward.1} parent=103 // pred_check
        %p2716 = pneg %p443
      $region106: #{egiinet_forward.1} parent=103 // pred_check_branch
        %2718 = sbr.rel (%p2716) target = $region108
      $region107: #{egiinet_forward.1} parent=103 // pred_region
        %p2719 = scmp.lt.s32.totalorder %s32, 1
        %s2720 = scalar_select %p2719, %s32, 1
        %s2721 = smul.addr %s2720, 8
        %s2722 = smul.addr %s2721, 8
        %s2723 = scalar_lea.vmem %s18, %s2722
      $region108: #{egiinet_forward.1} parent=103 // pred_fallthru
        _
      // Predicated region
      $region109: #{egiinet_forward.1} parent=103 // pred_check
        %p2724 = pneg %p469
      $region110: #{egiinet_forward.1} parent=103 // pred_check_branch
        %2726 = sbr.rel (%p2724) target = $region112
      $region111: #{egiinet_forward.1} parent=103 // pred_region
        %p2727 = scmp.lt.s32.totalorder %s32, 1
        %s2728 = scalar_select %p2727, %s32, 1
        %s2729 = scalar_lea.vmem %s19, %s2728
      $region112: #{egiinet_forward.1} parent=103 // pred_fallthru
        _
    $region104: #{egiinet_forward.1} parent=5 // pred_fallthru
      _
  $region6: #{egiinet_forward.1} parent=0 // loop_footer
    %s30 = sadd.s32 1, %s26
  $region7: #{egiinet_forward.1} parent=0 // loop_footer_branch
    %25 = sbr.rel target = $region3
  $region8: #{egiinet_forward.1} parent=0 // loop_exit
    _

</llo_original>
